<compile_context>
chip_gen: v6e
topology: v6e:2x2x1
jax: 0.10.0
libtpu: 0.0.40
codegen_flags: <defaults>
</compile_context>

<pallas_src>
import numpy as np
import jax
import jax.numpy as jnp
from jax import lax
from jax.experimental import pallas as pl
from jax.experimental.pallas import tpu as pltpu


# ----------------------------- weight packing (one-time, outside jit) -----------------------------

def pack_params(w1, b1, w2, b2, wl, bl):
    """PyTorch-layout params -> banded/permuted matrices consumed by the fused kernel."""
    w1 = np.asarray(w1, np.float32)   # (5, 1, 6, 6)  OIHW
    b1 = np.asarray(b1, np.float32)   # (5,)
    w2 = np.asarray(w2, np.float32)   # (8, 5, 3, 3)  OIHW
    b2 = np.asarray(b2, np.float32)   # (8,)
    wl = np.asarray(wl, np.float32)   # (10, 288)
    bl = np.asarray(bl, np.float32)   # (10,)

    # conv1 banded weights.  For pool position (di, dj) and kernel row r:
    #   acc1[di][dj][pi, 5*pj+co] += sum_j x[4*pi + 2*di + r, j] * W1B[dj, r, j, 5*pj+co]
    W1B = np.zeros((2, 6, 64, 75), np.float32)
    for dj in range(2):
        for r in range(6):
            for pj in range(15):
                for s in range(6):
                    j = 4 * pj + 2 * dj + s                      # input column, <= 63
                    W1B[dj, r, j, 5 * pj:5 * pj + 5] = w1[:, 0, r, s]
    b1row = np.tile(b1, 15)[None, :]                             # (1, 75): lane 5*pj+co -> b1[co]

    # conv2 banded weights.  y1 lane layout: 5*j1 + ci.  For column-pool position dj2, row r:
    #   acc2[dj2][oi2, 8*p2j+co] += sum_lane y1[oi2 + r, lane] * W2B[dj2, r, lane, 8*p2j+co]
    W2B = np.zeros((2, 3, 75, 48), np.float32)
    for dj in range(2):
        for r in range(3):
            for p2j in range(6):
                for s in range(3):
                    j1 = 2 * p2j + dj + s                        # y1 column, <= 13
                    for ci in range(5):
                        W2B[dj, r, 5 * j1 + ci, 8 * p2j:8 * p2j + 8] = w2[:, ci, r, s]
    b2row = np.tile(b2, 6)[None, :]                              # (1, 48): lane 8*p2j+co -> b2[co]

    # Linear(288,10) with torch's NCHW .view(-1,288) flatten folded in:
    #   feature f = co*36 + p2i*6 + p2j ;  pooled-row slab lane = 8*p2j + co
    WL3 = np.zeros((6, 48, 10), np.float32)
    for p2i in range(6):
        for p2j in range(6):
            for co in range(8):
                WL3[p2i, 8 * p2j + co, :] = wl[:, co * 36 + p2i * 6 + p2j]
    blrow = bl[None, :]                                          # (1, 10)

    return (jnp.asarray(W1B), jnp.asarray(b1row), jnp.asarray(W2B),
            jnp.asarray(b2row), jnp.asarray(WL3), jnp.asarray(blrow))


# ----------------------------------- fused Pallas kernel -----------------------------------

def convnet_fused_kernel(x4_ref, w1b_ref, b1_ref, w2b_ref, b2_ref, wl3_ref, bl_ref, o_ref):
    # ---- conv1(1->5, k=6, s=2) + bias + ReLU + 2x2 max-pool ----
    # One accumulator per pool position (di, dj); banded weights give the column structure,
    # the mod-4 row-phase split of x gives contiguous row slices.
    acc1 = [[None, None], [None, None]]
    for di in range(2):
        for r in range(6):
            a = 2 * di + r                                       # input row offset
            lhs = x4_ref[0, a % 4, a // 4:a // 4 + 15, :]        # (15, 64), contiguous
            for dj in range(2):
                t = jnp.dot(lhs, w1b_ref[dj, r], preferred_element_type=jnp.float32)   # (15, 75)
                acc1[di][dj] = t if acc1[di][dj] is None else acc1[di][dj] + t
    pooled1 = jnp.maximum(jnp.maximum(acc1[0][0], acc1[0][1]),
                          jnp.maximum(acc1[1][0], acc1[1][1]))   # (15, 75) = (pi, 5*pj+co)
    y1 = jnp.maximum(pooled1 + b1_ref[...], 0.0)                 # bias/ReLU commute with max-pool

    # ---- conv2(5->8, k=3, s=1) + Dropout2d + bias + ReLU + 2x2 max-pool (column half) ----
    # TODO(synk): Dropout2d(0.25) training-mode channel masking not implemented (eval = identity).
    acc2 = [None, None]
    for dj in range(2):
        for r in range(3):
            t = jnp.dot(y1[r:r + 13, :], w2b_ref[dj, r],
                        preferred_element_type=jnp.float32)      # (13, 48) = (oi2, 8*p2j+co)
            acc2[dj] = t if acc2[dj] is None else acc2[dj] + t
    h2 = jnp.maximum(jnp.maximum(acc2[0], acc2[1]) + b2_ref[...], 0.0)   # (13, 48)

    # ---- 2x2 max-pool (row half) + NCHW flatten + Linear(288, 10), fused ----
    logits = bl_ref[...]                                         # (1, 10)
    for p2i in range(6):
        row = jnp.maximum(h2[2 * p2i:2 * p2i + 1, :],
                          h2[2 * p2i + 1:2 * p2i + 2, :])        # (1, 48)
        logits = logits + jnp.dot(row, wl3_ref[p2i], preferred_element_type=jnp.float32)
    o_ref[0] = logits.astype(o_ref.dtype)


@jax.jit
def convnet_forward(x, packed):
    """x: (N, 1, 64, 64) NCHW float32 -> (N, 10)."""
    N = x.shape[0]
    w1b, b1r, w2b, b2r, wl3, blr = packed
    # Row-phase split (the only XLA data-movement op): x4[n, q, i, j] = x[n, 0, 4*i + q, j]
    x4 = x[:, 0].reshape(N, 16, 4, 64).transpose(0, 2, 1, 3)     # (N, 4, 16, 64)
    out = pl.pallas_call(
        convnet_fused_kernel,
        out_shape=jax.ShapeDtypeStruct((N, 1, 10), jnp.float32),
        grid=(N,),
        in_specs=[
            pl.BlockSpec((1, 4, 16, 64), lambda n: (n, 0, 0, 0)),
            pl.BlockSpec((2, 6, 64, 75), lambda n: (0, 0, 0, 0)),
            pl.BlockSpec((1, 75), lambda n: (0, 0)),
            pl.BlockSpec((2, 3, 75, 48), lambda n: (0, 0, 0, 0)),
            pl.BlockSpec((1, 48), lambda n: (0, 0)),
            pl.BlockSpec((6, 48, 10), lambda n: (0, 0, 0)),
            pl.BlockSpec((1, 10), lambda n: (0, 0)),
        ],
        out_specs=pl.BlockSpec((1, 1, 10), lambda n: (n, 0, 0)),
        compiler_params=pltpu.CompilerParams(dimension_semantics=("parallel",)),
    )(x4, w1b, b1r, w2b, b2r, wl3, blr)
    return out.reshape(N, 10)


# --------------------------------- pure-JAX reference ---------------------------------

def reference_forward(x, w1, b1, w2, b2, wl, bl):
    dn = ("NCHW", "OIHW", "NCHW")
    y = lax.conv_general_dilated(x, w1, (2, 2), "VALID", dimension_numbers=dn,
                                 precision=lax.Precision.HIGHEST)
    y = jnp.maximum(y + b1[None, :, None, None], 0.0)
    y = lax.reduce_window(y, -jnp.inf, lax.max, (1, 1, 2, 2), (1, 1, 2, 2), "VALID")
    y = lax.conv_general_dilated(y, w2, (1, 1), "VALID", dimension_numbers=dn,
                                 precision=lax.Precision.HIGHEST)
    y = jnp.maximum(y + b2[None, :, None, None], 0.0)
    y = lax.reduce_window(y, -jnp.inf, lax.max, (1, 1, 2, 2), (1, 1, 2, 2), "VALID")
    z = y.reshape(y.shape[0], -1)
    return jnp.dot(z, wl.T, precision=lax.Precision.HIGHEST) + bl


if __name__ == "__main__":
    key = jax.random.PRNGKey(0)
    kx, k1, k2, k3, k4, k5, k6 = jax.random.split(key, 7)
    # deterministic parameters in PyTorch layouts (Conv2d: OIHW, Linear: (out, in))
    w1 = jax.random.uniform(k1, (5, 1, 6, 6), jnp.float32, -1.0, 1.0) / 6.0
    b1 = jax.random.uniform(k2, (5,), jnp.float32, -1.0, 1.0) / 6.0
    w2 = jax.random.uniform(k3, (8, 5, 3, 3), jnp.float32, -1.0, 1.0) / np.sqrt(45.0)
    b2 = jax.random.uniform(k4, (8,), jnp.float32, -1.0, 1.0) / np.sqrt(45.0)
    wl = jax.random.uniform(k5, (10, 288), jnp.float32, -1.0, 1.0) / np.sqrt(288.0)
    bl = jax.random.uniform(k6, (10,), jnp.float32, -1.0, 1.0) / np.sqrt(288.0)

    x = jax.random.normal(kx, (2, 1, 64, 64), jnp.float32)   # 64x64 => 288 flat features

    packed = pack_params(w1, b1, w2, b2, wl, bl)             # hoisted: packed once, reused
    out = convnet_forward(x, packed)
    out = jax.block_until_ready(out)
    assert out.shape == (2, 10) and out.dtype == jnp.float32

    ref = reference_forward(x, w1, b1, w2, b2, wl, bl)
    np.testing.assert_allclose(np.asarray(out), np.asarray(ref), rtol=2e-2, atol=2e-2)
    print("KERNEL_OK")
</pallas_src>

<mosaic_0001>
module attributes {stable_mosaic.version = 11 : i64} {
  func.func @convnet_fused_kernel(%arg0: i32, %arg1: memref<1x4x16x64xf32, #tpu.memory_space<vmem>>, %arg2: memref<2x6x64x75xf32, #tpu.memory_space<vmem>>, %arg3: memref<1x75xf32, #tpu.memory_space<vmem>>, %arg4: memref<2x3x75x48xf32, #tpu.memory_space<vmem>>, %arg5: memref<1x48xf32, #tpu.memory_space<vmem>>, %arg6: memref<6x48x10xf32, #tpu.memory_space<vmem>>, %arg7: memref<1x10xf32, #tpu.memory_space<vmem>>, %arg8: memref<1x1x10xf32, #tpu.memory_space<vmem>>) attributes {dimension_semantics = [#tpu.dimension_semantics<parallel>], iteration_bounds = array<i64: 2>, scalar_prefetch = 0 : i64, scratch_operands = 0 : i64, tpu.core_type = #tpu.core_type<tc>, window_params = [{transform_indices = @transform_0, window_bounds = array<i64: 1, 4, 16, 64>}, {pipeline_mode = #tpu.pipeline_mode<synchronous>, transform_indices = @transform_1, window_bounds = array<i64: 2, 6, 64, 75>}, {pipeline_mode = #tpu.pipeline_mode<synchronous>, transform_indices = @transform_2, window_bounds = array<i64: 1, 75>}, {pipeline_mode = #tpu.pipeline_mode<synchronous>, transform_indices = @transform_3, window_bounds = array<i64: 2, 3, 75, 48>}, {pipeline_mode = #tpu.pipeline_mode<synchronous>, transform_indices = @transform_4, window_bounds = array<i64: 1, 48>}, {pipeline_mode = #tpu.pipeline_mode<synchronous>, transform_indices = @transform_5, window_bounds = array<i64: 6, 48, 10>}, {pipeline_mode = #tpu.pipeline_mode<synchronous>, transform_indices = @transform_6, window_bounds = array<i64: 1, 10>}, {transform_indices = @transform_7, window_bounds = array<i64: 1, 1, 10>}]} {
    %c0 = arith.constant 0 : index
    %c0_0 = arith.constant 0 : index
    %c0_1 = arith.constant 0 : index
    %c0_2 = arith.constant 0 : index
    %0 = vector.load %arg1[%c0, %c0_0, %c0_1, %c0_2] : memref<1x4x16x64xf32, #tpu.memory_space<vmem>>, vector<1x1x15x64xf32>
    %1 = vector.shape_cast %0 : vector<1x1x15x64xf32> to vector<15x64xf32>
    %c0_3 = arith.constant 0 : index
    %c0_4 = arith.constant 0 : index
    %c0_5 = arith.constant 0 : index
    %c0_6 = arith.constant 0 : index
    %2 = vector.load %arg2[%c0_3, %c0_4, %c0_5, %c0_6] : memref<2x6x64x75xf32, #tpu.memory_space<vmem>>, vector<1x1x64x75xf32>
    %3 = vector.shape_cast %2 : vector<1x1x64x75xf32> to vector<64x75xf32>
    %cst = arith.constant dense<0.000000e+00> : vector<15x75xf32>
    %4 = tpu.matmul %1, %3, %cst {dimension_numbers = #tpu.dot_dimension_numbers<[1], [0], [0], [1], [0, 0, 1, 1], [], []>} : vector<15x64xf32>, vector<64x75xf32>, vector<15x75xf32> -> vector<15x75xf32>
    %c1 = arith.constant 1 : index
    %c0_7 = arith.constant 0 : index
    %c0_8 = arith.constant 0 : index
    %c0_9 = arith.constant 0 : index
    %5 = vector.load %arg2[%c1, %c0_7, %c0_8, %c0_9] : memref<2x6x64x75xf32, #tpu.memory_space<vmem>>, vector<1x1x64x75xf32>
    %6 = vector.shape_cast %5 : vector<1x1x64x75xf32> to vector<64x75xf32>
    %cst_10 = arith.constant dense<0.000000e+00> : vector<15x75xf32>
    %7 = tpu.matmul %1, %6, %cst_10 {dimension_numbers = #tpu.dot_dimension_numbers<[1], [0], [0], [1], [0, 0, 1, 1], [], []>} : vector<15x64xf32>, vector<64x75xf32>, vector<15x75xf32> -> vector<15x75xf32>
    %c0_11 = arith.constant 0 : index
    %c1_12 = arith.constant 1 : index
    %c0_13 = arith.constant 0 : index
    %c0_14 = arith.constant 0 : index
    %8 = vector.load %arg1[%c0_11, %c1_12, %c0_13, %c0_14] : memref<1x4x16x64xf32, #tpu.memory_space<vmem>>, vector<1x1x15x64xf32>
    %9 = vector.shape_cast %8 : vector<1x1x15x64xf32> to vector<15x64xf32>
    %c0_15 = arith.constant 0 : index
    %c1_16 = arith.constant 1 : index
    %c0_17 = arith.constant 0 : index
    %c0_18 = arith.constant 0 : index
    %10 = vector.load %arg2[%c0_15, %c1_16, %c0_17, %c0_18] : memref<2x6x64x75xf32, #tpu.memory_space<vmem>>, vector<1x1x64x75xf32>
    %11 = vector.shape_cast %10 : vector<1x1x64x75xf32> to vector<64x75xf32>
    %cst_19 = arith.constant dense<0.000000e+00> : vector<15x75xf32>
    %12 = tpu.matmul %9, %11, %cst_19 {dimension_numbers = #tpu.dot_dimension_numbers<[1], [0], [0], [1], [0, 0, 1, 1], [], []>} : vector<15x64xf32>, vector<64x75xf32>, vector<15x75xf32> -> vector<15x75xf32>
    %13 = arith.addf %4, %12 : vector<15x75xf32>
    %c1_20 = arith.constant 1 : index
    %c1_21 = arith.constant 1 : index
    %c0_22 = arith.constant 0 : index
    %c0_23 = arith.constant 0 : index
    %14 = vector.load %arg2[%c1_20, %c1_21, %c0_22, %c0_23] : memref<2x6x64x75xf32, #tpu.memory_space<vmem>>, vector<1x1x64x75xf32>
    %15 = vector.shape_cast %14 : vector<1x1x64x75xf32> to vector<64x75xf32>
    %cst_24 = arith.constant dense<0.000000e+00> : vector<15x75xf32>
    %16 = tpu.matmul %9, %15, %cst_24 {dimension_numbers = #tpu.dot_dimension_numbers<[1], [0], [0], [1], [0, 0, 1, 1], [], []>} : vector<15x64xf32>, vector<64x75xf32>, vector<15x75xf32> -> vector<15x75xf32>
    %17 = arith.addf %7, %16 : vector<15x75xf32>
    %c0_25 = arith.constant 0 : index
    %c2 = arith.constant 2 : index
    %c0_26 = arith.constant 0 : index
    %c0_27 = arith.constant 0 : index
    %18 = vector.load %arg1[%c0_25, %c2, %c0_26, %c0_27] : memref<1x4x16x64xf32, #tpu.memory_space<vmem>>, vector<1x1x15x64xf32>
    %19 = vector.shape_cast %18 : vector<1x1x15x64xf32> to vector<15x64xf32>
    %c0_28 = arith.constant 0 : index
    %c2_29 = arith.constant 2 : index
    %c0_30 = arith.constant 0 : index
    %c0_31 = arith.constant 0 : index
    %20 = vector.load %arg2[%c0_28, %c2_29, %c0_30, %c0_31] : memref<2x6x64x75xf32, #tpu.memory_space<vmem>>, vector<1x1x64x75xf32>
    %21 = vector.shape_cast %20 : vector<1x1x64x75xf32> to vector<64x75xf32>
    %cst_32 = arith.constant dense<0.000000e+00> : vector<15x75xf32>
    %22 = tpu.matmul %19, %21, %cst_32 {dimension_numbers = #tpu.dot_dimension_numbers<[1], [0], [0], [1], [0, 0, 1, 1], [], []>} : vector<15x64xf32>, vector<64x75xf32>, vector<15x75xf32> -> vector<15x75xf32>
    %23 = arith.addf %13, %22 : vector<15x75xf32>
    %c1_33 = arith.constant 1 : index
    %c2_34 = arith.constant 2 : index
    %c0_35 = arith.constant 0 : index
    %c0_36 = arith.constant 0 : index
    %24 = vector.load %arg2[%c1_33, %c2_34, %c0_35, %c0_36] : memref<2x6x64x75xf32, #tpu.memory_space<vmem>>, vector<1x1x64x75xf32>
    %25 = vector.shape_cast %24 : vector<1x1x64x75xf32> to vector<64x75xf32>
    %cst_37 = arith.constant dense<0.000000e+00> : vector<15x75xf32>
    %26 = tpu.matmul %19, %25, %cst_37 {dimension_numbers = #tpu.dot_dimension_numbers<[1], [0], [0], [1], [0, 0, 1, 1], [], []>} : vector<15x64xf32>, vector<64x75xf32>, vector<15x75xf32> -> vector<15x75xf32>
    %27 = arith.addf %17, %26 : vector<15x75xf32>
    %c0_38 = arith.constant 0 : index
    %c3 = arith.constant 3 : index
    %c0_39 = arith.constant 0 : index
    %c0_40 = arith.constant 0 : index
    %28 = vector.load %arg1[%c0_38, %c3, %c0_39, %c0_40] : memref<1x4x16x64xf32, #tpu.memory_space<vmem>>, vector<1x1x15x64xf32>
    %29 = vector.shape_cast %28 : vector<1x1x15x64xf32> to vector<15x64xf32>
    %c0_41 = arith.constant 0 : index
    %c3_42 = arith.constant 3 : index
    %c0_43 = arith.constant 0 : index
    %c0_44 = arith.constant 0 : index
    %30 = vector.load %arg2[%c0_41, %c3_42, %c0_43, %c0_44] : memref<2x6x64x75xf32, #tpu.memory_space<vmem>>, vector<1x1x64x75xf32>
    %31 = vector.shape_cast %30 : vector<1x1x64x75xf32> to vector<64x75xf32>
    %cst_45 = arith.constant dense<0.000000e+00> : vector<15x75xf32>
    %32 = tpu.matmul %29, %31, %cst_45 {dimension_numbers = #tpu.dot_dimension_numbers<[1], [0], [0], [1], [0, 0, 1, 1], [], []>} : vector<15x64xf32>, vector<64x75xf32>, vector<15x75xf32> -> vector<15x75xf32>
    %33 = arith.addf %23, %32 : vector<15x75xf32>
    %c1_46 = arith.constant 1 : index
    %c3_47 = arith.constant 3 : index
    %c0_48 = arith.constant 0 : index
    %c0_49 = arith.constant 0 : index
    %34 = vector.load %arg2[%c1_46, %c3_47, %c0_48, %c0_49] : memref<2x6x64x75xf32, #tpu.memory_space<vmem>>, vector<1x1x64x75xf32>
    %35 = vector.shape_cast %34 : vector<1x1x64x75xf32> to vector<64x75xf32>
    %cst_50 = arith.constant dense<0.000000e+00> : vector<15x75xf32>
    %36 = tpu.matmul %29, %35, %cst_50 {dimension_numbers = #tpu.dot_dimension_numbers<[1], [0], [0], [1], [0, 0, 1, 1], [], []>} : vector<15x64xf32>, vector<64x75xf32>, vector<15x75xf32> -> vector<15x75xf32>
    %37 = arith.addf %27, %36 : vector<15x75xf32>
    %c0_51 = arith.constant 0 : index
    %c0_52 = arith.constant 0 : index
    %c1_53 = arith.constant 1 : index
    %c0_54 = arith.constant 0 : index
    %38 = vector.load %arg1[%c0_51, %c0_52, %c1_53, %c0_54] : memref<1x4x16x64xf32, #tpu.memory_space<vmem>>, vector<1x1x15x64xf32>
    %39 = vector.shape_cast %38 : vector<1x1x15x64xf32> to vector<15x64xf32>
    %c0_55 = arith.constant 0 : index
    %c4 = arith.constant 4 : index
    %c0_56 = arith.constant 0 : index
    %c0_57 = arith.constant 0 : index
    %40 = vector.load %arg2[%c0_55, %c4, %c0_56, %c0_57] : memref<2x6x64x75xf32, #tpu.memory_space<vmem>>, vector<1x1x64x75xf32>
    %41 = vector.shape_cast %40 : vector<1x1x64x75xf32> to vector<64x75xf32>
    %cst_58 = arith.constant dense<0.000000e+00> : vector<15x75xf32>
    %42 = tpu.matmul %39, %41, %cst_58 {dimension_numbers = #tpu.dot_dimension_numbers<[1], [0], [0], [1], [0, 0, 1, 1], [], []>} : vector<15x64xf32>, vector<64x75xf32>, vector<15x75xf32> -> vector<15x75xf32>
    %43 = arith.addf %33, %42 : vector<15x75xf32>
    %c1_59 = arith.constant 1 : index
    %c4_60 = arith.constant 4 : index
    %c0_61 = arith.constant 0 : index
    %c0_62 = arith.constant 0 : index
    %44 = vector.load %arg2[%c1_59, %c4_60, %c0_61, %c0_62] : memref<2x6x64x75xf32, #tpu.memory_space<vmem>>, vector<1x1x64x75xf32>
    %45 = vector.shape_cast %44 : vector<1x1x64x75xf32> to vector<64x75xf32>
    %cst_63 = arith.constant dense<0.000000e+00> : vector<15x75xf32>
    %46 = tpu.matmul %39, %45, %cst_63 {dimension_numbers = #tpu.dot_dimension_numbers<[1], [0], [0], [1], [0, 0, 1, 1], [], []>} : vector<15x64xf32>, vector<64x75xf32>, vector<15x75xf32> -> vector<15x75xf32>
    %47 = arith.addf %37, %46 : vector<15x75xf32>
    %c0_64 = arith.constant 0 : index
    %c1_65 = arith.constant 1 : index
    %c1_66 = arith.constant 1 : index
    %c0_67 = arith.constant 0 : index
    %48 = vector.load %arg1[%c0_64, %c1_65, %c1_66, %c0_67] : memref<1x4x16x64xf32, #tpu.memory_space<vmem>>, vector<1x1x15x64xf32>
    %49 = vector.shape_cast %48 : vector<1x1x15x64xf32> to vector<15x64xf32>
    %c0_68 = arith.constant 0 : index
    %c5 = arith.constant 5 : index
    %c0_69 = arith.constant 0 : index
    %c0_70 = arith.constant 0 : index
    %50 = vector.load %arg2[%c0_68, %c5, %c0_69, %c0_70] : memref<2x6x64x75xf32, #tpu.memory_space<vmem>>, vector<1x1x64x75xf32>
    %51 = vector.shape_cast %50 : vector<1x1x64x75xf32> to vector<64x75xf32>
    %cst_71 = arith.constant dense<0.000000e+00> : vector<15x75xf32>
    %52 = tpu.matmul %49, %51, %cst_71 {dimension_numbers = #tpu.dot_dimension_numbers<[1], [0], [0], [1], [0, 0, 1, 1], [], []>} : vector<15x64xf32>, vector<64x75xf32>, vector<15x75xf32> -> vector<15x75xf32>
    %53 = arith.addf %43, %52 : vector<15x75xf32>
    %c1_72 = arith.constant 1 : index
    %c5_73 = arith.constant 5 : index
    %c0_74 = arith.constant 0 : index
    %c0_75 = arith.constant 0 : index
    %54 = vector.load %arg2[%c1_72, %c5_73, %c0_74, %c0_75] : memref<2x6x64x75xf32, #tpu.memory_space<vmem>>, vector<1x1x64x75xf32>
    %55 = vector.shape_cast %54 : vector<1x1x64x75xf32> to vector<64x75xf32>
    %cst_76 = arith.constant dense<0.000000e+00> : vector<15x75xf32>
    %56 = tpu.matmul %49, %55, %cst_76 {dimension_numbers = #tpu.dot_dimension_numbers<[1], [0], [0], [1], [0, 0, 1, 1], [], []>} : vector<15x64xf32>, vector<64x75xf32>, vector<15x75xf32> -> vector<15x75xf32>
    %57 = arith.addf %47, %56 : vector<15x75xf32>
    %c0_77 = arith.constant 0 : index
    %c2_78 = arith.constant 2 : index
    %c0_79 = arith.constant 0 : index
    %c0_80 = arith.constant 0 : index
    %58 = vector.load %arg1[%c0_77, %c2_78, %c0_79, %c0_80] : memref<1x4x16x64xf32, #tpu.memory_space<vmem>>, vector<1x1x15x64xf32>
    %59 = vector.shape_cast %58 : vector<1x1x15x64xf32> to vector<15x64xf32>
    %c0_81 = arith.constant 0 : index
    %c0_82 = arith.constant 0 : index
    %c0_83 = arith.constant 0 : index
    %c0_84 = arith.constant 0 : index
    %60 = vector.load %arg2[%c0_81, %c0_82, %c0_83, %c0_84] : memref<2x6x64x75xf32, #tpu.memory_space<vmem>>, vector<1x1x64x75xf32>
    %61 = vector.shape_cast %60 : vector<1x1x64x75xf32> to vector<64x75xf32>
    %cst_85 = arith.constant dense<0.000000e+00> : vector<15x75xf32>
    %62 = tpu.matmul %59, %61, %cst_85 {dimension_numbers = #tpu.dot_dimension_numbers<[1], [0], [0], [1], [0, 0, 1, 1], [], []>} : vector<15x64xf32>, vector<64x75xf32>, vector<15x75xf32> -> vector<15x75xf32>
    %c1_86 = arith.constant 1 : index
    %c0_87 = arith.constant 0 : index
    %c0_88 = arith.constant 0 : index
    %c0_89 = arith.constant 0 : index
    %63 = vector.load %arg2[%c1_86, %c0_87, %c0_88, %c0_89] : memref<2x6x64x75xf32, #tpu.memory_space<vmem>>, vector<1x1x64x75xf32>
    %64 = vector.shape_cast %63 : vector<1x1x64x75xf32> to vector<64x75xf32>
    %cst_90 = arith.constant dense<0.000000e+00> : vector<15x75xf32>
    %65 = tpu.matmul %59, %64, %cst_90 {dimension_numbers = #tpu.dot_dimension_numbers<[1], [0], [0], [1], [0, 0, 1, 1], [], []>} : vector<15x64xf32>, vector<64x75xf32>, vector<15x75xf32> -> vector<15x75xf32>
    %c0_91 = arith.constant 0 : index
    %c3_92 = arith.constant 3 : index
    %c0_93 = arith.constant 0 : index
    %c0_94 = arith.constant 0 : index
    %66 = vector.load %arg1[%c0_91, %c3_92, %c0_93, %c0_94] : memref<1x4x16x64xf32, #tpu.memory_space<vmem>>, vector<1x1x15x64xf32>
    %67 = vector.shape_cast %66 : vector<1x1x15x64xf32> to vector<15x64xf32>
    %c0_95 = arith.constant 0 : index
    %c1_96 = arith.constant 1 : index
    %c0_97 = arith.constant 0 : index
    %c0_98 = arith.constant 0 : index
    %68 = vector.load %arg2[%c0_95, %c1_96, %c0_97, %c0_98] : memref<2x6x64x75xf32, #tpu.memory_space<vmem>>, vector<1x1x64x75xf32>
    %69 = vector.shape_cast %68 : vector<1x1x64x75xf32> to vector<64x75xf32>
    %cst_99 = arith.constant dense<0.000000e+00> : vector<15x75xf32>
    %70 = tpu.matmul %67, %69, %cst_99 {dimension_numbers = #tpu.dot_dimension_numbers<[1], [0], [0], [1], [0, 0, 1, 1], [], []>} : vector<15x64xf32>, vector<64x75xf32>, vector<15x75xf32> -> vector<15x75xf32>
    %71 = arith.addf %62, %70 : vector<15x75xf32>
    %c1_100 = arith.constant 1 : index
    %c1_101 = arith.constant 1 : index
    %c0_102 = arith.constant 0 : index
    %c0_103 = arith.constant 0 : index
    %72 = vector.load %arg2[%c1_100, %c1_101, %c0_102, %c0_103] : memref<2x6x64x75xf32, #tpu.memory_space<vmem>>, vector<1x1x64x75xf32>
    %73 = vector.shape_cast %72 : vector<1x1x64x75xf32> to vector<64x75xf32>
    %cst_104 = arith.constant dense<0.000000e+00> : vector<15x75xf32>
    %74 = tpu.matmul %67, %73, %cst_104 {dimension_numbers = #tpu.dot_dimension_numbers<[1], [0], [0], [1], [0, 0, 1, 1], [], []>} : vector<15x64xf32>, vector<64x75xf32>, vector<15x75xf32> -> vector<15x75xf32>
    %75 = arith.addf %65, %74 : vector<15x75xf32>
    %c0_105 = arith.constant 0 : index
    %c0_106 = arith.constant 0 : index
    %c1_107 = arith.constant 1 : index
    %c0_108 = arith.constant 0 : index
    %76 = vector.load %arg1[%c0_105, %c0_106, %c1_107, %c0_108] : memref<1x4x16x64xf32, #tpu.memory_space<vmem>>, vector<1x1x15x64xf32>
    %77 = vector.shape_cast %76 : vector<1x1x15x64xf32> to vector<15x64xf32>
    %c0_109 = arith.constant 0 : index
    %c2_110 = arith.constant 2 : index
    %c0_111 = arith.constant 0 : index
    %c0_112 = arith.constant 0 : index
    %78 = vector.load %arg2[%c0_109, %c2_110, %c0_111, %c0_112] : memref<2x6x64x75xf32, #tpu.memory_space<vmem>>, vector<1x1x64x75xf32>
    %79 = vector.shape_cast %78 : vector<1x1x64x75xf32> to vector<64x75xf32>
    %cst_113 = arith.constant dense<0.000000e+00> : vector<15x75xf32>
    %80 = tpu.matmul %77, %79, %cst_113 {dimension_numbers = #tpu.dot_dimension_numbers<[1], [0], [0], [1], [0, 0, 1, 1], [], []>} : vector<15x64xf32>, vector<64x75xf32>, vector<15x75xf32> -> vector<15x75xf32>
    %81 = arith.addf %71, %80 : vector<15x75xf32>
    %c1_114 = arith.constant 1 : index
    %c2_115 = arith.constant 2 : index
    %c0_116 = arith.constant 0 : index
    %c0_117 = arith.constant 0 : index
    %82 = vector.load %arg2[%c1_114, %c2_115, %c0_116, %c0_117] : memref<2x6x64x75xf32, #tpu.memory_space<vmem>>, vector<1x1x64x75xf32>
    %83 = vector.shape_cast %82 : vector<1x1x64x75xf32> to vector<64x75xf32>
    %cst_118 = arith.constant dense<0.000000e+00> : vector<15x75xf32>
    %84 = tpu.matmul %77, %83, %cst_118 {dimension_numbers = #tpu.dot_dimension_numbers<[1], [0], [0], [1], [0, 0, 1, 1], [], []>} : vector<15x64xf32>, vector<64x75xf32>, vector<15x75xf32> -> vector<15x75xf32>
    %85 = arith.addf %75, %84 : vector<15x75xf32>
    %c0_119 = arith.constant 0 : index
    %c1_120 = arith.constant 1 : index
    %c1_121 = arith.constant 1 : index
    %c0_122 = arith.constant 0 : index
    %86 = vector.load %arg1[%c0_119, %c1_120, %c1_121, %c0_122] : memref<1x4x16x64xf32, #tpu.memory_space<vmem>>, vector<1x1x15x64xf32>
    %87 = vector.shape_cast %86 : vector<1x1x15x64xf32> to vector<15x64xf32>
    %c0_123 = arith.constant 0 : index
    %c3_124 = arith.constant 3 : index
    %c0_125 = arith.constant 0 : index
    %c0_126 = arith.constant 0 : index
    %88 = vector.load %arg2[%c0_123, %c3_124, %c0_125, %c0_126] : memref<2x6x64x75xf32, #tpu.memory_space<vmem>>, vector<1x1x64x75xf32>
    %89 = vector.shape_cast %88 : vector<1x1x64x75xf32> to vector<64x75xf32>
    %cst_127 = arith.constant dense<0.000000e+00> : vector<15x75xf32>
    %90 = tpu.matmul %87, %89, %cst_127 {dimension_numbers = #tpu.dot_dimension_numbers<[1], [0], [0], [1], [0, 0, 1, 1], [], []>} : vector<15x64xf32>, vector<64x75xf32>, vector<15x75xf32> -> vector<15x75xf32>
    %91 = arith.addf %81, %90 : vector<15x75xf32>
    %c1_128 = arith.constant 1 : index
    %c3_129 = arith.constant 3 : index
    %c0_130 = arith.constant 0 : index
    %c0_131 = arith.constant 0 : index
    %92 = vector.load %arg2[%c1_128, %c3_129, %c0_130, %c0_131] : memref<2x6x64x75xf32, #tpu.memory_space<vmem>>, vector<1x1x64x75xf32>
    %93 = vector.shape_cast %92 : vector<1x1x64x75xf32> to vector<64x75xf32>
    %cst_132 = arith.constant dense<0.000000e+00> : vector<15x75xf32>
    %94 = tpu.matmul %87, %93, %cst_132 {dimension_numbers = #tpu.dot_dimension_numbers<[1], [0], [0], [1], [0, 0, 1, 1], [], []>} : vector<15x64xf32>, vector<64x75xf32>, vector<15x75xf32> -> vector<15x75xf32>
    %95 = arith.addf %85, %94 : vector<15x75xf32>
    %c0_133 = arith.constant 0 : index
    %c2_134 = arith.constant 2 : index
    %c1_135 = arith.constant 1 : index
    %c0_136 = arith.constant 0 : index
    %96 = vector.load %arg1[%c0_133, %c2_134, %c1_135, %c0_136] : memref<1x4x16x64xf32, #tpu.memory_space<vmem>>, vector<1x1x15x64xf32>
    %97 = vector.shape_cast %96 : vector<1x1x15x64xf32> to vector<15x64xf32>
    %c0_137 = arith.constant 0 : index
    %c4_138 = arith.constant 4 : index
    %c0_139 = arith.constant 0 : index
    %c0_140 = arith.constant 0 : index
    %98 = vector.load %arg2[%c0_137, %c4_138, %c0_139, %c0_140] : memref<2x6x64x75xf32, #tpu.memory_space<vmem>>, vector<1x1x64x75xf32>
    %99 = vector.shape_cast %98 : vector<1x1x64x75xf32> to vector<64x75xf32>
    %cst_141 = arith.constant dense<0.000000e+00> : vector<15x75xf32>
    %100 = tpu.matmul %97, %99, %cst_141 {dimension_numbers = #tpu.dot_dimension_numbers<[1], [0], [0], [1], [0, 0, 1, 1], [], []>} : vector<15x64xf32>, vector<64x75xf32>, vector<15x75xf32> -> vector<15x75xf32>
    %101 = arith.addf %91, %100 : vector<15x75xf32>
    %c1_142 = arith.constant 1 : index
    %c4_143 = arith.constant 4 : index
    %c0_144 = arith.constant 0 : index
    %c0_145 = arith.constant 0 : index
    %102 = vector.load %arg2[%c1_142, %c4_143, %c0_144, %c0_145] : memref<2x6x64x75xf32, #tpu.memory_space<vmem>>, vector<1x1x64x75xf32>
    %103 = vector.shape_cast %102 : vector<1x1x64x75xf32> to vector<64x75xf32>
    %cst_146 = arith.constant dense<0.000000e+00> : vector<15x75xf32>
    %104 = tpu.matmul %97, %103, %cst_146 {dimension_numbers = #tpu.dot_dimension_numbers<[1], [0], [0], [1], [0, 0, 1, 1], [], []>} : vector<15x64xf32>, vector<64x75xf32>, vector<15x75xf32> -> vector<15x75xf32>
    %105 = arith.addf %95, %104 : vector<15x75xf32>
    %c0_147 = arith.constant 0 : index
    %c3_148 = arith.constant 3 : index
    %c1_149 = arith.constant 1 : index
    %c0_150 = arith.constant 0 : index
    %106 = vector.load %arg1[%c0_147, %c3_148, %c1_149, %c0_150] : memref<1x4x16x64xf32, #tpu.memory_space<vmem>>, vector<1x1x15x64xf32>
    %107 = vector.shape_cast %106 : vector<1x1x15x64xf32> to vector<15x64xf32>
    %c0_151 = arith.constant 0 : index
    %c5_152 = arith.constant 5 : index
    %c0_153 = arith.constant 0 : index
    %c0_154 = arith.constant 0 : index
    %108 = vector.load %arg2[%c0_151, %c5_152, %c0_153, %c0_154] : memref<2x6x64x75xf32, #tpu.memory_space<vmem>>, vector<1x1x64x75xf32>
    %109 = vector.shape_cast %108 : vector<1x1x64x75xf32> to vector<64x75xf32>
    %cst_155 = arith.constant dense<0.000000e+00> : vector<15x75xf32>
    %110 = tpu.matmul %107, %109, %cst_155 {dimension_numbers = #tpu.dot_dimension_numbers<[1], [0], [0], [1], [0, 0, 1, 1], [], []>} : vector<15x64xf32>, vector<64x75xf32>, vector<15x75xf32> -> vector<15x75xf32>
    %111 = arith.addf %101, %110 : vector<15x75xf32>
    %c1_156 = arith.constant 1 : index
    %c5_157 = arith.constant 5 : index
    %c0_158 = arith.constant 0 : index
    %c0_159 = arith.constant 0 : index
    %112 = vector.load %arg2[%c1_156, %c5_157, %c0_158, %c0_159] : memref<2x6x64x75xf32, #tpu.memory_space<vmem>>, vector<1x1x64x75xf32>
    %113 = vector.shape_cast %112 : vector<1x1x64x75xf32> to vector<64x75xf32>
    %cst_160 = arith.constant dense<0.000000e+00> : vector<15x75xf32>
    %114 = tpu.matmul %107, %113, %cst_160 {dimension_numbers = #tpu.dot_dimension_numbers<[1], [0], [0], [1], [0, 0, 1, 1], [], []>} : vector<15x64xf32>, vector<64x75xf32>, vector<15x75xf32> -> vector<15x75xf32>
    %115 = arith.addf %105, %114 : vector<15x75xf32>
    %116 = arith.maximumf %53, %57 : vector<15x75xf32>
    %117 = arith.maximumf %111, %115 : vector<15x75xf32>
    %118 = arith.maximumf %116, %117 : vector<15x75xf32>
    %c0_161 = arith.constant 0 : index
    %c0_162 = arith.constant 0 : index
    %119 = vector.load %arg3[%c0_161, %c0_162] : memref<1x75xf32, #tpu.memory_space<vmem>>, vector<1x75xf32>
    %120 = vector.broadcast %119 : vector<1x75xf32> to vector<15x75xf32>
    %121 = arith.addf %118, %120 : vector<15x75xf32>
    %cst_163 = arith.constant 0.000000e+00 : f32
    %122 = vector.broadcast %cst_163 : f32 to vector<15x75xf32>
    %123 = arith.maximumf %121, %122 : vector<15x75xf32>
    %124 = vector.extract_strided_slice %123 {offsets = [0, 0], sizes = [13, 75], strides = [1, 1]} : vector<15x75xf32> to vector<13x75xf32>
    %c0_164 = arith.constant 0 : index
    %c0_165 = arith.constant 0 : index
    %c0_166 = arith.constant 0 : index
    %c0_167 = arith.constant 0 : index
    %125 = vector.load %arg4[%c0_164, %c0_165, %c0_166, %c0_167] : memref<2x3x75x48xf32, #tpu.memory_space<vmem>>, vector<1x1x75x48xf32>
    %126 = vector.shape_cast %125 : vector<1x1x75x48xf32> to vector<75x48xf32>
    %cst_168 = arith.constant dense<0.000000e+00> : vector<13x48xf32>
    %127 = tpu.matmul %124, %126, %cst_168 {dimension_numbers = #tpu.dot_dimension_numbers<[1], [0], [0], [1], [0, 0, 1, 1], [], []>} : vector<13x75xf32>, vector<75x48xf32>, vector<13x48xf32> -> vector<13x48xf32>
    %128 = vector.extract_strided_slice %123 {offsets = [1, 0], sizes = [13, 75], strides = [1, 1]} : vector<15x75xf32> to vector<13x75xf32>
    %c0_169 = arith.constant 0 : index
    %c1_170 = arith.constant 1 : index
    %c0_171 = arith.constant 0 : index
    %c0_172 = arith.constant 0 : index
    %129 = vector.load %arg4[%c0_169, %c1_170, %c0_171, %c0_172] : memref<2x3x75x48xf32, #tpu.memory_space<vmem>>, vector<1x1x75x48xf32>
    %130 = vector.shape_cast %129 : vector<1x1x75x48xf32> to vector<75x48xf32>
    %cst_173 = arith.constant dense<0.000000e+00> : vector<13x48xf32>
    %131 = tpu.matmul %128, %130, %cst_173 {dimension_numbers = #tpu.dot_dimension_numbers<[1], [0], [0], [1], [0, 0, 1, 1], [], []>} : vector<13x75xf32>, vector<75x48xf32>, vector<13x48xf32> -> vector<13x48xf32>
    %132 = arith.addf %127, %131 : vector<13x48xf32>
    %133 = vector.extract_strided_slice %123 {offsets = [2, 0], sizes = [13, 75], strides = [1, 1]} : vector<15x75xf32> to vector<13x75xf32>
    %c0_174 = arith.constant 0 : index
    %c2_175 = arith.constant 2 : index
    %c0_176 = arith.constant 0 : index
    %c0_177 = arith.constant 0 : index
    %134 = vector.load %arg4[%c0_174, %c2_175, %c0_176, %c0_177] : memref<2x3x75x48xf32, #tpu.memory_space<vmem>>, vector<1x1x75x48xf32>
    %135 = vector.shape_cast %134 : vector<1x1x75x48xf32> to vector<75x48xf32>
    %cst_178 = arith.constant dense<0.000000e+00> : vector<13x48xf32>
    %136 = tpu.matmul %133, %135, %cst_178 {dimension_numbers = #tpu.dot_dimension_numbers<[1], [0], [0], [1], [0, 0, 1, 1], [], []>} : vector<13x75xf32>, vector<75x48xf32>, vector<13x48xf32> -> vector<13x48xf32>
    %137 = arith.addf %132, %136 : vector<13x48xf32>
    %138 = vector.extract_strided_slice %123 {offsets = [0, 0], sizes = [13, 75], strides = [1, 1]} : vector<15x75xf32> to vector<13x75xf32>
    %c1_179 = arith.constant 1 : index
    %c0_180 = arith.constant 0 : index
    %c0_181 = arith.constant 0 : index
    %c0_182 = arith.constant 0 : index
    %139 = vector.load %arg4[%c1_179, %c0_180, %c0_181, %c0_182] : memref<2x3x75x48xf32, #tpu.memory_space<vmem>>, vector<1x1x75x48xf32>
    %140 = vector.shape_cast %139 : vector<1x1x75x48xf32> to vector<75x48xf32>
    %cst_183 = arith.constant dense<0.000000e+00> : vector<13x48xf32>
    %141 = tpu.matmul %138, %140, %cst_183 {dimension_numbers = #tpu.dot_dimension_numbers<[1], [0], [0], [1], [0, 0, 1, 1], [], []>} : vector<13x75xf32>, vector<75x48xf32>, vector<13x48xf32> -> vector<13x48xf32>
    %142 = vector.extract_strided_slice %123 {offsets = [1, 0], sizes = [13, 75], strides = [1, 1]} : vector<15x75xf32> to vector<13x75xf32>
    %c1_184 = arith.constant 1 : index
    %c1_185 = arith.constant 1 : index
    %c0_186 = arith.constant 0 : index
    %c0_187 = arith.constant 0 : index
    %143 = vector.load %arg4[%c1_184, %c1_185, %c0_186, %c0_187] : memref<2x3x75x48xf32, #tpu.memory_space<vmem>>, vector<1x1x75x48xf32>
    %144 = vector.shape_cast %143 : vector<1x1x75x48xf32> to vector<75x48xf32>
    %cst_188 = arith.constant dense<0.000000e+00> : vector<13x48xf32>
    %145 = tpu.matmul %142, %144, %cst_188 {dimension_numbers = #tpu.dot_dimension_numbers<[1], [0], [0], [1], [0, 0, 1, 1], [], []>} : vector<13x75xf32>, vector<75x48xf32>, vector<13x48xf32> -> vector<13x48xf32>
    %146 = arith.addf %141, %145 : vector<13x48xf32>
    %147 = vector.extract_strided_slice %123 {offsets = [2, 0], sizes = [13, 75], strides = [1, 1]} : vector<15x75xf32> to vector<13x75xf32>
    %c1_189 = arith.constant 1 : index
    %c2_190 = arith.constant 2 : index
    %c0_191 = arith.constant 0 : index
    %c0_192 = arith.constant 0 : index
    %148 = vector.load %arg4[%c1_189, %c2_190, %c0_191, %c0_192] : memref<2x3x75x48xf32, #tpu.memory_space<vmem>>, vector<1x1x75x48xf32>
    %149 = vector.shape_cast %148 : vector<1x1x75x48xf32> to vector<75x48xf32>
    %cst_193 = arith.constant dense<0.000000e+00> : vector<13x48xf32>
    %150 = tpu.matmul %147, %149, %cst_193 {dimension_numbers = #tpu.dot_dimension_numbers<[1], [0], [0], [1], [0, 0, 1, 1], [], []>} : vector<13x75xf32>, vector<75x48xf32>, vector<13x48xf32> -> vector<13x48xf32>
    %151 = arith.addf %146, %150 : vector<13x48xf32>
    %152 = arith.maximumf %137, %151 : vector<13x48xf32>
    %c0_194 = arith.constant 0 : index
    %c0_195 = arith.constant 0 : index
    %153 = vector.load %arg5[%c0_194, %c0_195] : memref<1x48xf32, #tpu.memory_space<vmem>>, vector<1x48xf32>
    %154 = vector.broadcast %153 : vector<1x48xf32> to vector<13x48xf32>
    %155 = arith.addf %152, %154 : vector<13x48xf32>
    %cst_196 = arith.constant 0.000000e+00 : f32
    %156 = vector.broadcast %cst_196 : f32 to vector<13x48xf32>
    %157 = arith.maximumf %155, %156 : vector<13x48xf32>
    %c0_197 = arith.constant 0 : index
    %c0_198 = arith.constant 0 : index
    %158 = vector.load %arg7[%c0_197, %c0_198] : memref<1x10xf32, #tpu.memory_space<vmem>>, vector<1x10xf32>
    %159 = vector.extract_strided_slice %157 {offsets = [0, 0], sizes = [1, 48], strides = [1, 1]} : vector<13x48xf32> to vector<1x48xf32>
    %160 = vector.extract_strided_slice %157 {offsets = [1, 0], sizes = [1, 48], strides = [1, 1]} : vector<13x48xf32> to vector<1x48xf32>
    %161 = arith.maximumf %159, %160 : vector<1x48xf32>
    %c0_199 = arith.constant 0 : index
    %c0_200 = arith.constant 0 : index
    %c0_201 = arith.constant 0 : index
    %162 = vector.load %arg6[%c0_199, %c0_200, %c0_201] : memref<6x48x10xf32, #tpu.memory_space<vmem>>, vector<1x48x10xf32>
    %163 = vector.shape_cast %162 : vector<1x48x10xf32> to vector<48x10xf32>
    %cst_202 = arith.constant dense<0.000000e+00> : vector<1x10xf32>
    %164 = tpu.matmul %161, %163, %cst_202 {dimension_numbers = #tpu.dot_dimension_numbers<[1], [0], [0], [1], [0, 0, 1, 1], [], []>} : vector<1x48xf32>, vector<48x10xf32>, vector<1x10xf32> -> vector<1x10xf32>
    %165 = arith.addf %158, %164 : vector<1x10xf32>
    %166 = vector.extract_strided_slice %157 {offsets = [2, 0], sizes = [1, 48], strides = [1, 1]} : vector<13x48xf32> to vector<1x48xf32>
    %167 = vector.extract_strided_slice %157 {offsets = [3, 0], sizes = [1, 48], strides = [1, 1]} : vector<13x48xf32> to vector<1x48xf32>
    %168 = arith.maximumf %166, %167 : vector<1x48xf32>
    %c1_203 = arith.constant 1 : index
    %c0_204 = arith.constant 0 : index
    %c0_205 = arith.constant 0 : index
    %169 = vector.load %arg6[%c1_203, %c0_204, %c0_205] : memref<6x48x10xf32, #tpu.memory_space<vmem>>, vector<1x48x10xf32>
    %170 = vector.shape_cast %169 : vector<1x48x10xf32> to vector<48x10xf32>
    %cst_206 = arith.constant dense<0.000000e+00> : vector<1x10xf32>
    %171 = tpu.matmul %168, %170, %cst_206 {dimension_numbers = #tpu.dot_dimension_numbers<[1], [0], [0], [1], [0, 0, 1, 1], [], []>} : vector<1x48xf32>, vector<48x10xf32>, vector<1x10xf32> -> vector<1x10xf32>
    %172 = arith.addf %165, %171 : vector<1x10xf32>
    %173 = vector.extract_strided_slice %157 {offsets = [4, 0], sizes = [1, 48], strides = [1, 1]} : vector<13x48xf32> to vector<1x48xf32>
    %174 = vector.extract_strided_slice %157 {offsets = [5, 0], sizes = [1, 48], strides = [1, 1]} : vector<13x48xf32> to vector<1x48xf32>
    %175 = arith.maximumf %173, %174 : vector<1x48xf32>
    %c2_207 = arith.constant 2 : index
    %c0_208 = arith.constant 0 : index
    %c0_209 = arith.constant 0 : index
    %176 = vector.load %arg6[%c2_207, %c0_208, %c0_209] : memref<6x48x10xf32, #tpu.memory_space<vmem>>, vector<1x48x10xf32>
    %177 = vector.shape_cast %176 : vector<1x48x10xf32> to vector<48x10xf32>
    %cst_210 = arith.constant dense<0.000000e+00> : vector<1x10xf32>
    %178 = tpu.matmul %175, %177, %cst_210 {dimension_numbers = #tpu.dot_dimension_numbers<[1], [0], [0], [1], [0, 0, 1, 1], [], []>} : vector<1x48xf32>, vector<48x10xf32>, vector<1x10xf32> -> vector<1x10xf32>
    %179 = arith.addf %172, %178 : vector<1x10xf32>
    %180 = vector.extract_strided_slice %157 {offsets = [6, 0], sizes = [1, 48], strides = [1, 1]} : vector<13x48xf32> to vector<1x48xf32>
    %181 = vector.extract_strided_slice %157 {offsets = [7, 0], sizes = [1, 48], strides = [1, 1]} : vector<13x48xf32> to vector<1x48xf32>
    %182 = arith.maximumf %180, %181 : vector<1x48xf32>
    %c3_211 = arith.constant 3 : index
    %c0_212 = arith.constant 0 : index
    %c0_213 = arith.constant 0 : index
    %183 = vector.load %arg6[%c3_211, %c0_212, %c0_213] : memref<6x48x10xf32, #tpu.memory_space<vmem>>, vector<1x48x10xf32>
    %184 = vector.shape_cast %183 : vector<1x48x10xf32> to vector<48x10xf32>
    %cst_214 = arith.constant dense<0.000000e+00> : vector<1x10xf32>
    %185 = tpu.matmul %182, %184, %cst_214 {dimension_numbers = #tpu.dot_dimension_numbers<[1], [0], [0], [1], [0, 0, 1, 1], [], []>} : vector<1x48xf32>, vector<48x10xf32>, vector<1x10xf32> -> vector<1x10xf32>
    %186 = arith.addf %179, %185 : vector<1x10xf32>
    %187 = vector.extract_strided_slice %157 {offsets = [8, 0], sizes = [1, 48], strides = [1, 1]} : vector<13x48xf32> to vector<1x48xf32>
    %188 = vector.extract_strided_slice %157 {offsets = [9, 0], sizes = [1, 48], strides = [1, 1]} : vector<13x48xf32> to vector<1x48xf32>
    %189 = arith.maximumf %187, %188 : vector<1x48xf32>
    %c4_215 = arith.constant 4 : index
    %c0_216 = arith.constant 0 : index
    %c0_217 = arith.constant 0 : index
    %190 = vector.load %arg6[%c4_215, %c0_216, %c0_217] : memref<6x48x10xf32, #tpu.memory_space<vmem>>, vector<1x48x10xf32>
    %191 = vector.shape_cast %190 : vector<1x48x10xf32> to vector<48x10xf32>
    %cst_218 = arith.constant dense<0.000000e+00> : vector<1x10xf32>
    %192 = tpu.matmul %189, %191, %cst_218 {dimension_numbers = #tpu.dot_dimension_numbers<[1], [0], [0], [1], [0, 0, 1, 1], [], []>} : vector<1x48xf32>, vector<48x10xf32>, vector<1x10xf32> -> vector<1x10xf32>
    %193 = arith.addf %186, %192 : vector<1x10xf32>
    %194 = vector.extract_strided_slice %157 {offsets = [10, 0], sizes = [1, 48], strides = [1, 1]} : vector<13x48xf32> to vector<1x48xf32>
    %195 = vector.extract_strided_slice %157 {offsets = [11, 0], sizes = [1, 48], strides = [1, 1]} : vector<13x48xf32> to vector<1x48xf32>
    %196 = arith.maximumf %194, %195 : vector<1x48xf32>
    %c5_219 = arith.constant 5 : index
    %c0_220 = arith.constant 0 : index
    %c0_221 = arith.constant 0 : index
    %197 = vector.load %arg6[%c5_219, %c0_220, %c0_221] : memref<6x48x10xf32, #tpu.memory_space<vmem>>, vector<1x48x10xf32>
    %198 = vector.shape_cast %197 : vector<1x48x10xf32> to vector<48x10xf32>
    %cst_222 = arith.constant dense<0.000000e+00> : vector<1x10xf32>
    %199 = tpu.matmul %196, %198, %cst_222 {dimension_numbers = #tpu.dot_dimension_numbers<[1], [0], [0], [1], [0, 0, 1, 1], [], []>} : vector<1x48xf32>, vector<48x10xf32>, vector<1x10xf32> -> vector<1x10xf32>
    %200 = arith.addf %193, %199 : vector<1x10xf32>
    %c0_223 = arith.constant 0 : index
    %c0_224 = arith.constant 0 : index
    %c0_225 = arith.constant 0 : index
    %201 = vector.load %arg8[%c0_223, %c0_224, %c0_225] : memref<1x1x10xf32, #tpu.memory_space<vmem>>, vector<1x1x10xf32>
    %202 = vector.shape_cast %201 : vector<1x1x10xf32> to vector<1x10xf32>
    %203 = vector.shape_cast %200 : vector<1x10xf32> to vector<1x1x10xf32>
    tpu.vector_store %arg8[%c0_223, %c0_224, %c0_225], %203 {strides = array<i32>} : memref<1x1x10xf32, #tpu.memory_space<vmem>>, vector<1x1x10xf32>,
    return
  }
  func.func @transform_0(%arg0: i32) -> (i32, i32, i32, i32) {
    %c0_i32 = arith.constant 0 : i32
    %c0_i32_0 = arith.constant 0 : i32
    %c0_i32_1 = arith.constant 0 : i32
    %c0_i32_2 = arith.constant 0 : i32
    return %arg0, %c0_i32, %c0_i32_0, %c0_i32_1 : i32, i32, i32, i32
  }
  func.func @transform_1(%arg0: i32) -> (i32, i32, i32, i32) {
    %c0_i32 = arith.constant 0 : i32
    %c0_i32_0 = arith.constant 0 : i32
    %c0_i32_1 = arith.constant 0 : i32
    %c0_i32_2 = arith.constant 0 : i32
    %c0_i32_3 = arith.constant 0 : i32
    return %c0_i32, %c0_i32_0, %c0_i32_1, %c0_i32_2 : i32, i32, i32, i32
  }
  func.func @transform_2(%arg0: i32) -> (i32, i32) {
    %c0_i32 = arith.constant 0 : i32
    %c0_i32_0 = arith.constant 0 : i32
    %c0_i32_1 = arith.constant 0 : i32
    return %c0_i32, %c0_i32_0 : i32, i32
  }
  func.func @transform_3(%arg0: i32) -> (i32, i32, i32, i32) {
    %c0_i32 = arith.constant 0 : i32
    %c0_i32_0 = arith.constant 0 : i32
    %c0_i32_1 = arith.constant 0 : i32
    %c0_i32_2 = arith.constant 0 : i32
    %c0_i32_3 = arith.constant 0 : i32
    return %c0_i32, %c0_i32_0, %c0_i32_1, %c0_i32_2 : i32, i32, i32, i32
  }
  func.func @transform_4(%arg0: i32) -> (i32, i32) {
    %c0_i32 = arith.constant 0 : i32
    %c0_i32_0 = arith.constant 0 : i32
    %c0_i32_1 = arith.constant 0 : i32
    return %c0_i32, %c0_i32_0 : i32, i32
  }
  func.func @transform_5(%arg0: i32) -> (i32, i32, i32) {
    %c0_i32 = arith.constant 0 : i32
    %c0_i32_0 = arith.constant 0 : i32
    %c0_i32_1 = arith.constant 0 : i32
    %c0_i32_2 = arith.constant 0 : i32
    return %c0_i32, %c0_i32_0, %c0_i32_1 : i32, i32, i32
  }
  func.func @transform_6(%arg0: i32) -> (i32, i32) {
    %c0_i32 = arith.constant 0 : i32
    %c0_i32_0 = arith.constant 0 : i32
    %c0_i32_1 = arith.constant 0 : i32
    return %c0_i32, %c0_i32_0 : i32, i32
  }
  func.func @transform_7(%arg0: i32) -> (i32, i32, i32) {
    %c0_i32 = arith.constant 0 : i32
    %c0_i32_0 = arith.constant 0 : i32
    %c0_i32_1 = arith.constant 0 : i32
    return %arg0, %c0_i32, %c0_i32_0 : i32, i32, i32
  }
}

</mosaic_0001>

<llo_original>
// kernel: convnet_forward.1
$region0: #{convnet_forward.1}
  #allocation0 [shape = 'u32[]', space=smem, size = 0x4, offset = 0x4, fixed_abs, tag = 'smem constant byte address 0x4 - core index']
  #allocation1 [shape = 'u32[144,128]{1,0:T(1,128)}', space=vmem, size = 0x12000, scoped, tag = 'internal scratch']
  %s0 = inlined_call_operand.vmem [shape: f32[2,4,16,64], index: 0, kind: input, shape index: {}]
  %s1 = inlined_call_operand.vmem [shape: f32[2,6,64,75], index: 1, kind: input, shape index: {}]
  %s2 = inlined_call_operand.vmem [shape: f32[1,75], index: 2, kind: input, shape index: {}]
  %s3 = inlined_call_operand.vmem [shape: f32[2,3,75,48], index: 3, kind: input, shape index: {}]
  %s4 = inlined_call_operand.vmem [shape: f32[1,48], index: 4, kind: input, shape index: {}]
  %s5 = inlined_call_operand.vmem [shape: f32[6,48,10], index: 5, kind: input, shape index: {}]
  %s6 = inlined_call_operand.vmem [shape: f32[1,10], index: 6, kind: input, shape index: {}]
  %s7 = inlined_call_operand.hbm [shape: f32[2,1,10], index: 7, kind: output, shape index: {}]
  %s8 = sld [smem:[#allocation0]]
  $region61: #{convnet_forward.1} parent=0
    _
  %s10 = ssub.s32 1, %s8
  %s11 = scalar_select 0, %s10, %s8
  $region1: #{convnet_forward.1} parent=0
    #allocation2 [shape = 'u8[1024]{0}', space=vmem, size = 0x400, scoped, tag = 'output window, operand 0']
    #allocation3 [shape = 's32[2]{0}', space=sflag, size = 0x8, scoped, tag = 'scoped memory for convnet_forward.1']
    %12 = vsyncpa [#allocation3], 0
    %s13 = scalar_lea.sflag [#allocation3], 1
    %14 = vsyncpa %s13, 0
    loop: start=0, step=1, limit=4
    $region2: #{convnet_forward.1} parent=1 // loop_pre_header
      _
    $region3: #{convnet_forward.1} parent=1 // loop_header
      %s16 = sphi 0, %s20
      %p17 = scmp.ge.s32.totalorder %s16, 4
      %s26 = sphi 0, %s28
      %s29 = sphi 0, %s26
      %s30 = sphi 0, %s29
      %s46 = sphi 0, %s30
      %s50 = sphi 0, %s50
      %s52 = sphi 0, %s50
      %s53 = sphi 0, %s52
      %s67 = sphi 0, %s53
      %s71 = sphi 0, %s71
      %s73 = sphi 0, %s71
      %s74 = sphi 0, %s73
      %s88 = sphi 0, %s74
      %s92 = sphi 0, %s92
      %s94 = sphi 0, %s92
      %s95 = sphi 0, %s94
      %s109 = sphi 0, %s95
      %s113 = sphi 0, %s113
      %s115 = sphi 0, %s113
      %s116 = sphi 0, %s115
      %s130 = sphi 0, %s116
      %s134 = sphi 0, %s134
      %s136 = sphi 0, %s134
      %s137 = sphi 0, %s136
      %s151 = sphi 0, %s137
      %s155 = sphi 0, %s155
      %s157 = sphi 0, %s155
      %s158 = sphi 0, %s157
      %s172 = sphi 0, %s158
      %s178 = sphi 0, %s180
      %s181 = sphi 0, %s178
      %s182 = sphi 0, %s181
      %s198 = sphi 0, %s182
    $region4: #{convnet_forward.1} parent=1 // loop_header_branch
      %19 = sbr.rel (%p17) target = $region8
    $region5: #{convnet_forward.1} parent=1 // loop_body
      %s21 = ssub.s32 %s16, 1
      %s22 = ssub.s32 %s16, 2
      %s23 = sadd.s32 %s16, 1
      %s24 = ssub.s32 %s16, %s23
      %p25 = scmp.eq.s32.totalorder %s24, 0
      %s27 = sadd.s32 %s26, 1
      %s28 = scalar_select %p25, %s26, %s27
      %p31 = pneg %p25
      %p32 = scmp.eq.s32.totalorder %s16, 1
      %p33 = por %p31, %p32
      %p34 = scmp.ne.s32.totalorder %s26, %s29
      %p35 = scmp.eq.s32.totalorder %s16, 0
      %p36 = por %p34, %p35
      %p37 = scmp.ne.s32.totalorder %s26, %s29
      %p38 = scmp.eq.s32.totalorder %s21, 1
      %p39 = por %p37, %p38
      %p40 = scmp.ne.s32.totalorder %s29, %s30
      %p41 = scmp.eq.s32.totalorder %s21, 0
      %p42 = por %p40, %p41
      %p43 = scmp.ne.s32.totalorder %s29, %s30
      %p44 = scmp.eq.s32.totalorder %s22, 1
      %p45 = por %p43, %p44
      %p47 = scmp.ne.s32.totalorder %s30, %s46
      %p48 = scmp.eq.s32.totalorder %s22, 0
      %p49 = por %p47, %p48
      %s51 = sadd.s32 %s50, 1
      %p54 = scmp.eq.s32.totalorder %s16, 1
      %p55 = scmp.ne.s32.totalorder %s50, %s52
      %p56 = scmp.eq.s32.totalorder %s16, 0
      %p57 = por %p55, %p56
      %p58 = scmp.ne.s32.totalorder %s50, %s52
      %p59 = scmp.eq.s32.totalorder %s21, 1
      %p60 = por %p58, %p59
      %p61 = scmp.ne.s32.totalorder %s52, %s53
      %p62 = scmp.eq.s32.totalorder %s21, 0
      %p63 = por %p61, %p62
      %p64 = scmp.ne.s32.totalorder %s52, %s53
      %p65 = scmp.eq.s32.totalorder %s22, 1
      %p66 = por %p64, %p65
      %p68 = scmp.ne.s32.totalorder %s53, %s67
      %p69 = scmp.eq.s32.totalorder %s22, 0
      %p70 = por %p68, %p69
      %s72 = sadd.s32 %s71, 1
      %p75 = scmp.eq.s32.totalorder %s16, 1
      %p76 = scmp.ne.s32.totalorder %s71, %s73
      %p77 = scmp.eq.s32.totalorder %s16, 0
      %p78 = por %p76, %p77
      %p79 = scmp.ne.s32.totalorder %s71, %s73
      %p80 = scmp.eq.s32.totalorder %s21, 1
      %p81 = por %p79, %p80
      %p82 = scmp.ne.s32.totalorder %s73, %s74
      %p83 = scmp.eq.s32.totalorder %s21, 0
      %p84 = por %p82, %p83
      %p85 = scmp.ne.s32.totalorder %s73, %s74
      %p86 = scmp.eq.s32.totalorder %s22, 1
      %p87 = por %p85, %p86
      %p89 = scmp.ne.s32.totalorder %s74, %s88
      %p90 = scmp.eq.s32.totalorder %s22, 0
      %p91 = por %p89, %p90
      %s93 = sadd.s32 %s92, 1
      %p96 = scmp.eq.s32.totalorder %s16, 1
      %p97 = scmp.ne.s32.totalorder %s92, %s94
      %p98 = scmp.eq.s32.totalorder %s16, 0
      %p99 = por %p97, %p98
      %p100 = scmp.ne.s32.totalorder %s92, %s94
      %p101 = scmp.eq.s32.totalorder %s21, 1
      %p102 = por %p100, %p101
      %p103 = scmp.ne.s32.totalorder %s94, %s95
      %p104 = scmp.eq.s32.totalorder %s21, 0
      %p105 = por %p103, %p104
      %p106 = scmp.ne.s32.totalorder %s94, %s95
      %p107 = scmp.eq.s32.totalorder %s22, 1
      %p108 = por %p106, %p107
      %p110 = scmp.ne.s32.totalorder %s95, %s109
      %p111 = scmp.eq.s32.totalorder %s22, 0
      %p112 = por %p110, %p111
      %s114 = sadd.s32 %s113, 1
      %p117 = scmp.eq.s32.totalorder %s16, 1
      %p118 = scmp.ne.s32.totalorder %s113, %s115
      %p119 = scmp.eq.s32.totalorder %s16, 0
      %p120 = por %p118, %p119
      %p121 = scmp.ne.s32.totalorder %s113, %s115
      %p122 = scmp.eq.s32.totalorder %s21, 1
      %p123 = por %p121, %p122
      %p124 = scmp.ne.s32.totalorder %s115, %s116
      %p125 = scmp.eq.s32.totalorder %s21, 0
      %p126 = por %p124, %p125
      %p127 = scmp.ne.s32.totalorder %s115, %s116
      %p128 = scmp.eq.s32.totalorder %s22, 1
      %p129 = por %p127, %p128
      %p131 = scmp.ne.s32.totalorder %s116, %s130
      %p132 = scmp.eq.s32.totalorder %s22, 0
      %p133 = por %p131, %p132
      %s135 = sadd.s32 %s134, 1
      %p138 = scmp.eq.s32.totalorder %s16, 1
      %p139 = scmp.ne.s32.totalorder %s134, %s136
      %p140 = scmp.eq.s32.totalorder %s16, 0
      %p141 = por %p139, %p140
      %p142 = scmp.ne.s32.totalorder %s134, %s136
      %p143 = scmp.eq.s32.totalorder %s21, 1
      %p144 = por %p142, %p143
      %p145 = scmp.ne.s32.totalorder %s136, %s137
      %p146 = scmp.eq.s32.totalorder %s21, 0
      %p147 = por %p145, %p146
      %p148 = scmp.ne.s32.totalorder %s136, %s137
      %p149 = scmp.eq.s32.totalorder %s22, 1
      %p150 = por %p148, %p149
      %p152 = scmp.ne.s32.totalorder %s137, %s151
      %p153 = scmp.eq.s32.totalorder %s22, 0
      %p154 = por %p152, %p153
      %s156 = sadd.s32 %s155, 1
      %p159 = scmp.eq.s32.totalorder %s16, 1
      %p160 = scmp.ne.s32.totalorder %s155, %s157
      %p161 = scmp.eq.s32.totalorder %s16, 0
      %p162 = por %p160, %p161
      %p163 = scmp.ne.s32.totalorder %s155, %s157
      %p164 = scmp.eq.s32.totalorder %s21, 1
      %p165 = por %p163, %p164
      %p166 = scmp.ne.s32.totalorder %s157, %s158
      %p167 = scmp.eq.s32.totalorder %s21, 0
      %p168 = por %p166, %p167
      %p169 = scmp.ne.s32.totalorder %s157, %s158
      %p170 = scmp.eq.s32.totalorder %s22, 1
      %p171 = por %p169, %p170
      %p173 = scmp.ne.s32.totalorder %s158, %s172
      %p174 = scmp.eq.s32.totalorder %s22, 0
      %p175 = por %p173, %p174
      %s176 = ssub.s32 %s16, %s23
      %p177 = scmp.eq.s32.totalorder %s176, 0
      %s179 = sadd.s32 %s178, 1
      %s180 = scalar_select %p177, %s178, %s179
      %p183 = pneg %p177
      %p184 = scmp.eq.s32.totalorder %s16, 1
      %p185 = por %p183, %p184
      %p186 = scmp.ne.s32.totalorder %s178, %s181
      %p187 = scmp.eq.s32.totalorder %s16, 0
      %p188 = por %p186, %p187
      %p189 = scmp.ne.s32.totalorder %s178, %s181
      %p190 = scmp.eq.s32.totalorder %s21, 1
      %p191 = por %p189, %p190
      %p192 = scmp.ne.s32.totalorder %s181, %s182
      %p193 = scmp.eq.s32.totalorder %s21, 0
      %p194 = por %p192, %p193
      %p195 = scmp.ne.s32.totalorder %s181, %s182
      %p196 = scmp.eq.s32.totalorder %s22, 1
      %p197 = por %p195, %p196
      %p199 = scmp.ne.s32.totalorder %s182, %s198
      %p200 = scmp.eq.s32.totalorder %s22, 0
      %p201 = por %p199, %p200
      %p202 = scmp.le.s32.totalorder 1, %s16
      %p203 = scmp.lt.s32.totalorder %s16, 3
      %p204 = pnand %p202, %p203
      %p205 = pneg %p204
      // Predicated region
      $region9: #{convnet_forward.1} parent=5 // pred_check
        _
      $region10: #{convnet_forward.1} parent=5 // pred_check_branch
        %207 = sbr.rel (%p204) target = $region12
      $region11: #{convnet_forward.1} parent=5 // pred_region
        %s208 = ssub.s32 %s16, 1
        // Predicated region
        $region13: #{convnet_forward.1} parent=11 // pred_check
          %p209 = pneg %p63
        $region14: #{convnet_forward.1} parent=11 // pred_check_branch
          %211 = sbr.rel (%p209) target = $region16
        $region15: #{convnet_forward.1} parent=11 // pred_region
          _
        $region16: #{convnet_forward.1} parent=11 // pred_fallthru
          _
        // Predicated region
        $region17: #{convnet_forward.1} parent=11 // pred_check
          %p212 = pneg %p84
        $region18: #{convnet_forward.1} parent=11 // pred_check_branch
          %214 = sbr.rel (%p212) target = $region20
        $region19: #{convnet_forward.1} parent=11 // pred_region
          _
        $region20: #{convnet_forward.1} parent=11 // pred_fallthru
          _
        // Predicated region
        $region21: #{convnet_forward.1} parent=11 // pred_check
          %p215 = pneg %p105
        $region22: #{convnet_forward.1} parent=11 // pred_check_branch
          %217 = sbr.rel (%p215) target = $region24
        $region23: #{convnet_forward.1} parent=11 // pred_region
          _
        $region24: #{convnet_forward.1} parent=11 // pred_fallthru
          _
        // Predicated region
        $region25: #{convnet_forward.1} parent=11 // pred_check
          %p218 = pneg %p126
        $region26: #{convnet_forward.1} parent=11 // pred_check_branch
          %220 = sbr.rel (%p218) target = $region28
        $region27: #{convnet_forward.1} parent=11 // pred_region
          _
        $region28: #{convnet_forward.1} parent=11 // pred_fallthru
          _
        // Predicated region
        $region29: #{convnet_forward.1} parent=11 // pred_check
          %p221 = pneg %p147
        $region30: #{convnet_forward.1} parent=11 // pred_check_branch
          %223 = sbr.rel (%p221) target = $region32
        $region31: #{convnet_forward.1} parent=11 // pred_region
          _
        $region32: #{convnet_forward.1} parent=11 // pred_fallthru
          _
        // Predicated region
        $region33: #{convnet_forward.1} parent=11 // pred_check
          %p224 = pneg %p168
        $region34: #{convnet_forward.1} parent=11 // pred_check_branch
          %226 = sbr.rel (%p224) target = $region36
        $region35: #{convnet_forward.1} parent=11 // pred_region
          _
        $region36: #{convnet_forward.1} parent=11 // pred_fallthru
          _
      $region12: #{convnet_forward.1} parent=5 // pred_fallthru
        _
      %p227 = scmp.lt.s32.totalorder %s16, 2
      // Predicated region
      $region37: #{convnet_forward.1} parent=5 // pred_check
        %p228 = pneg %p227
      $region38: #{convnet_forward.1} parent=5 // pred_check_branch
        %230 = sbr.rel (%p228) target = $region40
      $region39: #{convnet_forward.1} parent=5 // pred_region
        // Predicated region
        $region41: #{convnet_forward.1} parent=39 // pred_check
          %p231 = pneg %p36
        $region42: #{convnet_forward.1} parent=39 // pred_check_branch
          %233 = sbr.rel (%p231) target = $region44
        $region43: #{convnet_forward.1} parent=39 // pred_region
          %p234 = scmp.lt.s32.totalorder %s16, 1
          %s235 = scalar_select %p234, %s16, 1
          %s236 = smul.addr %s235, 8
          %s237 = smul.addr %s236, 8
          %s238 = scalar_lea.vmem %s0, %s237
        $region44: #{convnet_forward.1} parent=39 // pred_fallthru
          _
      $region40: #{convnet_forward.1} parent=5 // pred_fallthru
        _
      %p239 = scmp.le.s32.totalorder 1, %s16
      %p240 = scmp.lt.s32.totalorder %s16, 3
      %p241 = pnand %p239, %p240
      %p242 = pneg %p241
      // Predicated region
      $region45: #{convnet_forward.1} parent=5 // pred_check
        _
      $region46: #{convnet_forward.1} parent=5 // pred_check_branch
        %244 = sbr.rel (%p241) target = $region48
      $region47: #{convnet_forward.1} parent=5 // pred_region
        %s245 = ssub.s32 %s16, 1
        %p246 = scmp.lt.s32.totalorder %s21, 1
        %s247 = scalar_select %p246, %s21, 1
        %s248 = smul.addr %s247, 8
        %s249 = smul.addr %s248, 8
        %s250 = scalar_lea.vmem %s0, %s249
        %p251 = pneg %p42
        %p252 = pneg %p39
        %p253 = pneg %p63
        %p254 = pneg %p60
        %p255 = pneg %p84
        %p256 = pneg %p81
        %p257 = pneg %p105
        %p258 = pneg %p102
        %p259 = pneg %p126
        %p260 = pneg %p123
        %p261 = pneg %p147
        %p262 = pneg %p144
        %p263 = pneg %p168
        %p264 = pneg %p165
        %p265 = pneg %p194
        %p266 = pneg %p191
        %s267 = sand.u32 %s181, 1
        %s268 = scalar_lea.sflag [#allocation3], %s267
        %s269 = sand.u32 %s181, 1
        %s270 = scalar_lea.vmem [#allocation2], %s269
        %p271 = scmp.lt.s32.totalorder %s21, 1
        %s272 = scalar_select %p271, %s21, 1
        %s273 = smul.addr %s272, 8
        %s274 = smul.addr %s273, 8
        %s275 = scalar_lea.vmem %s0, %s274
        %v276 = vld [vmem:[%s275] sm:$0xff]
        %v277 = vld [vmem:[%s275 + $0x8] sm:$0x7f]
        %v278 = vld [vmem:[%s1] sm:$0xff]
        %v279 = vld [vmem:[%s1 + $0x8] sm:$0xff]
        %v280 = vld [vmem:[%s1 + $0x10] sm:$0xff]
        %v281 = vld [vmem:[%s1 + $0x18] sm:$0xff]
        %v282 = vld [vmem:[%s1 + $0x20] sm:$0xff]
        %v283 = vld [vmem:[%s1 + $0x28] sm:$0xff]
        %v284 = vld [vmem:[%s1 + $0x30] sm:$0xff]
        %v285 = vld [vmem:[%s1 + $0x38] sm:$0xff]
        %s286 = scalar_lea.vmem %s1, 384
        %v287 = vld [vmem:[%s286] sm:$0xff]
        %v288 = vld [vmem:[%s286 + $0x8] sm:$0xff]
        %v289 = vld [vmem:[%s286 + $0x10] sm:$0xff]
        %v290 = vld [vmem:[%s286 + $0x18] sm:$0xff]
        %v291 = vld [vmem:[%s286 + $0x20] sm:$0xff]
        %v292 = vld [vmem:[%s286 + $0x28] sm:$0xff]
        %v293 = vld [vmem:[%s286 + $0x30] sm:$0xff]
        %v294 = vld [vmem:[%s286 + $0x38] sm:$0xff]
        %s295 = scalar_lea.vmem %s275, 16
        %v296 = vld [vmem:[%s295] sm:$0xff]
        %v297 = vld [vmem:[%s295 + $0x8] sm:$0x7f]
        %s298 = scalar_lea.vmem %s1, 64
        %v299 = vld [vmem:[%s298] sm:$0xff]
        %v300 = vld [vmem:[%s298 + $0x8] sm:$0xff]
        %v301 = vld [vmem:[%s298 + $0x10] sm:$0xff]
        %v302 = vld [vmem:[%s298 + $0x18] sm:$0xff]
        %v303 = vld [vmem:[%s298 + $0x20] sm:$0xff]
        %v304 = vld [vmem:[%s298 + $0x28] sm:$0xff]
        %v305 = vld [vmem:[%s298 + $0x30] sm:$0xff]
        %v306 = vld [vmem:[%s298 + $0x38] sm:$0xff]
        %vm307 = vcmask 523264
        %v309 = vsel %vm307, %v296, 0
        %v312 = vsel %vm307, %v297, 0
        %314 = vmatprep.subr.mxu0 0.0
        %315 = vmatpush1.msra.mxu0 0.0
        %316 = vmatprep.subr.mxu0 0.0
        %317 = vmatpush1.msra.mxu0 0.0
        %318 = vmatprep.subr.mxu0 0.0
        %319 = vmatpush1.msra.mxu0 0.0
        %320 = vmatprep.subr.mxu0 0.0
        %321 = vmatpush1.msra.mxu0 0.0
        %322 = vmatprep.subr.mxu0 0.0
        %323 = vmatpush1.msra.mxu0 0.0
        %324 = vmatprep.subr.mxu0 0.0
        %325 = vmatpush1.msra.mxu0 0.0
        %326 = vmatprep.subr.mxu0 0.0
        %327 = vmatpush1.msra.mxu0 0.0
        %328 = vmatprep.subr.mxu0 0.0
        %329 = vmatpush1.msra.mxu0 0.0
        %330 = vmatprep.subr.mxu0 0.0
        %331 = vmatpush1.msra.mxu0 %v306
        %332 = vmatprep.subr.mxu0 0.0
        %333 = vmatpush1.msra.mxu0 %v305
        %334 = vmatprep.subr.mxu0 0.0
        %335 = vmatpush1.msra.mxu0 %v304
        %336 = vmatprep.subr.mxu0 0.0
        %337 = vmatpush1.msra.mxu0 %v303
        %338 = vmatprep.subr.mxu0 0.0
        %339 = vmatpush1.msra.mxu0 %v302
        %340 = vmatprep.subr.mxu0 0.0
        %341 = vmatpush1.msra.mxu0 %v301
        %342 = vmatprep.subr.mxu0 0.0
        %343 = vmatpush1.msra.mxu0 %v300
        %344 = vmatprep.subr.mxu0 0.0
        %345 = vmatpush1.msra.mxu0 %v299
        %346 = vmatprep.subr.mxu0 0.0
        %347 = vmatpush2.msra.mxu0 0.0
        %348 = vmatprep.subr.mxu0 0.0
        %349 = vmatpush2.msra.mxu0 0.0
        %350 = vmatprep.subr.mxu0 0.0
        %351 = vmatpush2.msra.mxu0 0.0
        %352 = vmatprep.subr.mxu0 0.0
        %353 = vmatpush2.msra.mxu0 0.0
        %354 = vmatprep.subr.mxu0 0.0
        %355 = vmatpush2.msra.mxu0 0.0
        %356 = vmatprep.subr.mxu0 0.0
        %357 = vmatpush2.msra.mxu0 0.0
        %358 = vmatprep.subr.mxu0 0.0
        %359 = vmatpush2.msra.mxu0 0.0
        %360 = vmatprep.subr.mxu0 0.0
        %361 = vmatpush2.msra.mxu0 0.0
        %362 = vmatprep.subr.mxu0 0.0
        %363 = vmatpush2.msra.mxu0 0.0
        %364 = vmatprep.subr.mxu0 0.0
        %365 = vmatpush2.msra.mxu0 0.0
        %366 = vmatprep.subr.mxu0 0.0
        %367 = vmatpush2.msra.mxu0 0.0
        %368 = vmatprep.subr.mxu0 0.0
        %369 = vmatpush2.msra.mxu0 0.0
        %370 = vmatprep.subr.mxu0 0.0
        %371 = vmatpush2.msra.mxu0 0.0
        %372 = vmatprep.subr.mxu0 0.0
        %373 = vmatpush2.msra.mxu0 0.0
        %374 = vmatprep.subr.mxu0 0.0
        %375 = vmatpush2.msra.mxu0 0.0
        %376 = vmatprep.subr.mxu0 0.0
        %377 = vmatpush2.msra.mxu0 0.0
        %378 = vmatprep.mubr.f32.mxu0 0.0
        %379 = vmatmul.mubr.f32.gmra.mxu0 %v309
        %v380 = vpop.f32.mrf.mxu0
        %v381 = vadd.f32 0.0, %v380
        %v382 = vpop.f32.mrf.mxu0
        %383 = vmatprep.mubr.f32.mxu0 0.0
        %384 = vmatmul.mubr.f32.gmra.mxu0 %v312
        %v385 = vpop.f32.mrf.mxu0
        %v386 = vadd.f32 0.0, %v385
        %v387 = vpop.f32.mrf.mxu0
        %388 = vdwg.mxu0
        %v390 = vsel %vm307, %v276, 0
        %v393 = vsel %vm307, %v277, 0
        %395 = vmatprep.subr.mxu0 0.0
        %396 = vmatpush1.msra.mxu0 0.0
        %397 = vmatprep.subr.mxu0 0.0
        %398 = vmatpush1.msra.mxu0 0.0
        %399 = vmatprep.subr.mxu0 0.0
        %400 = vmatpush1.msra.mxu0 0.0
        %401 = vmatprep.subr.mxu0 0.0
        %402 = vmatpush1.msra.mxu0 0.0
        %403 = vmatprep.subr.mxu0 0.0
        %404 = vmatpush1.msra.mxu0 0.0
        %405 = vmatprep.subr.mxu0 0.0
        %406 = vmatpush1.msra.mxu0 0.0
        %407 = vmatprep.subr.mxu0 0.0
        %408 = vmatpush1.msra.mxu0 0.0
        %409 = vmatprep.subr.mxu0 0.0
        %410 = vmatpush1.msra.mxu0 0.0
        %411 = vmatprep.subr.mxu0 0.0
        %412 = vmatpush1.msra.mxu0 %v285
        %413 = vmatprep.subr.mxu0 0.0
        %414 = vmatpush1.msra.mxu0 %v284
        %415 = vmatprep.subr.mxu0 0.0
        %416 = vmatpush1.msra.mxu0 %v283
        %417 = vmatprep.subr.mxu0 0.0
        %418 = vmatpush1.msra.mxu0 %v282
        %419 = vmatprep.subr.mxu0 0.0
        %420 = vmatpush1.msra.mxu0 %v281
        %421 = vmatprep.subr.mxu0 0.0
        %422 = vmatpush1.msra.mxu0 %v280
        %423 = vmatprep.subr.mxu0 0.0
        %424 = vmatpush1.msra.mxu0 %v279
        %425 = vmatprep.subr.mxu0 0.0
        %426 = vmatpush1.msra.mxu0 %v278
        %427 = vmatprep.subr.mxu0 0.0
        %428 = vmatpush2.msra.mxu0 0.0
        %429 = vmatprep.subr.mxu0 0.0
        %430 = vmatpush2.msra.mxu0 0.0
        %431 = vmatprep.subr.mxu0 0.0
        %432 = vmatpush2.msra.mxu0 0.0
        %433 = vmatprep.subr.mxu0 0.0
        %434 = vmatpush2.msra.mxu0 0.0
        %435 = vmatprep.subr.mxu0 0.0
        %436 = vmatpush2.msra.mxu0 0.0
        %437 = vmatprep.subr.mxu0 0.0
        %438 = vmatpush2.msra.mxu0 0.0
        %439 = vmatprep.subr.mxu0 0.0
        %440 = vmatpush2.msra.mxu0 0.0
        %441 = vmatprep.subr.mxu0 0.0
        %442 = vmatpush2.msra.mxu0 0.0
        %443 = vmatprep.subr.mxu0 0.0
        %444 = vmatpush2.msra.mxu0 0.0
        %445 = vmatprep.subr.mxu0 0.0
        %446 = vmatpush2.msra.mxu0 0.0
        %447 = vmatprep.subr.mxu0 0.0
        %448 = vmatpush2.msra.mxu0 0.0
        %449 = vmatprep.subr.mxu0 0.0
        %450 = vmatpush2.msra.mxu0 0.0
        %451 = vmatprep.subr.mxu0 0.0
        %452 = vmatpush2.msra.mxu0 0.0
        %453 = vmatprep.subr.mxu0 0.0
        %454 = vmatpush2.msra.mxu0 0.0
        %455 = vmatprep.subr.mxu0 0.0
        %456 = vmatpush2.msra.mxu0 0.0
        %457 = vmatprep.subr.mxu0 0.0
        %458 = vmatpush2.msra.mxu0 0.0
        %459 = vmatprep.mubr.f32.mxu0 0.0
        %460 = vmatmul.mubr.f32.gmra.mxu0 %v390
        %v461 = vpop.f32.mrf.mxu0
        %v462 = vadd.f32 %v381, %v461
        %v463 = vpop.f32.mrf.mxu0
        %464 = vmatprep.mubr.f32.mxu0 0.0
        %465 = vmatmul.mubr.f32.gmra.mxu0 %v393
        %v466 = vpop.f32.mrf.mxu0
        %v467 = vadd.f32 %v386, %v466
        %v468 = vpop.f32.mrf.mxu0
        %469 = vdwg.mxu0
        %s470 = scalar_lea.vmem %s1, 448
        %v471 = vld [vmem:[%s470] sm:$0xff]
        %v472 = vld [vmem:[%s470 + $0x8] sm:$0xff]
        %v473 = vld [vmem:[%s470 + $0x10] sm:$0xff]
        %v474 = vld [vmem:[%s470 + $0x18] sm:$0xff]
        %v475 = vld [vmem:[%s470 + $0x20] sm:$0xff]
        %v476 = vld [vmem:[%s470 + $0x28] sm:$0xff]
        %v477 = vld [vmem:[%s470 + $0x30] sm:$0xff]
        %v478 = vld [vmem:[%s470 + $0x38] sm:$0xff]
        %479 = vmatprep.subr.mxu0 0.0
        %480 = vmatpush1.msra.mxu0 0.0
        %481 = vmatprep.subr.mxu0 0.0
        %482 = vmatpush1.msra.mxu0 0.0
        %483 = vmatprep.subr.mxu0 0.0
        %484 = vmatpush1.msra.mxu0 0.0
        %485 = vmatprep.subr.mxu0 0.0
        %486 = vmatpush1.msra.mxu0 0.0
        %487 = vmatprep.subr.mxu0 0.0
        %488 = vmatpush1.msra.mxu0 0.0
        %489 = vmatprep.subr.mxu0 0.0
        %490 = vmatpush1.msra.mxu0 0.0
        %491 = vmatprep.subr.mxu0 0.0
        %492 = vmatpush1.msra.mxu0 0.0
        %493 = vmatprep.subr.mxu0 0.0
        %494 = vmatpush1.msra.mxu0 0.0
        %495 = vmatprep.subr.mxu0 0.0
        %496 = vmatpush1.msra.mxu0 %v478
        %497 = vmatprep.subr.mxu0 0.0
        %498 = vmatpush1.msra.mxu0 %v477
        %499 = vmatprep.subr.mxu0 0.0
        %500 = vmatpush1.msra.mxu0 %v476
        %501 = vmatprep.subr.mxu0 0.0
        %502 = vmatpush1.msra.mxu0 %v475
        %503 = vmatprep.subr.mxu0 0.0
        %504 = vmatpush1.msra.mxu0 %v474
        %505 = vmatprep.subr.mxu0 0.0
        %506 = vmatpush1.msra.mxu0 %v473
        %507 = vmatprep.subr.mxu0 0.0
        %508 = vmatpush1.msra.mxu0 %v472
        %509 = vmatprep.subr.mxu0 0.0
        %510 = vmatpush1.msra.mxu0 %v471
        %511 = vmatprep.subr.mxu0 0.0
        %512 = vmatpush2.msra.mxu0 0.0
        %513 = vmatprep.subr.mxu0 0.0
        %514 = vmatpush2.msra.mxu0 0.0
        %515 = vmatprep.subr.mxu0 0.0
        %516 = vmatpush2.msra.mxu0 0.0
        %517 = vmatprep.subr.mxu0 0.0
        %518 = vmatpush2.msra.mxu0 0.0
        %519 = vmatprep.subr.mxu0 0.0
        %520 = vmatpush2.msra.mxu0 0.0
        %521 = vmatprep.subr.mxu0 0.0
        %522 = vmatpush2.msra.mxu0 0.0
        %523 = vmatprep.subr.mxu0 0.0
        %524 = vmatpush2.msra.mxu0 0.0
        %525 = vmatprep.subr.mxu0 0.0
        %526 = vmatpush2.msra.mxu0 0.0
        %527 = vmatprep.subr.mxu0 0.0
        %528 = vmatpush2.msra.mxu0 0.0
        %529 = vmatprep.subr.mxu0 0.0
        %530 = vmatpush2.msra.mxu0 0.0
        %531 = vmatprep.subr.mxu0 0.0
        %532 = vmatpush2.msra.mxu0 0.0
        %533 = vmatprep.subr.mxu0 0.0
        %534 = vmatpush2.msra.mxu0 0.0
        %535 = vmatprep.subr.mxu0 0.0
        %536 = vmatpush2.msra.mxu0 0.0
        %537 = vmatprep.subr.mxu0 0.0
        %538 = vmatpush2.msra.mxu0 0.0
        %539 = vmatprep.subr.mxu0 0.0
        %540 = vmatpush2.msra.mxu0 0.0
        %541 = vmatprep.subr.mxu0 0.0
        %542 = vmatpush2.msra.mxu0 0.0
        %543 = vmatprep.mubr.f32.mxu0 0.0
        %544 = vmatmul.mubr.f32.gmra.mxu0 %v309
        %v545 = vpop.f32.mrf.mxu0
        %v546 = vadd.f32 0.0, %v545
        %v547 = vpop.f32.mrf.mxu0
        %548 = vmatprep.mubr.f32.mxu0 0.0
        %549 = vmatmul.mubr.f32.gmra.mxu0 %v312
        %v550 = vpop.f32.mrf.mxu0
        %v551 = vadd.f32 0.0, %v550
        %v552 = vpop.f32.mrf.mxu0
        %553 = vdwg.mxu0
        %554 = vmatprep.subr.mxu0 0.0
        %555 = vmatpush1.msra.mxu0 0.0
        %556 = vmatprep.subr.mxu0 0.0
        %557 = vmatpush1.msra.mxu0 0.0
        %558 = vmatprep.subr.mxu0 0.0
        %559 = vmatpush1.msra.mxu0 0.0
        %560 = vmatprep.subr.mxu0 0.0
        %561 = vmatpush1.msra.mxu0 0.0
        %562 = vmatprep.subr.mxu0 0.0
        %563 = vmatpush1.msra.mxu0 0.0
        %564 = vmatprep.subr.mxu0 0.0
        %565 = vmatpush1.msra.mxu0 0.0
        %566 = vmatprep.subr.mxu0 0.0
        %567 = vmatpush1.msra.mxu0 0.0
        %568 = vmatprep.subr.mxu0 0.0
        %569 = vmatpush1.msra.mxu0 0.0
        %570 = vmatprep.subr.mxu0 0.0
        %571 = vmatpush1.msra.mxu0 %v294
        %572 = vmatprep.subr.mxu0 0.0
        %573 = vmatpush1.msra.mxu0 %v293
        %574 = vmatprep.subr.mxu0 0.0
        %575 = vmatpush1.msra.mxu0 %v292
        %576 = vmatprep.subr.mxu0 0.0
        %577 = vmatpush1.msra.mxu0 %v291
        %578 = vmatprep.subr.mxu0 0.0
        %579 = vmatpush1.msra.mxu0 %v290
        %580 = vmatprep.subr.mxu0 0.0
        %581 = vmatpush1.msra.mxu0 %v289
        %582 = vmatprep.subr.mxu0 0.0
        %583 = vmatpush1.msra.mxu0 %v288
        %584 = vmatprep.subr.mxu0 0.0
        %585 = vmatpush1.msra.mxu0 %v287
        %586 = vmatprep.subr.mxu0 0.0
        %587 = vmatpush2.msra.mxu0 0.0
        %588 = vmatprep.subr.mxu0 0.0
        %589 = vmatpush2.msra.mxu0 0.0
        %590 = vmatprep.subr.mxu0 0.0
        %591 = vmatpush2.msra.mxu0 0.0
        %592 = vmatprep.subr.mxu0 0.0
        %593 = vmatpush2.msra.mxu0 0.0
        %594 = vmatprep.subr.mxu0 0.0
        %595 = vmatpush2.msra.mxu0 0.0
        %596 = vmatprep.subr.mxu0 0.0
        %597 = vmatpush2.msra.mxu0 0.0
        %598 = vmatprep.subr.mxu0 0.0
        %599 = vmatpush2.msra.mxu0 0.0
        %600 = vmatprep.subr.mxu0 0.0
        %601 = vmatpush2.msra.mxu0 0.0
        %602 = vmatprep.subr.mxu0 0.0
        %603 = vmatpush2.msra.mxu0 0.0
        %604 = vmatprep.subr.mxu0 0.0
        %605 = vmatpush2.msra.mxu0 0.0
        %606 = vmatprep.subr.mxu0 0.0
        %607 = vmatpush2.msra.mxu0 0.0
        %608 = vmatprep.subr.mxu0 0.0
        %609 = vmatpush2.msra.mxu0 0.0
        %610 = vmatprep.subr.mxu0 0.0
        %611 = vmatpush2.msra.mxu0 0.0
        %612 = vmatprep.subr.mxu0 0.0
        %613 = vmatpush2.msra.mxu0 0.0
        %614 = vmatprep.subr.mxu0 0.0
        %615 = vmatpush2.msra.mxu0 0.0
        %616 = vmatprep.subr.mxu0 0.0
        %617 = vmatpush2.msra.mxu0 0.0
        %618 = vmatprep.mubr.f32.mxu0 0.0
        %619 = vmatmul.mubr.f32.gmra.mxu0 %v390
        %v620 = vpop.f32.mrf.mxu0
        %v621 = vadd.f32 %v546, %v620
        %v622 = vpop.f32.mrf.mxu0
        %623 = vmatprep.mubr.f32.mxu0 0.0
        %624 = vmatmul.mubr.f32.gmra.mxu0 %v393
        %v625 = vpop.f32.mrf.mxu0
        %v626 = vadd.f32 %v551, %v625
        %v627 = vpop.f32.mrf.mxu0
        %628 = vdwg.mxu0
        %s629 = scalar_lea.vmem %s275, 32
        %v630 = vld [vmem:[%s629] sm:$0xff]
        %v631 = vld [vmem:[%s629 + $0x8] sm:$0x7f]
        %s632 = scalar_lea.vmem %s1, 128
        %v633 = vld [vmem:[%s632] sm:$0xff]
        %v634 = vld [vmem:[%s632 + $0x8] sm:$0xff]
        %v635 = vld [vmem:[%s632 + $0x10] sm:$0xff]
        %v636 = vld [vmem:[%s632 + $0x18] sm:$0xff]
        %v637 = vld [vmem:[%s632 + $0x20] sm:$0xff]
        %v638 = vld [vmem:[%s632 + $0x28] sm:$0xff]
        %v639 = vld [vmem:[%s632 + $0x30] sm:$0xff]
        %v640 = vld [vmem:[%s632 + $0x38] sm:$0xff]
        %v642 = vsel %vm307, %v630, 0
        %v645 = vsel %vm307, %v631, 0
        %647 = vmatprep.subr.mxu0 0.0
        %648 = vmatpush1.msra.mxu0 0.0
        %649 = vmatprep.subr.mxu0 0.0
        %650 = vmatpush1.msra.mxu0 0.0
        %651 = vmatprep.subr.mxu0 0.0
        %652 = vmatpush1.msra.mxu0 0.0
        %653 = vmatprep.subr.mxu0 0.0
        %654 = vmatpush1.msra.mxu0 0.0
        %655 = vmatprep.subr.mxu0 0.0
        %656 = vmatpush1.msra.mxu0 0.0
        %657 = vmatprep.subr.mxu0 0.0
        %658 = vmatpush1.msra.mxu0 0.0
        %659 = vmatprep.subr.mxu0 0.0
        %660 = vmatpush1.msra.mxu0 0.0
        %661 = vmatprep.subr.mxu0 0.0
        %662 = vmatpush1.msra.mxu0 0.0
        %663 = vmatprep.subr.mxu0 0.0
        %664 = vmatpush1.msra.mxu0 %v640
        %665 = vmatprep.subr.mxu0 0.0
        %666 = vmatpush1.msra.mxu0 %v639
        %667 = vmatprep.subr.mxu0 0.0
        %668 = vmatpush1.msra.mxu0 %v638
        %669 = vmatprep.subr.mxu0 0.0
        %670 = vmatpush1.msra.mxu0 %v637
        %671 = vmatprep.subr.mxu0 0.0
        %672 = vmatpush1.msra.mxu0 %v636
        %673 = vmatprep.subr.mxu0 0.0
        %674 = vmatpush1.msra.mxu0 %v635
        %675 = vmatprep.subr.mxu0 0.0
        %676 = vmatpush1.msra.mxu0 %v634
        %677 = vmatprep.subr.mxu0 0.0
        %678 = vmatpush1.msra.mxu0 %v633
        %679 = vmatprep.subr.mxu0 0.0
        %680 = vmatpush2.msra.mxu0 0.0
        %681 = vmatprep.subr.mxu0 0.0
        %682 = vmatpush2.msra.mxu0 0.0
        %683 = vmatprep.subr.mxu0 0.0
        %684 = vmatpush2.msra.mxu0 0.0
        %685 = vmatprep.subr.mxu0 0.0
        %686 = vmatpush2.msra.mxu0 0.0
        %687 = vmatprep.subr.mxu0 0.0
        %688 = vmatpush2.msra.mxu0 0.0
        %689 = vmatprep.subr.mxu0 0.0
        %690 = vmatpush2.msra.mxu0 0.0
        %691 = vmatprep.subr.mxu0 0.0
        %692 = vmatpush2.msra.mxu0 0.0
        %693 = vmatprep.subr.mxu0 0.0
        %694 = vmatpush2.msra.mxu0 0.0
        %695 = vmatprep.subr.mxu0 0.0
        %696 = vmatpush2.msra.mxu0 0.0
        %697 = vmatprep.subr.mxu0 0.0
        %698 = vmatpush2.msra.mxu0 0.0
        %699 = vmatprep.subr.mxu0 0.0
        %700 = vmatpush2.msra.mxu0 0.0
        %701 = vmatprep.subr.mxu0 0.0
        %702 = vmatpush2.msra.mxu0 0.0
        %703 = vmatprep.subr.mxu0 0.0
        %704 = vmatpush2.msra.mxu0 0.0
        %705 = vmatprep.subr.mxu0 0.0
        %706 = vmatpush2.msra.mxu0 0.0
        %707 = vmatprep.subr.mxu0 0.0
        %708 = vmatpush2.msra.mxu0 0.0
        %709 = vmatprep.subr.mxu0 0.0
        %710 = vmatpush2.msra.mxu0 0.0
        %711 = vmatprep.mubr.f32.mxu0 0.0
        %712 = vmatmul.mubr.f32.gmra.mxu0 %v642
        %v713 = vpop.f32.mrf.mxu0
        %v714 = vadd.f32 0.0, %v713
        %v715 = vpop.f32.mrf.mxu0
        %716 = vmatprep.mubr.f32.mxu0 0.0
        %717 = vmatmul.mubr.f32.gmra.mxu0 %v645
        %v718 = vpop.f32.mrf.mxu0
        %v719 = vadd.f32 0.0, %v718
        %v720 = vpop.f32.mrf.mxu0
        %721 = vdwg.mxu0
        %v722 = vadd.f32 %v462, %v714
        %v723 = vadd.f32 %v467, %v719
        %s724 = scalar_lea.vmem %s1, 512
        %v725 = vld [vmem:[%s724] sm:$0xff]
        %v726 = vld [vmem:[%s724 + $0x8] sm:$0xff]
        %v727 = vld [vmem:[%s724 + $0x10] sm:$0xff]
        %v728 = vld [vmem:[%s724 + $0x18] sm:$0xff]
        %v729 = vld [vmem:[%s724 + $0x20] sm:$0xff]
        %v730 = vld [vmem:[%s724 + $0x28] sm:$0xff]
        %v731 = vld [vmem:[%s724 + $0x30] sm:$0xff]
        %v732 = vld [vmem:[%s724 + $0x38] sm:$0xff]
        %733 = vmatprep.subr.mxu0 0.0
        %734 = vmatpush1.msra.mxu0 0.0
        %735 = vmatprep.subr.mxu0 0.0
        %736 = vmatpush1.msra.mxu0 0.0
        %737 = vmatprep.subr.mxu0 0.0
        %738 = vmatpush1.msra.mxu0 0.0
        %739 = vmatprep.subr.mxu0 0.0
        %740 = vmatpush1.msra.mxu0 0.0
        %741 = vmatprep.subr.mxu0 0.0
        %742 = vmatpush1.msra.mxu0 0.0
        %743 = vmatprep.subr.mxu0 0.0
        %744 = vmatpush1.msra.mxu0 0.0
        %745 = vmatprep.subr.mxu0 0.0
        %746 = vmatpush1.msra.mxu0 0.0
        %747 = vmatprep.subr.mxu0 0.0
        %748 = vmatpush1.msra.mxu0 0.0
        %749 = vmatprep.subr.mxu0 0.0
        %750 = vmatpush1.msra.mxu0 %v732
        %751 = vmatprep.subr.mxu0 0.0
        %752 = vmatpush1.msra.mxu0 %v731
        %753 = vmatprep.subr.mxu0 0.0
        %754 = vmatpush1.msra.mxu0 %v730
        %755 = vmatprep.subr.mxu0 0.0
        %756 = vmatpush1.msra.mxu0 %v729
        %757 = vmatprep.subr.mxu0 0.0
        %758 = vmatpush1.msra.mxu0 %v728
        %759 = vmatprep.subr.mxu0 0.0
        %760 = vmatpush1.msra.mxu0 %v727
        %761 = vmatprep.subr.mxu0 0.0
        %762 = vmatpush1.msra.mxu0 %v726
        %763 = vmatprep.subr.mxu0 0.0
        %764 = vmatpush1.msra.mxu0 %v725
        %765 = vmatprep.subr.mxu0 0.0
        %766 = vmatpush2.msra.mxu0 0.0
        %767 = vmatprep.subr.mxu0 0.0
        %768 = vmatpush2.msra.mxu0 0.0
        %769 = vmatprep.subr.mxu0 0.0
        %770 = vmatpush2.msra.mxu0 0.0
        %771 = vmatprep.subr.mxu0 0.0
        %772 = vmatpush2.msra.mxu0 0.0
        %773 = vmatprep.subr.mxu0 0.0
        %774 = vmatpush2.msra.mxu0 0.0
        %775 = vmatprep.subr.mxu0 0.0
        %776 = vmatpush2.msra.mxu0 0.0
        %777 = vmatprep.subr.mxu0 0.0
        %778 = vmatpush2.msra.mxu0 0.0
        %779 = vmatprep.subr.mxu0 0.0
        %780 = vmatpush2.msra.mxu0 0.0
        %781 = vmatprep.subr.mxu0 0.0
        %782 = vmatpush2.msra.mxu0 0.0
        %783 = vmatprep.subr.mxu0 0.0
        %784 = vmatpush2.msra.mxu0 0.0
        %785 = vmatprep.subr.mxu0 0.0
        %786 = vmatpush2.msra.mxu0 0.0
        %787 = vmatprep.subr.mxu0 0.0
        %788 = vmatpush2.msra.mxu0 0.0
        %789 = vmatprep.subr.mxu0 0.0
        %790 = vmatpush2.msra.mxu0 0.0
        %791 = vmatprep.subr.mxu0 0.0
        %792 = vmatpush2.msra.mxu0 0.0
        %793 = vmatprep.subr.mxu0 0.0
        %794 = vmatpush2.msra.mxu0 0.0
        %795 = vmatprep.subr.mxu0 0.0
        %796 = vmatpush2.msra.mxu0 0.0
        %797 = vmatprep.mubr.f32.mxu0 0.0
        %798 = vmatmul.mubr.f32.gmra.mxu0 %v642
        %v799 = vpop.f32.mrf.mxu0
        %v800 = vadd.f32 0.0, %v799
        %v801 = vpop.f32.mrf.mxu0
        %802 = vmatprep.mubr.f32.mxu0 0.0
        %803 = vmatmul.mubr.f32.gmra.mxu0 %v645
        %v804 = vpop.f32.mrf.mxu0
        %v805 = vadd.f32 0.0, %v804
        %v806 = vpop.f32.mrf.mxu0
        %807 = vdwg.mxu0
        %v808 = vadd.f32 %v621, %v800
        %v809 = vadd.f32 %v626, %v805
        %s810 = scalar_lea.vmem %s275, 48
        %v811 = vld [vmem:[%s810] sm:$0xff]
        %v812 = vld [vmem:[%s810 + $0x8] sm:$0x7f]
        %s813 = scalar_lea.vmem %s1, 192
        %v814 = vld [vmem:[%s813] sm:$0xff]
        %v815 = vld [vmem:[%s813 + $0x8] sm:$0xff]
        %v816 = vld [vmem:[%s813 + $0x10] sm:$0xff]
        %v817 = vld [vmem:[%s813 + $0x18] sm:$0xff]
        %v818 = vld [vmem:[%s813 + $0x20] sm:$0xff]
        %v819 = vld [vmem:[%s813 + $0x28] sm:$0xff]
        %v820 = vld [vmem:[%s813 + $0x30] sm:$0xff]
        %v821 = vld [vmem:[%s813 + $0x38] sm:$0xff]
        %v823 = vsel %vm307, %v811, 0
        %v826 = vsel %vm307, %v812, 0
        %828 = vmatprep.subr.mxu0 0.0
        %829 = vmatpush1.msra.mxu0 0.0
        %830 = vmatprep.subr.mxu0 0.0
        %831 = vmatpush1.msra.mxu0 0.0
        %832 = vmatprep.subr.mxu0 0.0
        %833 = vmatpush1.msra.mxu0 0.0
        %834 = vmatprep.subr.mxu0 0.0
        %835 = vmatpush1.msra.mxu0 0.0
        %836 = vmatprep.subr.mxu0 0.0
        %837 = vmatpush1.msra.mxu0 0.0
        %838 = vmatprep.subr.mxu0 0.0
        %839 = vmatpush1.msra.mxu0 0.0
        %840 = vmatprep.subr.mxu0 0.0
        %841 = vmatpush1.msra.mxu0 0.0
        %842 = vmatprep.subr.mxu0 0.0
        %843 = vmatpush1.msra.mxu0 0.0
        %844 = vmatprep.subr.mxu0 0.0
        %845 = vmatpush1.msra.mxu0 %v821
        %846 = vmatprep.subr.mxu0 0.0
        %847 = vmatpush1.msra.mxu0 %v820
        %848 = vmatprep.subr.mxu0 0.0
        %849 = vmatpush1.msra.mxu0 %v819
        %850 = vmatprep.subr.mxu0 0.0
        %851 = vmatpush1.msra.mxu0 %v818
        %852 = vmatprep.subr.mxu0 0.0
        %853 = vmatpush1.msra.mxu0 %v817
        %854 = vmatprep.subr.mxu0 0.0
        %855 = vmatpush1.msra.mxu0 %v816
        %856 = vmatprep.subr.mxu0 0.0
        %857 = vmatpush1.msra.mxu0 %v815
        %858 = vmatprep.subr.mxu0 0.0
        %859 = vmatpush1.msra.mxu0 %v814
        %860 = vmatprep.subr.mxu0 0.0
        %861 = vmatpush2.msra.mxu0 0.0
        %862 = vmatprep.subr.mxu0 0.0
        %863 = vmatpush2.msra.mxu0 0.0
        %864 = vmatprep.subr.mxu0 0.0
        %865 = vmatpush2.msra.mxu0 0.0
        %866 = vmatprep.subr.mxu0 0.0
        %867 = vmatpush2.msra.mxu0 0.0
        %868 = vmatprep.subr.mxu0 0.0
        %869 = vmatpush2.msra.mxu0 0.0
        %870 = vmatprep.subr.mxu0 0.0
        %871 = vmatpush2.msra.mxu0 0.0
        %872 = vmatprep.subr.mxu0 0.0
        %873 = vmatpush2.msra.mxu0 0.0
        %874 = vmatprep.subr.mxu0 0.0
        %875 = vmatpush2.msra.mxu0 0.0
        %876 = vmatprep.subr.mxu0 0.0
        %877 = vmatpush2.msra.mxu0 0.0
        %878 = vmatprep.subr.mxu0 0.0
        %879 = vmatpush2.msra.mxu0 0.0
        %880 = vmatprep.subr.mxu0 0.0
        %881 = vmatpush2.msra.mxu0 0.0
        %882 = vmatprep.subr.mxu0 0.0
        %883 = vmatpush2.msra.mxu0 0.0
        %884 = vmatprep.subr.mxu0 0.0
        %885 = vmatpush2.msra.mxu0 0.0
        %886 = vmatprep.subr.mxu0 0.0
        %887 = vmatpush2.msra.mxu0 0.0
        %888 = vmatprep.subr.mxu0 0.0
        %889 = vmatpush2.msra.mxu0 0.0
        %890 = vmatprep.subr.mxu0 0.0
        %891 = vmatpush2.msra.mxu0 0.0
        %892 = vmatprep.mubr.f32.mxu0 0.0
        %893 = vmatmul.mubr.f32.gmra.mxu0 %v823
        %v894 = vpop.f32.mrf.mxu0
        %v895 = vadd.f32 0.0, %v894
        %v896 = vpop.f32.mrf.mxu0
        %897 = vmatprep.mubr.f32.mxu0 0.0
        %898 = vmatmul.mubr.f32.gmra.mxu0 %v826
        %v899 = vpop.f32.mrf.mxu0
        %v900 = vadd.f32 0.0, %v899
        %v901 = vpop.f32.mrf.mxu0
        %902 = vdwg.mxu0
        %v903 = vadd.f32 %v722, %v895
        %v904 = vadd.f32 %v723, %v900
        %s905 = scalar_lea.vmem %s1, 576
        %v906 = vld [vmem:[%s905] sm:$0xff]
        %v907 = vld [vmem:[%s905 + $0x8] sm:$0xff]
        %v908 = vld [vmem:[%s905 + $0x10] sm:$0xff]
        %v909 = vld [vmem:[%s905 + $0x18] sm:$0xff]
        %v910 = vld [vmem:[%s905 + $0x20] sm:$0xff]
        %v911 = vld [vmem:[%s905 + $0x28] sm:$0xff]
        %v912 = vld [vmem:[%s905 + $0x30] sm:$0xff]
        %v913 = vld [vmem:[%s905 + $0x38] sm:$0xff]
        %914 = vmatprep.subr.mxu0 0.0
        %915 = vmatpush1.msra.mxu0 0.0
        %916 = vmatprep.subr.mxu0 0.0
        %917 = vmatpush1.msra.mxu0 0.0
        %918 = vmatprep.subr.mxu0 0.0
        %919 = vmatpush1.msra.mxu0 0.0
        %920 = vmatprep.subr.mxu0 0.0
        %921 = vmatpush1.msra.mxu0 0.0
        %922 = vmatprep.subr.mxu0 0.0
        %923 = vmatpush1.msra.mxu0 0.0
        %924 = vmatprep.subr.mxu0 0.0
        %925 = vmatpush1.msra.mxu0 0.0
        %926 = vmatprep.subr.mxu0 0.0
        %927 = vmatpush1.msra.mxu0 0.0
        %928 = vmatprep.subr.mxu0 0.0
        %929 = vmatpush1.msra.mxu0 0.0
        %930 = vmatprep.subr.mxu0 0.0
        %931 = vmatpush1.msra.mxu0 %v913
        %932 = vmatprep.subr.mxu0 0.0
        %933 = vmatpush1.msra.mxu0 %v912
        %934 = vmatprep.subr.mxu0 0.0
        %935 = vmatpush1.msra.mxu0 %v911
        %936 = vmatprep.subr.mxu0 0.0
        %937 = vmatpush1.msra.mxu0 %v910
        %938 = vmatprep.subr.mxu0 0.0
        %939 = vmatpush1.msra.mxu0 %v909
        %940 = vmatprep.subr.mxu0 0.0
        %941 = vmatpush1.msra.mxu0 %v908
        %942 = vmatprep.subr.mxu0 0.0
        %943 = vmatpush1.msra.mxu0 %v907
        %944 = vmatprep.subr.mxu0 0.0
        %945 = vmatpush1.msra.mxu0 %v906
        %946 = vmatprep.subr.mxu0 0.0
        %947 = vmatpush2.msra.mxu0 0.0
        %948 = vmatprep.subr.mxu0 0.0
        %949 = vmatpush2.msra.mxu0 0.0
        %950 = vmatprep.subr.mxu0 0.0
        %951 = vmatpush2.msra.mxu0 0.0
        %952 = vmatprep.subr.mxu0 0.0
        %953 = vmatpush2.msra.mxu0 0.0
        %954 = vmatprep.subr.mxu0 0.0
        %955 = vmatpush2.msra.mxu0 0.0
        %956 = vmatprep.subr.mxu0 0.0
        %957 = vmatpush2.msra.mxu0 0.0
        %958 = vmatprep.subr.mxu0 0.0
        %959 = vmatpush2.msra.mxu0 0.0
        %960 = vmatprep.subr.mxu0 0.0
        %961 = vmatpush2.msra.mxu0 0.0
        %962 = vmatprep.subr.mxu0 0.0
        %963 = vmatpush2.msra.mxu0 0.0
        %964 = vmatprep.subr.mxu0 0.0
        %965 = vmatpush2.msra.mxu0 0.0
        %966 = vmatprep.subr.mxu0 0.0
        %967 = vmatpush2.msra.mxu0 0.0
        %968 = vmatprep.subr.mxu0 0.0
        %969 = vmatpush2.msra.mxu0 0.0
        %970 = vmatprep.subr.mxu0 0.0
        %971 = vmatpush2.msra.mxu0 0.0
        %972 = vmatprep.subr.mxu0 0.0
        %973 = vmatpush2.msra.mxu0 0.0
        %974 = vmatprep.subr.mxu0 0.0
        %975 = vmatpush2.msra.mxu0 0.0
        %976 = vmatprep.subr.mxu0 0.0
        %977 = vmatpush2.msra.mxu0 0.0
        %978 = vmatprep.mubr.f32.mxu0 0.0
        %979 = vmatmul.mubr.f32.gmra.mxu0 %v823
        %v980 = vpop.f32.mrf.mxu0
        %v981 = vadd.f32 0.0, %v980
        %v982 = vpop.f32.mrf.mxu0
        %983 = vmatprep.mubr.f32.mxu0 0.0
        %984 = vmatmul.mubr.f32.gmra.mxu0 %v826
        %v985 = vpop.f32.mrf.mxu0
        %v986 = vadd.f32 0.0, %v985
        %v987 = vpop.f32.mrf.mxu0
        %988 = vdwg.mxu0
        %v989 = vadd.f32 %v808, %v981
        %v990 = vadd.f32 %v809, %v986
        %v991 = vld [vmem:[%s275 + $0x1] sm:$0xff]
        %v992 = vld [vmem:[%s275 + $0x9] sm:$0x7f]
        %s993 = scalar_lea.vmem %s1, 256
        %v994 = vld [vmem:[%s993] sm:$0xff]
        %v995 = vld [vmem:[%s993 + $0x8] sm:$0xff]
        %v996 = vld [vmem:[%s993 + $0x10] sm:$0xff]
        %v997 = vld [vmem:[%s993 + $0x18] sm:$0xff]
        %v998 = vld [vmem:[%s993 + $0x20] sm:$0xff]
        %v999 = vld [vmem:[%s993 + $0x28] sm:$0xff]
        %v1000 = vld [vmem:[%s993 + $0x30] sm:$0xff]
        %v1001 = vld [vmem:[%s993 + $0x38] sm:$0xff]
        %v1003 = vsel %vm307, %v991, 0
        %v1006 = vsel %vm307, %v992, 0
        %1008 = vmatprep.subr.mxu0 0.0
        %1009 = vmatpush1.msra.mxu0 0.0
        %1010 = vmatprep.subr.mxu0 0.0
        %1011 = vmatpush1.msra.mxu0 0.0
        %1012 = vmatprep.subr.mxu0 0.0
        %1013 = vmatpush1.msra.mxu0 0.0
        %1014 = vmatprep.subr.mxu0 0.0
        %1015 = vmatpush1.msra.mxu0 0.0
        %1016 = vmatprep.subr.mxu0 0.0
        %1017 = vmatpush1.msra.mxu0 0.0
        %1018 = vmatprep.subr.mxu0 0.0
        %1019 = vmatpush1.msra.mxu0 0.0
        %1020 = vmatprep.subr.mxu0 0.0
        %1021 = vmatpush1.msra.mxu0 0.0
        %1022 = vmatprep.subr.mxu0 0.0
        %1023 = vmatpush1.msra.mxu0 0.0
        %1024 = vmatprep.subr.mxu0 0.0
        %1025 = vmatpush1.msra.mxu0 %v1001
        %1026 = vmatprep.subr.mxu0 0.0
        %1027 = vmatpush1.msra.mxu0 %v1000
        %1028 = vmatprep.subr.mxu0 0.0
        %1029 = vmatpush1.msra.mxu0 %v999
        %1030 = vmatprep.subr.mxu0 0.0
        %1031 = vmatpush1.msra.mxu0 %v998
        %1032 = vmatprep.subr.mxu0 0.0
        %1033 = vmatpush1.msra.mxu0 %v997
        %1034 = vmatprep.subr.mxu0 0.0
        %1035 = vmatpush1.msra.mxu0 %v996
        %1036 = vmatprep.subr.mxu0 0.0
        %1037 = vmatpush1.msra.mxu0 %v995
        %1038 = vmatprep.subr.mxu0 0.0
        %1039 = vmatpush1.msra.mxu0 %v994
        %1040 = vmatprep.subr.mxu0 0.0
        %1041 = vmatpush2.msra.mxu0 0.0
        %1042 = vmatprep.subr.mxu0 0.0
        %1043 = vmatpush2.msra.mxu0 0.0
        %1044 = vmatprep.subr.mxu0 0.0
        %1045 = vmatpush2.msra.mxu0 0.0
        %1046 = vmatprep.subr.mxu0 0.0
        %1047 = vmatpush2.msra.mxu0 0.0
        %1048 = vmatprep.subr.mxu0 0.0
        %1049 = vmatpush2.msra.mxu0 0.0
        %1050 = vmatprep.subr.mxu0 0.0
        %1051 = vmatpush2.msra.mxu0 0.0
        %1052 = vmatprep.subr.mxu0 0.0
        %1053 = vmatpush2.msra.mxu0 0.0
        %1054 = vmatprep.subr.mxu0 0.0
        %1055 = vmatpush2.msra.mxu0 0.0
        %1056 = vmatprep.subr.mxu0 0.0
        %1057 = vmatpush2.msra.mxu0 0.0
        %1058 = vmatprep.subr.mxu0 0.0
        %1059 = vmatpush2.msra.mxu0 0.0
        %1060 = vmatprep.subr.mxu0 0.0
        %1061 = vmatpush2.msra.mxu0 0.0
        %1062 = vmatprep.subr.mxu0 0.0
        %1063 = vmatpush2.msra.mxu0 0.0
        %1064 = vmatprep.subr.mxu0 0.0
        %1065 = vmatpush2.msra.mxu0 0.0
        %1066 = vmatprep.subr.mxu0 0.0
        %1067 = vmatpush2.msra.mxu0 0.0
        %1068 = vmatprep.subr.mxu0 0.0
        %1069 = vmatpush2.msra.mxu0 0.0
        %1070 = vmatprep.subr.mxu0 0.0
        %1071 = vmatpush2.msra.mxu0 0.0
        %1072 = vmatprep.mubr.f32.mxu0 0.0
        %1073 = vmatmul.mubr.f32.gmra.mxu0 %v1003
        %v1074 = vpop.f32.mrf.mxu0
        %v1075 = vadd.f32 0.0, %v1074
        %v1076 = vpop.f32.mrf.mxu0
        %1077 = vmatprep.mubr.f32.mxu0 0.0
        %1078 = vmatmul.mubr.f32.gmra.mxu0 %v1006
        %v1079 = vpop.f32.mrf.mxu0
        %v1080 = vadd.f32 0.0, %v1079
        %v1081 = vpop.f32.mrf.mxu0
        %1082 = vdwg.mxu0
        %v1083 = vadd.f32 %v903, %v1075
        %v1084 = vadd.f32 %v904, %v1080
        %s1085 = scalar_lea.vmem %s1, 640
        %v1086 = vld [vmem:[%s1085] sm:$0xff]
        %v1087 = vld [vmem:[%s1085 + $0x8] sm:$0xff]
        %v1088 = vld [vmem:[%s1085 + $0x10] sm:$0xff]
        %v1089 = vld [vmem:[%s1085 + $0x18] sm:$0xff]
        %v1090 = vld [vmem:[%s1085 + $0x20] sm:$0xff]
        %v1091 = vld [vmem:[%s1085 + $0x28] sm:$0xff]
        %v1092 = vld [vmem:[%s1085 + $0x30] sm:$0xff]
        %v1093 = vld [vmem:[%s1085 + $0x38] sm:$0xff]
        %1094 = vmatprep.subr.mxu0 0.0
        %1095 = vmatpush1.msra.mxu0 0.0
        %1096 = vmatprep.subr.mxu0 0.0
        %1097 = vmatpush1.msra.mxu0 0.0
        %1098 = vmatprep.subr.mxu0 0.0
        %1099 = vmatpush1.msra.mxu0 0.0
        %1100 = vmatprep.subr.mxu0 0.0
        %1101 = vmatpush1.msra.mxu0 0.0
        %1102 = vmatprep.subr.mxu0 0.0
        %1103 = vmatpush1.msra.mxu0 0.0
        %1104 = vmatprep.subr.mxu0 0.0
        %1105 = vmatpush1.msra.mxu0 0.0
        %1106 = vmatprep.subr.mxu0 0.0
        %1107 = vmatpush1.msra.mxu0 0.0
        %1108 = vmatprep.subr.mxu0 0.0
        %1109 = vmatpush1.msra.mxu0 0.0
        %1110 = vmatprep.subr.mxu0 0.0
        %1111 = vmatpush1.msra.mxu0 %v1093
        %1112 = vmatprep.subr.mxu0 0.0
        %1113 = vmatpush1.msra.mxu0 %v1092
        %1114 = vmatprep.subr.mxu0 0.0
        %1115 = vmatpush1.msra.mxu0 %v1091
        %1116 = vmatprep.subr.mxu0 0.0
        %1117 = vmatpush1.msra.mxu0 %v1090
        %1118 = vmatprep.subr.mxu0 0.0
        %1119 = vmatpush1.msra.mxu0 %v1089
        %1120 = vmatprep.subr.mxu0 0.0
        %1121 = vmatpush1.msra.mxu0 %v1088
        %1122 = vmatprep.subr.mxu0 0.0
        %1123 = vmatpush1.msra.mxu0 %v1087
        %1124 = vmatprep.subr.mxu0 0.0
        %1125 = vmatpush1.msra.mxu0 %v1086
        %1126 = vmatprep.subr.mxu0 0.0
        %1127 = vmatpush2.msra.mxu0 0.0
        %1128 = vmatprep.subr.mxu0 0.0
        %1129 = vmatpush2.msra.mxu0 0.0
        %1130 = vmatprep.subr.mxu0 0.0
        %1131 = vmatpush2.msra.mxu0 0.0
        %1132 = vmatprep.subr.mxu0 0.0
        %1133 = vmatpush2.msra.mxu0 0.0
        %1134 = vmatprep.subr.mxu0 0.0
        %1135 = vmatpush2.msra.mxu0 0.0
        %1136 = vmatprep.subr.mxu0 0.0
        %1137 = vmatpush2.msra.mxu0 0.0
        %1138 = vmatprep.subr.mxu0 0.0
        %1139 = vmatpush2.msra.mxu0 0.0
        %1140 = vmatprep.subr.mxu0 0.0
        %1141 = vmatpush2.msra.mxu0 0.0
        %1142 = vmatprep.subr.mxu0 0.0
        %1143 = vmatpush2.msra.mxu0 0.0
        %1144 = vmatprep.subr.mxu0 0.0
        %1145 = vmatpush2.msra.mxu0 0.0
        %1146 = vmatprep.subr.mxu0 0.0
        %1147 = vmatpush2.msra.mxu0 0.0
        %1148 = vmatprep.subr.mxu0 0.0
        %1149 = vmatpush2.msra.mxu0 0.0
        %1150 = vmatprep.subr.mxu0 0.0
        %1151 = vmatpush2.msra.mxu0 0.0
        %1152 = vmatprep.subr.mxu0 0.0
        %1153 = vmatpush2.msra.mxu0 0.0
        %1154 = vmatprep.subr.mxu0 0.0
        %1155 = vmatpush2.msra.mxu0 0.0
        %1156 = vmatprep.subr.mxu0 0.0
        %1157 = vmatpush2.msra.mxu0 0.0
        %1158 = vmatprep.mubr.f32.mxu0 0.0
        %1159 = vmatmul.mubr.f32.gmra.mxu0 %v1003
        %v1160 = vpop.f32.mrf.mxu0
        %v1161 = vadd.f32 0.0, %v1160
        %v1162 = vpop.f32.mrf.mxu0
        %1163 = vmatprep.mubr.f32.mxu0 0.0
        %1164 = vmatmul.mubr.f32.gmra.mxu0 %v1006
        %v1165 = vpop.f32.mrf.mxu0
        %v1166 = vadd.f32 0.0, %v1165
        %v1167 = vpop.f32.mrf.mxu0
        %1168 = vdwg.mxu0
        %v1169 = vadd.f32 %v989, %v1161
        %v1170 = vadd.f32 %v990, %v1166
        %v1171 = vld [vmem:[%s295 + $0x1] sm:$0xff]
        %v1172 = vld [vmem:[%s295 + $0x9] sm:$0x7f]
        %s1173 = scalar_lea.vmem %s1, 320
        %v1174 = vld [vmem:[%s1173] sm:$0xff]
        %v1175 = vld [vmem:[%s1173 + $0x8] sm:$0xff]
        %v1176 = vld [vmem:[%s1173 + $0x10] sm:$0xff]
        %v1177 = vld [vmem:[%s1173 + $0x18] sm:$0xff]
        %v1178 = vld [vmem:[%s1173 + $0x20] sm:$0xff]
        %v1179 = vld [vmem:[%s1173 + $0x28] sm:$0xff]
        %v1180 = vld [vmem:[%s1173 + $0x30] sm:$0xff]
        %v1181 = vld [vmem:[%s1173 + $0x38] sm:$0xff]
        %v1183 = vsel %vm307, %v1171, 0
        %v1186 = vsel %vm307, %v1172, 0
        %1188 = vmatprep.subr.mxu0 0.0
        %1189 = vmatpush1.msra.mxu0 0.0
        %1190 = vmatprep.subr.mxu0 0.0
        %1191 = vmatpush1.msra.mxu0 0.0
        %1192 = vmatprep.subr.mxu0 0.0
        %1193 = vmatpush1.msra.mxu0 0.0
        %1194 = vmatprep.subr.mxu0 0.0
        %1195 = vmatpush1.msra.mxu0 0.0
        %1196 = vmatprep.subr.mxu0 0.0
        %1197 = vmatpush1.msra.mxu0 0.0
        %1198 = vmatprep.subr.mxu0 0.0
        %1199 = vmatpush1.msra.mxu0 0.0
        %1200 = vmatprep.subr.mxu0 0.0
        %1201 = vmatpush1.msra.mxu0 0.0
        %1202 = vmatprep.subr.mxu0 0.0
        %1203 = vmatpush1.msra.mxu0 0.0
        %1204 = vmatprep.subr.mxu0 0.0
        %1205 = vmatpush1.msra.mxu0 %v1181
        %1206 = vmatprep.subr.mxu0 0.0
        %1207 = vmatpush1.msra.mxu0 %v1180
        %1208 = vmatprep.subr.mxu0 0.0
        %1209 = vmatpush1.msra.mxu0 %v1179
        %1210 = vmatprep.subr.mxu0 0.0
        %1211 = vmatpush1.msra.mxu0 %v1178
        %1212 = vmatprep.subr.mxu0 0.0
        %1213 = vmatpush1.msra.mxu0 %v1177
        %1214 = vmatprep.subr.mxu0 0.0
        %1215 = vmatpush1.msra.mxu0 %v1176
        %1216 = vmatprep.subr.mxu0 0.0
        %1217 = vmatpush1.msra.mxu0 %v1175
        %1218 = vmatprep.subr.mxu0 0.0
        %1219 = vmatpush1.msra.mxu0 %v1174
        %1220 = vmatprep.subr.mxu0 0.0
        %1221 = vmatpush2.msra.mxu0 0.0
        %1222 = vmatprep.subr.mxu0 0.0
        %1223 = vmatpush2.msra.mxu0 0.0
        %1224 = vmatprep.subr.mxu0 0.0
        %1225 = vmatpush2.msra.mxu0 0.0
        %1226 = vmatprep.subr.mxu0 0.0
        %1227 = vmatpush2.msra.mxu0 0.0
        %1228 = vmatprep.subr.mxu0 0.0
        %1229 = vmatpush2.msra.mxu0 0.0
        %1230 = vmatprep.subr.mxu0 0.0
        %1231 = vmatpush2.msra.mxu0 0.0
        %1232 = vmatprep.subr.mxu0 0.0
        %1233 = vmatpush2.msra.mxu0 0.0
        %1234 = vmatprep.subr.mxu0 0.0
        %1235 = vmatpush2.msra.mxu0 0.0
        %1236 = vmatprep.subr.mxu0 0.0
        %1237 = vmatpush2.msra.mxu0 0.0
        %1238 = vmatprep.subr.mxu0 0.0
        %1239 = vmatpush2.msra.mxu0 0.0
        %1240 = vmatprep.subr.mxu0 0.0
        %1241 = vmatpush2.msra.mxu0 0.0
        %1242 = vmatprep.subr.mxu0 0.0
        %1243 = vmatpush2.msra.mxu0 0.0
        %1244 = vmatprep.subr.mxu0 0.0
        %1245 = vmatpush2.msra.mxu0 0.0
        %1246 = vmatprep.subr.mxu0 0.0
        %1247 = vmatpush2.msra.mxu0 0.0
        %1248 = vmatprep.subr.mxu0 0.0
        %1249 = vmatpush2.msra.mxu0 0.0
        %1250 = vmatprep.subr.mxu0 0.0
        %1251 = vmatpush2.msra.mxu0 0.0
        %1252 = vmatprep.mubr.f32.mxu0 0.0
        %1253 = vmatmul.mubr.f32.gmra.mxu0 %v1183
        %v1254 = vpop.f32.mrf.mxu0
        %v1255 = vadd.f32 0.0, %v1254
        %v1256 = vpop.f32.mrf.mxu0
        %1257 = vmatprep.mubr.f32.mxu0 0.0
        %1258 = vmatmul.mubr.f32.gmra.mxu0 %v1186
        %v1259 = vpop.f32.mrf.mxu0
        %v1260 = vadd.f32 0.0, %v1259
        %v1261 = vpop.f32.mrf.mxu0
        %1262 = vdwg.mxu0
        %v1263 = vadd.f32 %v1083, %v1255
        %v1264 = vadd.f32 %v1084, %v1260
        %s1265 = scalar_lea.vmem %s1, 704
        %v1266 = vld [vmem:[%s1265] sm:$0xff]
        %v1267 = vld [vmem:[%s1265 + $0x8] sm:$0xff]
        %v1268 = vld [vmem:[%s1265 + $0x10] sm:$0xff]
        %v1269 = vld [vmem:[%s1265 + $0x18] sm:$0xff]
        %v1270 = vld [vmem:[%s1265 + $0x20] sm:$0xff]
        %v1271 = vld [vmem:[%s1265 + $0x28] sm:$0xff]
        %v1272 = vld [vmem:[%s1265 + $0x30] sm:$0xff]
        %v1273 = vld [vmem:[%s1265 + $0x38] sm:$0xff]
        %1274 = vmatprep.subr.mxu0 0.0
        %1275 = vmatpush1.msra.mxu0 0.0
        %1276 = vmatprep.subr.mxu0 0.0
        %1277 = vmatpush1.msra.mxu0 0.0
        %1278 = vmatprep.subr.mxu0 0.0
        %1279 = vmatpush1.msra.mxu0 0.0
        %1280 = vmatprep.subr.mxu0 0.0
        %1281 = vmatpush1.msra.mxu0 0.0
        %1282 = vmatprep.subr.mxu0 0.0
        %1283 = vmatpush1.msra.mxu0 0.0
        %1284 = vmatprep.subr.mxu0 0.0
        %1285 = vmatpush1.msra.mxu0 0.0
        %1286 = vmatprep.subr.mxu0 0.0
        %1287 = vmatpush1.msra.mxu0 0.0
        %1288 = vmatprep.subr.mxu0 0.0
        %1289 = vmatpush1.msra.mxu0 0.0
        %1290 = vmatprep.subr.mxu0 0.0
        %1291 = vmatpush1.msra.mxu0 %v1273
        %1292 = vmatprep.subr.mxu0 0.0
        %1293 = vmatpush1.msra.mxu0 %v1272
        %1294 = vmatprep.subr.mxu0 0.0
        %1295 = vmatpush1.msra.mxu0 %v1271
        %1296 = vmatprep.subr.mxu0 0.0
        %1297 = vmatpush1.msra.mxu0 %v1270
        %1298 = vmatprep.subr.mxu0 0.0
        %1299 = vmatpush1.msra.mxu0 %v1269
        %1300 = vmatprep.subr.mxu0 0.0
        %1301 = vmatpush1.msra.mxu0 %v1268
        %1302 = vmatprep.subr.mxu0 0.0
        %1303 = vmatpush1.msra.mxu0 %v1267
        %1304 = vmatprep.subr.mxu0 0.0
        %1305 = vmatpush1.msra.mxu0 %v1266
        %1306 = vmatprep.subr.mxu0 0.0
        %1307 = vmatpush2.msra.mxu0 0.0
        %1308 = vmatprep.subr.mxu0 0.0
        %1309 = vmatpush2.msra.mxu0 0.0
        %1310 = vmatprep.subr.mxu0 0.0
        %1311 = vmatpush2.msra.mxu0 0.0
        %1312 = vmatprep.subr.mxu0 0.0
        %1313 = vmatpush2.msra.mxu0 0.0
        %1314 = vmatprep.subr.mxu0 0.0
        %1315 = vmatpush2.msra.mxu0 0.0
        %1316 = vmatprep.subr.mxu0 0.0
        %1317 = vmatpush2.msra.mxu0 0.0
        %1318 = vmatprep.subr.mxu0 0.0
        %1319 = vmatpush2.msra.mxu0 0.0
        %1320 = vmatprep.subr.mxu0 0.0
        %1321 = vmatpush2.msra.mxu0 0.0
        %1322 = vmatprep.subr.mxu0 0.0
        %1323 = vmatpush2.msra.mxu0 0.0
        %1324 = vmatprep.subr.mxu0 0.0
        %1325 = vmatpush2.msra.mxu0 0.0
        %1326 = vmatprep.subr.mxu0 0.0
        %1327 = vmatpush2.msra.mxu0 0.0
        %1328 = vmatprep.subr.mxu0 0.0
        %1329 = vmatpush2.msra.mxu0 0.0
        %1330 = vmatprep.subr.mxu0 0.0
        %1331 = vmatpush2.msra.mxu0 0.0
        %1332 = vmatprep.subr.mxu0 0.0
        %1333 = vmatpush2.msra.mxu0 0.0
        %1334 = vmatprep.subr.mxu0 0.0
        %1335 = vmatpush2.msra.mxu0 0.0
        %1336 = vmatprep.subr.mxu0 0.0
        %1337 = vmatpush2.msra.mxu0 0.0
        %1338 = vmatprep.mubr.f32.mxu0 0.0
        %1339 = vmatmul.mubr.f32.gmra.mxu0 %v1183
        %v1340 = vpop.f32.mrf.mxu0
        %v1341 = vadd.f32 0.0, %v1340
        %v1342 = vpop.f32.mrf.mxu0
        %1343 = vmatprep.mubr.f32.mxu0 0.0
        %1344 = vmatmul.mubr.f32.gmra.mxu0 %v1186
        %v1345 = vpop.f32.mrf.mxu0
        %v1346 = vadd.f32 0.0, %v1345
        %v1347 = vpop.f32.mrf.mxu0
        %1348 = vdwg.mxu0
        %v1349 = vadd.f32 %v1169, %v1341
        %v1350 = vadd.f32 %v1170, %v1346
        %1351 = vmatprep.subr.mxu0 0.0
        %1352 = vmatpush1.msra.mxu0 0.0
        %1353 = vmatprep.subr.mxu0 0.0
        %1354 = vmatpush1.msra.mxu0 0.0
        %1355 = vmatprep.subr.mxu0 0.0
        %1356 = vmatpush1.msra.mxu0 0.0
        %1357 = vmatprep.subr.mxu0 0.0
        %1358 = vmatpush1.msra.mxu0 0.0
        %1359 = vmatprep.subr.mxu0 0.0
        %1360 = vmatpush1.msra.mxu0 0.0
        %1361 = vmatprep.subr.mxu0 0.0
        %1362 = vmatpush1.msra.mxu0 0.0
        %1363 = vmatprep.subr.mxu0 0.0
        %1364 = vmatpush1.msra.mxu0 0.0
        %1365 = vmatprep.subr.mxu0 0.0
        %1366 = vmatpush1.msra.mxu0 0.0
        %1367 = vmatprep.subr.mxu0 0.0
        %1368 = vmatpush1.msra.mxu0 %v306
        %1369 = vmatprep.subr.mxu0 0.0
        %1370 = vmatpush1.msra.mxu0 %v305
        %1371 = vmatprep.subr.mxu0 0.0
        %1372 = vmatpush1.msra.mxu0 %v304
        %1373 = vmatprep.subr.mxu0 0.0
        %1374 = vmatpush1.msra.mxu0 %v303
        %1375 = vmatprep.subr.mxu0 0.0
        %1376 = vmatpush1.msra.mxu0 %v302
        %1377 = vmatprep.subr.mxu0 0.0
        %1378 = vmatpush1.msra.mxu0 %v301
        %1379 = vmatprep.subr.mxu0 0.0
        %1380 = vmatpush1.msra.mxu0 %v300
        %1381 = vmatprep.subr.mxu0 0.0
        %1382 = vmatpush1.msra.mxu0 %v299
        %1383 = vmatprep.subr.mxu0 0.0
        %1384 = vmatpush2.msra.mxu0 0.0
        %1385 = vmatprep.subr.mxu0 0.0
        %1386 = vmatpush2.msra.mxu0 0.0
        %1387 = vmatprep.subr.mxu0 0.0
        %1388 = vmatpush2.msra.mxu0 0.0
        %1389 = vmatprep.subr.mxu0 0.0
        %1390 = vmatpush2.msra.mxu0 0.0
        %1391 = vmatprep.subr.mxu0 0.0
        %1392 = vmatpush2.msra.mxu0 0.0
        %1393 = vmatprep.subr.mxu0 0.0
        %1394 = vmatpush2.msra.mxu0 0.0
        %1395 = vmatprep.subr.mxu0 0.0
        %1396 = vmatpush2.msra.mxu0 0.0
        %1397 = vmatprep.subr.mxu0 0.0
        %1398 = vmatpush2.msra.mxu0 0.0
        %1399 = vmatprep.subr.mxu0 0.0
        %1400 = vmatpush2.msra.mxu0 0.0
        %1401 = vmatprep.subr.mxu0 0.0
        %1402 = vmatpush2.msra.mxu0 0.0
        %1403 = vmatprep.subr.mxu0 0.0
        %1404 = vmatpush2.msra.mxu0 0.0
        %1405 = vmatprep.subr.mxu0 0.0
        %1406 = vmatpush2.msra.mxu0 0.0
        %1407 = vmatprep.subr.mxu0 0.0
        %1408 = vmatpush2.msra.mxu0 0.0
        %1409 = vmatprep.subr.mxu0 0.0
        %1410 = vmatpush2.msra.mxu0 0.0
        %1411 = vmatprep.subr.mxu0 0.0
        %1412 = vmatpush2.msra.mxu0 0.0
        %1413 = vmatprep.subr.mxu0 0.0
        %1414 = vmatpush2.msra.mxu0 0.0
        %1415 = vmatprep.mubr.f32.mxu0 0.0
        %1416 = vmatmul.mubr.f32.gmra.mxu0 %v823
        %v1417 = vpop.f32.mrf.mxu0
        %v1418 = vadd.f32 0.0, %v1417
        %v1419 = vpop.f32.mrf.mxu0
        %1420 = vmatprep.mubr.f32.mxu0 0.0
        %1421 = vmatmul.mubr.f32.gmra.mxu0 %v826
        %v1422 = vpop.f32.mrf.mxu0
        %v1423 = vadd.f32 0.0, %v1422
        %v1424 = vpop.f32.mrf.mxu0
        %1425 = vdwg.mxu0
        %1426 = vmatprep.subr.mxu0 0.0
        %1427 = vmatpush1.msra.mxu0 0.0
        %1428 = vmatprep.subr.mxu0 0.0
        %1429 = vmatpush1.msra.mxu0 0.0
        %1430 = vmatprep.subr.mxu0 0.0
        %1431 = vmatpush1.msra.mxu0 0.0
        %1432 = vmatprep.subr.mxu0 0.0
        %1433 = vmatpush1.msra.mxu0 0.0
        %1434 = vmatprep.subr.mxu0 0.0
        %1435 = vmatpush1.msra.mxu0 0.0
        %1436 = vmatprep.subr.mxu0 0.0
        %1437 = vmatpush1.msra.mxu0 0.0
        %1438 = vmatprep.subr.mxu0 0.0
        %1439 = vmatpush1.msra.mxu0 0.0
        %1440 = vmatprep.subr.mxu0 0.0
        %1441 = vmatpush1.msra.mxu0 0.0
        %1442 = vmatprep.subr.mxu0 0.0
        %1443 = vmatpush1.msra.mxu0 %v285
        %1444 = vmatprep.subr.mxu0 0.0
        %1445 = vmatpush1.msra.mxu0 %v284
        %1446 = vmatprep.subr.mxu0 0.0
        %1447 = vmatpush1.msra.mxu0 %v283
        %1448 = vmatprep.subr.mxu0 0.0
        %1449 = vmatpush1.msra.mxu0 %v282
        %1450 = vmatprep.subr.mxu0 0.0
        %1451 = vmatpush1.msra.mxu0 %v281
        %1452 = vmatprep.subr.mxu0 0.0
        %1453 = vmatpush1.msra.mxu0 %v280
        %1454 = vmatprep.subr.mxu0 0.0
        %1455 = vmatpush1.msra.mxu0 %v279
        %1456 = vmatprep.subr.mxu0 0.0
        %1457 = vmatpush1.msra.mxu0 %v278
        %1458 = vmatprep.subr.mxu0 0.0
        %1459 = vmatpush2.msra.mxu0 0.0
        %1460 = vmatprep.subr.mxu0 0.0
        %1461 = vmatpush2.msra.mxu0 0.0
        %1462 = vmatprep.subr.mxu0 0.0
        %1463 = vmatpush2.msra.mxu0 0.0
        %1464 = vmatprep.subr.mxu0 0.0
        %1465 = vmatpush2.msra.mxu0 0.0
        %1466 = vmatprep.subr.mxu0 0.0
        %1467 = vmatpush2.msra.mxu0 0.0
        %1468 = vmatprep.subr.mxu0 0.0
        %1469 = vmatpush2.msra.mxu0 0.0
        %1470 = vmatprep.subr.mxu0 0.0
        %1471 = vmatpush2.msra.mxu0 0.0
        %1472 = vmatprep.subr.mxu0 0.0
        %1473 = vmatpush2.msra.mxu0 0.0
        %1474 = vmatprep.subr.mxu0 0.0
        %1475 = vmatpush2.msra.mxu0 0.0
        %1476 = vmatprep.subr.mxu0 0.0
        %1477 = vmatpush2.msra.mxu0 0.0
        %1478 = vmatprep.subr.mxu0 0.0
        %1479 = vmatpush2.msra.mxu0 0.0
        %1480 = vmatprep.subr.mxu0 0.0
        %1481 = vmatpush2.msra.mxu0 0.0
        %1482 = vmatprep.subr.mxu0 0.0
        %1483 = vmatpush2.msra.mxu0 0.0
        %1484 = vmatprep.subr.mxu0 0.0
        %1485 = vmatpush2.msra.mxu0 0.0
        %1486 = vmatprep.subr.mxu0 0.0
        %1487 = vmatpush2.msra.mxu0 0.0
        %1488 = vmatprep.subr.mxu0 0.0
        %1489 = vmatpush2.msra.mxu0 0.0
        %1490 = vmatprep.mubr.f32.mxu0 0.0
        %1491 = vmatmul.mubr.f32.gmra.mxu0 %v642
        %v1492 = vpop.f32.mrf.mxu0
        %v1493 = vadd.f32 %v1418, %v1492
        %v1494 = vpop.f32.mrf.mxu0
        %1495 = vmatprep.mubr.f32.mxu0 0.0
        %1496 = vmatmul.mubr.f32.gmra.mxu0 %v645
        %v1497 = vpop.f32.mrf.mxu0
        %v1498 = vadd.f32 %v1423, %v1497
        %v1499 = vpop.f32.mrf.mxu0
        %1500 = vdwg.mxu0
        %1501 = vmatprep.subr.mxu0 0.0
        %1502 = vmatpush1.msra.mxu0 0.0
        %1503 = vmatprep.subr.mxu0 0.0
        %1504 = vmatpush1.msra.mxu0 0.0
        %1505 = vmatprep.subr.mxu0 0.0
        %1506 = vmatpush1.msra.mxu0 0.0
        %1507 = vmatprep.subr.mxu0 0.0
        %1508 = vmatpush1.msra.mxu0 0.0
        %1509 = vmatprep.subr.mxu0 0.0
        %1510 = vmatpush1.msra.mxu0 0.0
        %1511 = vmatprep.subr.mxu0 0.0
        %1512 = vmatpush1.msra.mxu0 0.0
        %1513 = vmatprep.subr.mxu0 0.0
        %1514 = vmatpush1.msra.mxu0 0.0
        %1515 = vmatprep.subr.mxu0 0.0
        %1516 = vmatpush1.msra.mxu0 0.0
        %1517 = vmatprep.subr.mxu0 0.0
        %1518 = vmatpush1.msra.mxu0 %v478
        %1519 = vmatprep.subr.mxu0 0.0
        %1520 = vmatpush1.msra.mxu0 %v477
        %1521 = vmatprep.subr.mxu0 0.0
        %1522 = vmatpush1.msra.mxu0 %v476
        %1523 = vmatprep.subr.mxu0 0.0
        %1524 = vmatpush1.msra.mxu0 %v475
        %1525 = vmatprep.subr.mxu0 0.0
        %1526 = vmatpush1.msra.mxu0 %v474
        %1527 = vmatprep.subr.mxu0 0.0
        %1528 = vmatpush1.msra.mxu0 %v473
        %1529 = vmatprep.subr.mxu0 0.0
        %1530 = vmatpush1.msra.mxu0 %v472
        %1531 = vmatprep.subr.mxu0 0.0
        %1532 = vmatpush1.msra.mxu0 %v471
        %1533 = vmatprep.subr.mxu0 0.0
        %1534 = vmatpush2.msra.mxu0 0.0
        %1535 = vmatprep.subr.mxu0 0.0
        %1536 = vmatpush2.msra.mxu0 0.0
        %1537 = vmatprep.subr.mxu0 0.0
        %1538 = vmatpush2.msra.mxu0 0.0
        %1539 = vmatprep.subr.mxu0 0.0
        %1540 = vmatpush2.msra.mxu0 0.0
        %1541 = vmatprep.subr.mxu0 0.0
        %1542 = vmatpush2.msra.mxu0 0.0
        %1543 = vmatprep.subr.mxu0 0.0
        %1544 = vmatpush2.msra.mxu0 0.0
        %1545 = vmatprep.subr.mxu0 0.0
        %1546 = vmatpush2.msra.mxu0 0.0
        %1547 = vmatprep.subr.mxu0 0.0
        %1548 = vmatpush2.msra.mxu0 0.0
        %1549 = vmatprep.subr.mxu0 0.0
        %1550 = vmatpush2.msra.mxu0 0.0
        %1551 = vmatprep.subr.mxu0 0.0
        %1552 = vmatpush2.msra.mxu0 0.0
        %1553 = vmatprep.subr.mxu0 0.0
        %1554 = vmatpush2.msra.mxu0 0.0
        %1555 = vmatprep.subr.mxu0 0.0
        %1556 = vmatpush2.msra.mxu0 0.0
        %1557 = vmatprep.subr.mxu0 0.0
        %1558 = vmatpush2.msra.mxu0 0.0
        %1559 = vmatprep.subr.mxu0 0.0
        %1560 = vmatpush2.msra.mxu0 0.0
        %1561 = vmatprep.subr.mxu0 0.0
        %1562 = vmatpush2.msra.mxu0 0.0
        %1563 = vmatprep.subr.mxu0 0.0
        %1564 = vmatpush2.msra.mxu0 0.0
        %1565 = vmatprep.mubr.f32.mxu0 0.0
        %1566 = vmatmul.mubr.f32.gmra.mxu0 %v823
        %v1567 = vpop.f32.mrf.mxu0
        %v1568 = vadd.f32 0.0, %v1567
        %v1569 = vpop.f32.mrf.mxu0
        %1570 = vmatprep.mubr.f32.mxu0 0.0
        %1571 = vmatmul.mubr.f32.gmra.mxu0 %v826
        %v1572 = vpop.f32.mrf.mxu0
        %v1573 = vadd.f32 0.0, %v1572
        %v1574 = vpop.f32.mrf.mxu0
        %1575 = vdwg.mxu0
        %1576 = vmatprep.subr.mxu0 0.0
        %1577 = vmatpush1.msra.mxu0 0.0
        %1578 = vmatprep.subr.mxu0 0.0
        %1579 = vmatpush1.msra.mxu0 0.0
        %1580 = vmatprep.subr.mxu0 0.0
        %1581 = vmatpush1.msra.mxu0 0.0
        %1582 = vmatprep.subr.mxu0 0.0
        %1583 = vmatpush1.msra.mxu0 0.0
        %1584 = vmatprep.subr.mxu0 0.0
        %1585 = vmatpush1.msra.mxu0 0.0
        %1586 = vmatprep.subr.mxu0 0.0
        %1587 = vmatpush1.msra.mxu0 0.0
        %1588 = vmatprep.subr.mxu0 0.0
        %1589 = vmatpush1.msra.mxu0 0.0
        %1590 = vmatprep.subr.mxu0 0.0
        %1591 = vmatpush1.msra.mxu0 0.0
        %1592 = vmatprep.subr.mxu0 0.0
        %1593 = vmatpush1.msra.mxu0 %v294
        %1594 = vmatprep.subr.mxu0 0.0
        %1595 = vmatpush1.msra.mxu0 %v293
        %1596 = vmatprep.subr.mxu0 0.0
        %1597 = vmatpush1.msra.mxu0 %v292
        %1598 = vmatprep.subr.mxu0 0.0
        %1599 = vmatpush1.msra.mxu0 %v291
        %1600 = vmatprep.subr.mxu0 0.0
        %1601 = vmatpush1.msra.mxu0 %v290
        %1602 = vmatprep.subr.mxu0 0.0
        %1603 = vmatpush1.msra.mxu0 %v289
        %1604 = vmatprep.subr.mxu0 0.0
        %1605 = vmatpush1.msra.mxu0 %v288
        %1606 = vmatprep.subr.mxu0 0.0
        %1607 = vmatpush1.msra.mxu0 %v287
        %1608 = vmatprep.subr.mxu0 0.0
        %1609 = vmatpush2.msra.mxu0 0.0
        %1610 = vmatprep.subr.mxu0 0.0
        %1611 = vmatpush2.msra.mxu0 0.0
        %1612 = vmatprep.subr.mxu0 0.0
        %1613 = vmatpush2.msra.mxu0 0.0
        %1614 = vmatprep.subr.mxu0 0.0
        %1615 = vmatpush2.msra.mxu0 0.0
        %1616 = vmatprep.subr.mxu0 0.0
        %1617 = vmatpush2.msra.mxu0 0.0
        %1618 = vmatprep.subr.mxu0 0.0
        %1619 = vmatpush2.msra.mxu0 0.0
        %1620 = vmatprep.subr.mxu0 0.0
        %1621 = vmatpush2.msra.mxu0 0.0
        %1622 = vmatprep.subr.mxu0 0.0
        %1623 = vmatpush2.msra.mxu0 0.0
        %1624 = vmatprep.subr.mxu0 0.0
        %1625 = vmatpush2.msra.mxu0 0.0
        %1626 = vmatprep.subr.mxu0 0.0
        %1627 = vmatpush2.msra.mxu0 0.0
        %1628 = vmatprep.subr.mxu0 0.0
        %1629 = vmatpush2.msra.mxu0 0.0
        %1630 = vmatprep.subr.mxu0 0.0
        %1631 = vmatpush2.msra.mxu0 0.0
        %1632 = vmatprep.subr.mxu0 0.0
        %1633 = vmatpush2.msra.mxu0 0.0
        %1634 = vmatprep.subr.mxu0 0.0
        %1635 = vmatpush2.msra.mxu0 0.0
        %1636 = vmatprep.subr.mxu0 0.0
        %1637 = vmatpush2.msra.mxu0 0.0
        %1638 = vmatprep.subr.mxu0 0.0
        %1639 = vmatpush2.msra.mxu0 0.0
        %1640 = vmatprep.mubr.f32.mxu0 0.0
        %1641 = vmatmul.mubr.f32.gmra.mxu0 %v642
        %v1642 = vpop.f32.mrf.mxu0
        %v1643 = vadd.f32 %v1568, %v1642
        %v1644 = vpop.f32.mrf.mxu0
        %1645 = vmatprep.mubr.f32.mxu0 0.0
        %1646 = vmatmul.mubr.f32.gmra.mxu0 %v645
        %v1647 = vpop.f32.mrf.mxu0
        %v1648 = vadd.f32 %v1573, %v1647
        %v1649 = vpop.f32.mrf.mxu0
        %1650 = vdwg.mxu0
        %1651 = vmatprep.subr.mxu0 0.0
        %1652 = vmatpush1.msra.mxu0 0.0
        %1653 = vmatprep.subr.mxu0 0.0
        %1654 = vmatpush1.msra.mxu0 0.0
        %1655 = vmatprep.subr.mxu0 0.0
        %1656 = vmatpush1.msra.mxu0 0.0
        %1657 = vmatprep.subr.mxu0 0.0
        %1658 = vmatpush1.msra.mxu0 0.0
        %1659 = vmatprep.subr.mxu0 0.0
        %1660 = vmatpush1.msra.mxu0 0.0
        %1661 = vmatprep.subr.mxu0 0.0
        %1662 = vmatpush1.msra.mxu0 0.0
        %1663 = vmatprep.subr.mxu0 0.0
        %1664 = vmatpush1.msra.mxu0 0.0
        %1665 = vmatprep.subr.mxu0 0.0
        %1666 = vmatpush1.msra.mxu0 0.0
        %1667 = vmatprep.subr.mxu0 0.0
        %1668 = vmatpush1.msra.mxu0 %v640
        %1669 = vmatprep.subr.mxu0 0.0
        %1670 = vmatpush1.msra.mxu0 %v639
        %1671 = vmatprep.subr.mxu0 0.0
        %1672 = vmatpush1.msra.mxu0 %v638
        %1673 = vmatprep.subr.mxu0 0.0
        %1674 = vmatpush1.msra.mxu0 %v637
        %1675 = vmatprep.subr.mxu0 0.0
        %1676 = vmatpush1.msra.mxu0 %v636
        %1677 = vmatprep.subr.mxu0 0.0
        %1678 = vmatpush1.msra.mxu0 %v635
        %1679 = vmatprep.subr.mxu0 0.0
        %1680 = vmatpush1.msra.mxu0 %v634
        %1681 = vmatprep.subr.mxu0 0.0
        %1682 = vmatpush1.msra.mxu0 %v633
        %1683 = vmatprep.subr.mxu0 0.0
        %1684 = vmatpush2.msra.mxu0 0.0
        %1685 = vmatprep.subr.mxu0 0.0
        %1686 = vmatpush2.msra.mxu0 0.0
        %1687 = vmatprep.subr.mxu0 0.0
        %1688 = vmatpush2.msra.mxu0 0.0
        %1689 = vmatprep.subr.mxu0 0.0
        %1690 = vmatpush2.msra.mxu0 0.0
        %1691 = vmatprep.subr.mxu0 0.0
        %1692 = vmatpush2.msra.mxu0 0.0
        %1693 = vmatprep.subr.mxu0 0.0
        %1694 = vmatpush2.msra.mxu0 0.0
        %1695 = vmatprep.subr.mxu0 0.0
        %1696 = vmatpush2.msra.mxu0 0.0
        %1697 = vmatprep.subr.mxu0 0.0
        %1698 = vmatpush2.msra.mxu0 0.0
        %1699 = vmatprep.subr.mxu0 0.0
        %1700 = vmatpush2.msra.mxu0 0.0
        %1701 = vmatprep.subr.mxu0 0.0
        %1702 = vmatpush2.msra.mxu0 0.0
        %1703 = vmatprep.subr.mxu0 0.0
        %1704 = vmatpush2.msra.mxu0 0.0
        %1705 = vmatprep.subr.mxu0 0.0
        %1706 = vmatpush2.msra.mxu0 0.0
        %1707 = vmatprep.subr.mxu0 0.0
        %1708 = vmatpush2.msra.mxu0 0.0
        %1709 = vmatprep.subr.mxu0 0.0
        %1710 = vmatpush2.msra.mxu0 0.0
        %1711 = vmatprep.subr.mxu0 0.0
        %1712 = vmatpush2.msra.mxu0 0.0
        %1713 = vmatprep.subr.mxu0 0.0
        %1714 = vmatpush2.msra.mxu0 0.0
        %1715 = vmatprep.mubr.f32.mxu0 0.0
        %1716 = vmatmul.mubr.f32.gmra.mxu0 %v1003
        %v1717 = vpop.f32.mrf.mxu0
        %v1718 = vadd.f32 0.0, %v1717
        %v1719 = vpop.f32.mrf.mxu0
        %1720 = vmatprep.mubr.f32.mxu0 0.0
        %1721 = vmatmul.mubr.f32.gmra.mxu0 %v1006
        %v1722 = vpop.f32.mrf.mxu0
        %v1723 = vadd.f32 0.0, %v1722
        %v1724 = vpop.f32.mrf.mxu0
        %1725 = vdwg.mxu0
        %v1726 = vadd.f32 %v1493, %v1718
        %v1727 = vadd.f32 %v1498, %v1723
        %1728 = vmatprep.subr.mxu0 0.0
        %1729 = vmatpush1.msra.mxu0 0.0
        %1730 = vmatprep.subr.mxu0 0.0
        %1731 = vmatpush1.msra.mxu0 0.0
        %1732 = vmatprep.subr.mxu0 0.0
        %1733 = vmatpush1.msra.mxu0 0.0
        %1734 = vmatprep.subr.mxu0 0.0
        %1735 = vmatpush1.msra.mxu0 0.0
        %1736 = vmatprep.subr.mxu0 0.0
        %1737 = vmatpush1.msra.mxu0 0.0
        %1738 = vmatprep.subr.mxu0 0.0
        %1739 = vmatpush1.msra.mxu0 0.0
        %1740 = vmatprep.subr.mxu0 0.0
        %1741 = vmatpush1.msra.mxu0 0.0
        %1742 = vmatprep.subr.mxu0 0.0
        %1743 = vmatpush1.msra.mxu0 0.0
        %1744 = vmatprep.subr.mxu0 0.0
        %1745 = vmatpush1.msra.mxu0 %v732
        %1746 = vmatprep.subr.mxu0 0.0
        %1747 = vmatpush1.msra.mxu0 %v731
        %1748 = vmatprep.subr.mxu0 0.0
        %1749 = vmatpush1.msra.mxu0 %v730
        %1750 = vmatprep.subr.mxu0 0.0
        %1751 = vmatpush1.msra.mxu0 %v729
        %1752 = vmatprep.subr.mxu0 0.0
        %1753 = vmatpush1.msra.mxu0 %v728
        %1754 = vmatprep.subr.mxu0 0.0
        %1755 = vmatpush1.msra.mxu0 %v727
        %1756 = vmatprep.subr.mxu0 0.0
        %1757 = vmatpush1.msra.mxu0 %v726
        %1758 = vmatprep.subr.mxu0 0.0
        %1759 = vmatpush1.msra.mxu0 %v725
        %1760 = vmatprep.subr.mxu0 0.0
        %1761 = vmatpush2.msra.mxu0 0.0
        %1762 = vmatprep.subr.mxu0 0.0
        %1763 = vmatpush2.msra.mxu0 0.0
        %1764 = vmatprep.subr.mxu0 0.0
        %1765 = vmatpush2.msra.mxu0 0.0
        %1766 = vmatprep.subr.mxu0 0.0
        %1767 = vmatpush2.msra.mxu0 0.0
        %1768 = vmatprep.subr.mxu0 0.0
        %1769 = vmatpush2.msra.mxu0 0.0
        %1770 = vmatprep.subr.mxu0 0.0
        %1771 = vmatpush2.msra.mxu0 0.0
        %1772 = vmatprep.subr.mxu0 0.0
        %1773 = vmatpush2.msra.mxu0 0.0
        %1774 = vmatprep.subr.mxu0 0.0
        %1775 = vmatpush2.msra.mxu0 0.0
        %1776 = vmatprep.subr.mxu0 0.0
        %1777 = vmatpush2.msra.mxu0 0.0
        %1778 = vmatprep.subr.mxu0 0.0
        %1779 = vmatpush2.msra.mxu0 0.0
        %1780 = vmatprep.subr.mxu0 0.0
        %1781 = vmatpush2.msra.mxu0 0.0
        %1782 = vmatprep.subr.mxu0 0.0
        %1783 = vmatpush2.msra.mxu0 0.0
        %1784 = vmatprep.subr.mxu0 0.0
        %1785 = vmatpush2.msra.mxu0 0.0
        %1786 = vmatprep.subr.mxu0 0.0
        %1787 = vmatpush2.msra.mxu0 0.0
        %1788 = vmatprep.subr.mxu0 0.0
        %1789 = vmatpush2.msra.mxu0 0.0
        %1790 = vmatprep.subr.mxu0 0.0
        %1791 = vmatpush2.msra.mxu0 0.0
        %1792 = vmatprep.mubr.f32.mxu0 0.0
        %1793 = vmatmul.mubr.f32.gmra.mxu0 %v1003
        %v1794 = vpop.f32.mrf.mxu0
        %v1795 = vadd.f32 0.0, %v1794
        %v1796 = vpop.f32.mrf.mxu0
        %1797 = vmatprep.mubr.f32.mxu0 0.0
        %1798 = vmatmul.mubr.f32.gmra.mxu0 %v1006
        %v1799 = vpop.f32.mrf.mxu0
        %v1800 = vadd.f32 0.0, %v1799
        %v1801 = vpop.f32.mrf.mxu0
        %1802 = vdwg.mxu0
        %v1803 = vadd.f32 %v1643, %v1795
        %v1804 = vadd.f32 %v1648, %v1800
        %1805 = vmatprep.subr.mxu0 0.0
        %1806 = vmatpush1.msra.mxu0 0.0
        %1807 = vmatprep.subr.mxu0 0.0
        %1808 = vmatpush1.msra.mxu0 0.0
        %1809 = vmatprep.subr.mxu0 0.0
        %1810 = vmatpush1.msra.mxu0 0.0
        %1811 = vmatprep.subr.mxu0 0.0
        %1812 = vmatpush1.msra.mxu0 0.0
        %1813 = vmatprep.subr.mxu0 0.0
        %1814 = vmatpush1.msra.mxu0 0.0
        %1815 = vmatprep.subr.mxu0 0.0
        %1816 = vmatpush1.msra.mxu0 0.0
        %1817 = vmatprep.subr.mxu0 0.0
        %1818 = vmatpush1.msra.mxu0 0.0
        %1819 = vmatprep.subr.mxu0 0.0
        %1820 = vmatpush1.msra.mxu0 0.0
        %1821 = vmatprep.subr.mxu0 0.0
        %1822 = vmatpush1.msra.mxu0 %v821
        %1823 = vmatprep.subr.mxu0 0.0
        %1824 = vmatpush1.msra.mxu0 %v820
        %1825 = vmatprep.subr.mxu0 0.0
        %1826 = vmatpush1.msra.mxu0 %v819
        %1827 = vmatprep.subr.mxu0 0.0
        %1828 = vmatpush1.msra.mxu0 %v818
        %1829 = vmatprep.subr.mxu0 0.0
        %1830 = vmatpush1.msra.mxu0 %v817
        %1831 = vmatprep.subr.mxu0 0.0
        %1832 = vmatpush1.msra.mxu0 %v816
        %1833 = vmatprep.subr.mxu0 0.0
        %1834 = vmatpush1.msra.mxu0 %v815
        %1835 = vmatprep.subr.mxu0 0.0
        %1836 = vmatpush1.msra.mxu0 %v814
        %1837 = vmatprep.subr.mxu0 0.0
        %1838 = vmatpush2.msra.mxu0 0.0
        %1839 = vmatprep.subr.mxu0 0.0
        %1840 = vmatpush2.msra.mxu0 0.0
        %1841 = vmatprep.subr.mxu0 0.0
        %1842 = vmatpush2.msra.mxu0 0.0
        %1843 = vmatprep.subr.mxu0 0.0
        %1844 = vmatpush2.msra.mxu0 0.0
        %1845 = vmatprep.subr.mxu0 0.0
        %1846 = vmatpush2.msra.mxu0 0.0
        %1847 = vmatprep.subr.mxu0 0.0
        %1848 = vmatpush2.msra.mxu0 0.0
        %1849 = vmatprep.subr.mxu0 0.0
        %1850 = vmatpush2.msra.mxu0 0.0
        %1851 = vmatprep.subr.mxu0 0.0
        %1852 = vmatpush2.msra.mxu0 0.0
        %1853 = vmatprep.subr.mxu0 0.0
        %1854 = vmatpush2.msra.mxu0 0.0
        %1855 = vmatprep.subr.mxu0 0.0
        %1856 = vmatpush2.msra.mxu0 0.0
        %1857 = vmatprep.subr.mxu0 0.0
        %1858 = vmatpush2.msra.mxu0 0.0
        %1859 = vmatprep.subr.mxu0 0.0
        %1860 = vmatpush2.msra.mxu0 0.0
        %1861 = vmatprep.subr.mxu0 0.0
        %1862 = vmatpush2.msra.mxu0 0.0
        %1863 = vmatprep.subr.mxu0 0.0
        %1864 = vmatpush2.msra.mxu0 0.0
        %1865 = vmatprep.subr.mxu0 0.0
        %1866 = vmatpush2.msra.mxu0 0.0
        %1867 = vmatprep.subr.mxu0 0.0
        %1868 = vmatpush2.msra.mxu0 0.0
        %1869 = vmatprep.mubr.f32.mxu0 0.0
        %1870 = vmatmul.mubr.f32.gmra.mxu0 %v1183
        %v1871 = vpop.f32.mrf.mxu0
        %v1872 = vadd.f32 0.0, %v1871
        %v1873 = vpop.f32.mrf.mxu0
        %1874 = vmatprep.mubr.f32.mxu0 0.0
        %1875 = vmatmul.mubr.f32.gmra.mxu0 %v1186
        %v1876 = vpop.f32.mrf.mxu0
        %v1877 = vadd.f32 0.0, %v1876
        %v1878 = vpop.f32.mrf.mxu0
        %1879 = vdwg.mxu0
        %v1880 = vadd.f32 %v1726, %v1872
        %v1881 = vadd.f32 %v1727, %v1877
        %1882 = vmatprep.subr.mxu0 0.0
        %1883 = vmatpush1.msra.mxu0 0.0
        %1884 = vmatprep.subr.mxu0 0.0
        %1885 = vmatpush1.msra.mxu0 0.0
        %1886 = vmatprep.subr.mxu0 0.0
        %1887 = vmatpush1.msra.mxu0 0.0
        %1888 = vmatprep.subr.mxu0 0.0
        %1889 = vmatpush1.msra.mxu0 0.0
        %1890 = vmatprep.subr.mxu0 0.0
        %1891 = vmatpush1.msra.mxu0 0.0
        %1892 = vmatprep.subr.mxu0 0.0
        %1893 = vmatpush1.msra.mxu0 0.0
        %1894 = vmatprep.subr.mxu0 0.0
        %1895 = vmatpush1.msra.mxu0 0.0
        %1896 = vmatprep.subr.mxu0 0.0
        %1897 = vmatpush1.msra.mxu0 0.0
        %1898 = vmatprep.subr.mxu0 0.0
        %1899 = vmatpush1.msra.mxu0 %v913
        %1900 = vmatprep.subr.mxu0 0.0
        %1901 = vmatpush1.msra.mxu0 %v912
        %1902 = vmatprep.subr.mxu0 0.0
        %1903 = vmatpush1.msra.mxu0 %v911
        %1904 = vmatprep.subr.mxu0 0.0
        %1905 = vmatpush1.msra.mxu0 %v910
        %1906 = vmatprep.subr.mxu0 0.0
        %1907 = vmatpush1.msra.mxu0 %v909
        %1908 = vmatprep.subr.mxu0 0.0
        %1909 = vmatpush1.msra.mxu0 %v908
        %1910 = vmatprep.subr.mxu0 0.0
        %1911 = vmatpush1.msra.mxu0 %v907
        %1912 = vmatprep.subr.mxu0 0.0
        %1913 = vmatpush1.msra.mxu0 %v906
        %1914 = vmatprep.subr.mxu0 0.0
        %1915 = vmatpush2.msra.mxu0 0.0
        %1916 = vmatprep.subr.mxu0 0.0
        %1917 = vmatpush2.msra.mxu0 0.0
        %1918 = vmatprep.subr.mxu0 0.0
        %1919 = vmatpush2.msra.mxu0 0.0
        %1920 = vmatprep.subr.mxu0 0.0
        %1921 = vmatpush2.msra.mxu0 0.0
        %1922 = vmatprep.subr.mxu0 0.0
        %1923 = vmatpush2.msra.mxu0 0.0
        %1924 = vmatprep.subr.mxu0 0.0
        %1925 = vmatpush2.msra.mxu0 0.0
        %1926 = vmatprep.subr.mxu0 0.0
        %1927 = vmatpush2.msra.mxu0 0.0
        %1928 = vmatprep.subr.mxu0 0.0
        %1929 = vmatpush2.msra.mxu0 0.0
        %1930 = vmatprep.subr.mxu0 0.0
        %1931 = vmatpush2.msra.mxu0 0.0
        %1932 = vmatprep.subr.mxu0 0.0
        %1933 = vmatpush2.msra.mxu0 0.0
        %1934 = vmatprep.subr.mxu0 0.0
        %1935 = vmatpush2.msra.mxu0 0.0
        %1936 = vmatprep.subr.mxu0 0.0
        %1937 = vmatpush2.msra.mxu0 0.0
        %1938 = vmatprep.subr.mxu0 0.0
        %1939 = vmatpush2.msra.mxu0 0.0
        %1940 = vmatprep.subr.mxu0 0.0
        %1941 = vmatpush2.msra.mxu0 0.0
        %1942 = vmatprep.subr.mxu0 0.0
        %1943 = vmatpush2.msra.mxu0 0.0
        %1944 = vmatprep.subr.mxu0 0.0
        %1945 = vmatpush2.msra.mxu0 0.0
        %1946 = vmatprep.mubr.f32.mxu0 0.0
        %1947 = vmatmul.mubr.f32.gmra.mxu0 %v1183
        %v1948 = vpop.f32.mrf.mxu0
        %v1949 = vadd.f32 0.0, %v1948
        %v1950 = vpop.f32.mrf.mxu0
        %1951 = vmatprep.mubr.f32.mxu0 0.0
        %1952 = vmatmul.mubr.f32.gmra.mxu0 %v1186
        %v1953 = vpop.f32.mrf.mxu0
        %v1954 = vadd.f32 0.0, %v1953
        %v1955 = vpop.f32.mrf.mxu0
        %1956 = vdwg.mxu0
        %v1957 = vadd.f32 %v1803, %v1949
        %v1958 = vadd.f32 %v1804, %v1954
        %v1959 = vld [vmem:[%s629 + $0x1] sm:$0xff]
        %v1960 = vld [vmem:[%s629 + $0x9] sm:$0x7f]
        %v1962 = vsel %vm307, %v1959, 0
        %v1965 = vsel %vm307, %v1960, 0
        %1967 = vmatprep.subr.mxu0 0.0
        %1968 = vmatpush1.msra.mxu0 0.0
        %1969 = vmatprep.subr.mxu0 0.0
        %1970 = vmatpush1.msra.mxu0 0.0
        %1971 = vmatprep.subr.mxu0 0.0
        %1972 = vmatpush1.msra.mxu0 0.0
        %1973 = vmatprep.subr.mxu0 0.0
        %1974 = vmatpush1.msra.mxu0 0.0
        %1975 = vmatprep.subr.mxu0 0.0
        %1976 = vmatpush1.msra.mxu0 0.0
        %1977 = vmatprep.subr.mxu0 0.0
        %1978 = vmatpush1.msra.mxu0 0.0
        %1979 = vmatprep.subr.mxu0 0.0
        %1980 = vmatpush1.msra.mxu0 0.0
        %1981 = vmatprep.subr.mxu0 0.0
        %1982 = vmatpush1.msra.mxu0 0.0
        %1983 = vmatprep.subr.mxu0 0.0
        %1984 = vmatpush1.msra.mxu0 %v1001
        %1985 = vmatprep.subr.mxu0 0.0
        %1986 = vmatpush1.msra.mxu0 %v1000
        %1987 = vmatprep.subr.mxu0 0.0
        %1988 = vmatpush1.msra.mxu0 %v999
        %1989 = vmatprep.subr.mxu0 0.0
        %1990 = vmatpush1.msra.mxu0 %v998
        %1991 = vmatprep.subr.mxu0 0.0
        %1992 = vmatpush1.msra.mxu0 %v997
        %1993 = vmatprep.subr.mxu0 0.0
        %1994 = vmatpush1.msra.mxu0 %v996
        %1995 = vmatprep.subr.mxu0 0.0
        %1996 = vmatpush1.msra.mxu0 %v995
        %1997 = vmatprep.subr.mxu0 0.0
        %1998 = vmatpush1.msra.mxu0 %v994
        %1999 = vmatprep.subr.mxu0 0.0
        %2000 = vmatpush2.msra.mxu0 0.0
        %2001 = vmatprep.subr.mxu0 0.0
        %2002 = vmatpush2.msra.mxu0 0.0
        %2003 = vmatprep.subr.mxu0 0.0
        %2004 = vmatpush2.msra.mxu0 0.0
        %2005 = vmatprep.subr.mxu0 0.0
        %2006 = vmatpush2.msra.mxu0 0.0
        %2007 = vmatprep.subr.mxu0 0.0
        %2008 = vmatpush2.msra.mxu0 0.0
        %2009 = vmatprep.subr.mxu0 0.0
        %2010 = vmatpush2.msra.mxu0 0.0
        %2011 = vmatprep.subr.mxu0 0.0
        %2012 = vmatpush2.msra.mxu0 0.0
        %2013 = vmatprep.subr.mxu0 0.0
        %2014 = vmatpush2.msra.mxu0 0.0
        %2015 = vmatprep.subr.mxu0 0.0
        %2016 = vmatpush2.msra.mxu0 0.0
        %2017 = vmatprep.subr.mxu0 0.0
        %2018 = vmatpush2.msra.mxu0 0.0
        %2019 = vmatprep.subr.mxu0 0.0
        %2020 = vmatpush2.msra.mxu0 0.0
        %2021 = vmatprep.subr.mxu0 0.0
        %2022 = vmatpush2.msra.mxu0 0.0
        %2023 = vmatprep.subr.mxu0 0.0
        %2024 = vmatpush2.msra.mxu0 0.0
        %2025 = vmatprep.subr.mxu0 0.0
        %2026 = vmatpush2.msra.mxu0 0.0
        %2027 = vmatprep.subr.mxu0 0.0
        %2028 = vmatpush2.msra.mxu0 0.0
        %2029 = vmatprep.subr.mxu0 0.0
        %2030 = vmatpush2.msra.mxu0 0.0
        %2031 = vmatprep.mubr.f32.mxu0 0.0
        %2032 = vmatmul.mubr.f32.gmra.mxu0 %v1962
        %v2033 = vpop.f32.mrf.mxu0
        %v2034 = vadd.f32 0.0, %v2033
        %v2035 = vpop.f32.mrf.mxu0
        %2036 = vmatprep.mubr.f32.mxu0 0.0
        %2037 = vmatmul.mubr.f32.gmra.mxu0 %v1965
        %v2038 = vpop.f32.mrf.mxu0
        %v2039 = vadd.f32 0.0, %v2038
        %v2040 = vpop.f32.mrf.mxu0
        %2041 = vdwg.mxu0
        %v2042 = vadd.f32 %v1880, %v2034
        %v2043 = vadd.f32 %v1881, %v2039
        %2044 = vmatprep.subr.mxu0 0.0
        %2045 = vmatpush1.msra.mxu0 0.0
        %2046 = vmatprep.subr.mxu0 0.0
        %2047 = vmatpush1.msra.mxu0 0.0
        %2048 = vmatprep.subr.mxu0 0.0
        %2049 = vmatpush1.msra.mxu0 0.0
        %2050 = vmatprep.subr.mxu0 0.0
        %2051 = vmatpush1.msra.mxu0 0.0
        %2052 = vmatprep.subr.mxu0 0.0
        %2053 = vmatpush1.msra.mxu0 0.0
        %2054 = vmatprep.subr.mxu0 0.0
        %2055 = vmatpush1.msra.mxu0 0.0
        %2056 = vmatprep.subr.mxu0 0.0
        %2057 = vmatpush1.msra.mxu0 0.0
        %2058 = vmatprep.subr.mxu0 0.0
        %2059 = vmatpush1.msra.mxu0 0.0
        %2060 = vmatprep.subr.mxu0 0.0
        %2061 = vmatpush1.msra.mxu0 %v1093
        %2062 = vmatprep.subr.mxu0 0.0
        %2063 = vmatpush1.msra.mxu0 %v1092
        %2064 = vmatprep.subr.mxu0 0.0
        %2065 = vmatpush1.msra.mxu0 %v1091
        %2066 = vmatprep.subr.mxu0 0.0
        %2067 = vmatpush1.msra.mxu0 %v1090
        %2068 = vmatprep.subr.mxu0 0.0
        %2069 = vmatpush1.msra.mxu0 %v1089
        %2070 = vmatprep.subr.mxu0 0.0
        %2071 = vmatpush1.msra.mxu0 %v1088
        %2072 = vmatprep.subr.mxu0 0.0
        %2073 = vmatpush1.msra.mxu0 %v1087
        %2074 = vmatprep.subr.mxu0 0.0
        %2075 = vmatpush1.msra.mxu0 %v1086
        %2076 = vmatprep.subr.mxu0 0.0
        %2077 = vmatpush2.msra.mxu0 0.0
        %2078 = vmatprep.subr.mxu0 0.0
        %2079 = vmatpush2.msra.mxu0 0.0
        %2080 = vmatprep.subr.mxu0 0.0
        %2081 = vmatpush2.msra.mxu0 0.0
        %2082 = vmatprep.subr.mxu0 0.0
        %2083 = vmatpush2.msra.mxu0 0.0
        %2084 = vmatprep.subr.mxu0 0.0
        %2085 = vmatpush2.msra.mxu0 0.0
        %2086 = vmatprep.subr.mxu0 0.0
        %2087 = vmatpush2.msra.mxu0 0.0
        %2088 = vmatprep.subr.mxu0 0.0
        %2089 = vmatpush2.msra.mxu0 0.0
        %2090 = vmatprep.subr.mxu0 0.0
        %2091 = vmatpush2.msra.mxu0 0.0
        %2092 = vmatprep.subr.mxu0 0.0
        %2093 = vmatpush2.msra.mxu0 0.0
        %2094 = vmatprep.subr.mxu0 0.0
        %2095 = vmatpush2.msra.mxu0 0.0
        %2096 = vmatprep.subr.mxu0 0.0
        %2097 = vmatpush2.msra.mxu0 0.0
        %2098 = vmatprep.subr.mxu0 0.0
        %2099 = vmatpush2.msra.mxu0 0.0
        %2100 = vmatprep.subr.mxu0 0.0
        %2101 = vmatpush2.msra.mxu0 0.0
        %2102 = vmatprep.subr.mxu0 0.0
        %2103 = vmatpush2.msra.mxu0 0.0
        %2104 = vmatprep.subr.mxu0 0.0
        %2105 = vmatpush2.msra.mxu0 0.0
        %2106 = vmatprep.subr.mxu0 0.0
        %2107 = vmatpush2.msra.mxu0 0.0
        %2108 = vmatprep.mubr.f32.mxu0 0.0
        %2109 = vmatmul.mubr.f32.gmra.mxu0 %v1962
        %v2110 = vpop.f32.mrf.mxu0
        %v2111 = vadd.f32 0.0, %v2110
        %v2112 = vpop.f32.mrf.mxu0
        %2113 = vmatprep.mubr.f32.mxu0 0.0
        %2114 = vmatmul.mubr.f32.gmra.mxu0 %v1965
        %v2115 = vpop.f32.mrf.mxu0
        %v2116 = vadd.f32 0.0, %v2115
        %v2117 = vpop.f32.mrf.mxu0
        %2118 = vdwg.mxu0
        %v2119 = vadd.f32 %v1957, %v2111
        %v2120 = vadd.f32 %v1958, %v2116
        %v2121 = vld [vmem:[%s810 + $0x1] sm:$0xff]
        %v2122 = vld [vmem:[%s810 + $0x9] sm:$0x7f]
        %v2124 = vsel %vm307, %v2121, 0
        %v2127 = vsel %vm307, %v2122, 0
        %2129 = vmatprep.subr.mxu0 0.0
        %2130 = vmatpush1.msra.mxu0 0.0
        %2131 = vmatprep.subr.mxu0 0.0
        %2132 = vmatpush1.msra.mxu0 0.0
        %2133 = vmatprep.subr.mxu0 0.0
        %2134 = vmatpush1.msra.mxu0 0.0
        %2135 = vmatprep.subr.mxu0 0.0
        %2136 = vmatpush1.msra.mxu0 0.0
        %2137 = vmatprep.subr.mxu0 0.0
        %2138 = vmatpush1.msra.mxu0 0.0
        %2139 = vmatprep.subr.mxu0 0.0
        %2140 = vmatpush1.msra.mxu0 0.0
        %2141 = vmatprep.subr.mxu0 0.0
        %2142 = vmatpush1.msra.mxu0 0.0
        %2143 = vmatprep.subr.mxu0 0.0
        %2144 = vmatpush1.msra.mxu0 0.0
        %2145 = vmatprep.subr.mxu0 0.0
        %2146 = vmatpush1.msra.mxu0 %v1181
        %2147 = vmatprep.subr.mxu0 0.0
        %2148 = vmatpush1.msra.mxu0 %v1180
        %2149 = vmatprep.subr.mxu0 0.0
        %2150 = vmatpush1.msra.mxu0 %v1179
        %2151 = vmatprep.subr.mxu0 0.0
        %2152 = vmatpush1.msra.mxu0 %v1178
        %2153 = vmatprep.subr.mxu0 0.0
        %2154 = vmatpush1.msra.mxu0 %v1177
        %2155 = vmatprep.subr.mxu0 0.0
        %2156 = vmatpush1.msra.mxu0 %v1176
        %2157 = vmatprep.subr.mxu0 0.0
        %2158 = vmatpush1.msra.mxu0 %v1175
        %2159 = vmatprep.subr.mxu0 0.0
        %2160 = vmatpush1.msra.mxu0 %v1174
        %2161 = vmatprep.subr.mxu0 0.0
        %2162 = vmatpush2.msra.mxu0 0.0
        %2163 = vmatprep.subr.mxu0 0.0
        %2164 = vmatpush2.msra.mxu0 0.0
        %2165 = vmatprep.subr.mxu0 0.0
        %2166 = vmatpush2.msra.mxu0 0.0
        %2167 = vmatprep.subr.mxu0 0.0
        %2168 = vmatpush2.msra.mxu0 0.0
        %2169 = vmatprep.subr.mxu0 0.0
        %2170 = vmatpush2.msra.mxu0 0.0
        %2171 = vmatprep.subr.mxu0 0.0
        %2172 = vmatpush2.msra.mxu0 0.0
        %2173 = vmatprep.subr.mxu0 0.0
        %2174 = vmatpush2.msra.mxu0 0.0
        %2175 = vmatprep.subr.mxu0 0.0
        %2176 = vmatpush2.msra.mxu0 0.0
        %2177 = vmatprep.subr.mxu0 0.0
        %2178 = vmatpush2.msra.mxu0 0.0
        %2179 = vmatprep.subr.mxu0 0.0
        %2180 = vmatpush2.msra.mxu0 0.0
        %2181 = vmatprep.subr.mxu0 0.0
        %2182 = vmatpush2.msra.mxu0 0.0
        %2183 = vmatprep.subr.mxu0 0.0
        %2184 = vmatpush2.msra.mxu0 0.0
        %2185 = vmatprep.subr.mxu0 0.0
        %2186 = vmatpush2.msra.mxu0 0.0
        %2187 = vmatprep.subr.mxu0 0.0
        %2188 = vmatpush2.msra.mxu0 0.0
        %2189 = vmatprep.subr.mxu0 0.0
        %2190 = vmatpush2.msra.mxu0 0.0
        %2191 = vmatprep.subr.mxu0 0.0
        %2192 = vmatpush2.msra.mxu0 0.0
        %2193 = vmatprep.mubr.f32.mxu0 0.0
        %2194 = vmatmul.mubr.f32.gmra.mxu0 %v2124
        %v2195 = vpop.f32.mrf.mxu0
        %v2196 = vadd.f32 0.0, %v2195
        %v2197 = vpop.f32.mrf.mxu0
        %2198 = vmatprep.mubr.f32.mxu0 0.0
        %2199 = vmatmul.mubr.f32.gmra.mxu0 %v2127
        %v2200 = vpop.f32.mrf.mxu0
        %v2201 = vadd.f32 0.0, %v2200
        %v2202 = vpop.f32.mrf.mxu0
        %2203 = vdwg.mxu0
        %v2204 = vadd.f32 %v2042, %v2196
        %v2205 = vadd.f32 %v2043, %v2201
        %2206 = vmatprep.subr.mxu0 0.0
        %2207 = vmatpush1.msra.mxu0 0.0
        %2208 = vmatprep.subr.mxu0 0.0
        %2209 = vmatpush1.msra.mxu0 0.0
        %2210 = vmatprep.subr.mxu0 0.0
        %2211 = vmatpush1.msra.mxu0 0.0
        %2212 = vmatprep.subr.mxu0 0.0
        %2213 = vmatpush1.msra.mxu0 0.0
        %2214 = vmatprep.subr.mxu0 0.0
        %2215 = vmatpush1.msra.mxu0 0.0
        %2216 = vmatprep.subr.mxu0 0.0
        %2217 = vmatpush1.msra.mxu0 0.0
        %2218 = vmatprep.subr.mxu0 0.0
        %2219 = vmatpush1.msra.mxu0 0.0
        %2220 = vmatprep.subr.mxu0 0.0
        %2221 = vmatpush1.msra.mxu0 0.0
        %2222 = vmatprep.subr.mxu0 0.0
        %2223 = vmatpush1.msra.mxu0 %v1273
        %2224 = vmatprep.subr.mxu0 0.0
        %2225 = vmatpush1.msra.mxu0 %v1272
        %2226 = vmatprep.subr.mxu0 0.0
        %2227 = vmatpush1.msra.mxu0 %v1271
        %2228 = vmatprep.subr.mxu0 0.0
        %2229 = vmatpush1.msra.mxu0 %v1270
        %2230 = vmatprep.subr.mxu0 0.0
        %2231 = vmatpush1.msra.mxu0 %v1269
        %2232 = vmatprep.subr.mxu0 0.0
        %2233 = vmatpush1.msra.mxu0 %v1268
        %2234 = vmatprep.subr.mxu0 0.0
        %2235 = vmatpush1.msra.mxu0 %v1267
        %2236 = vmatprep.subr.mxu0 0.0
        %2237 = vmatpush1.msra.mxu0 %v1266
        %2238 = vmatprep.subr.mxu0 0.0
        %2239 = vmatpush2.msra.mxu0 0.0
        %2240 = vmatprep.subr.mxu0 0.0
        %2241 = vmatpush2.msra.mxu0 0.0
        %2242 = vmatprep.subr.mxu0 0.0
        %2243 = vmatpush2.msra.mxu0 0.0
        %2244 = vmatprep.subr.mxu0 0.0
        %2245 = vmatpush2.msra.mxu0 0.0
        %2246 = vmatprep.subr.mxu0 0.0
        %2247 = vmatpush2.msra.mxu0 0.0
        %2248 = vmatprep.subr.mxu0 0.0
        %2249 = vmatpush2.msra.mxu0 0.0
        %2250 = vmatprep.subr.mxu0 0.0
        %2251 = vmatpush2.msra.mxu0 0.0
        %2252 = vmatprep.subr.mxu0 0.0
        %2253 = vmatpush2.msra.mxu0 0.0
        %2254 = vmatprep.subr.mxu0 0.0
        %2255 = vmatpush2.msra.mxu0 0.0
        %2256 = vmatprep.subr.mxu0 0.0
        %2257 = vmatpush2.msra.mxu0 0.0
        %2258 = vmatprep.subr.mxu0 0.0
        %2259 = vmatpush2.msra.mxu0 0.0
        %2260 = vmatprep.subr.mxu0 0.0
        %2261 = vmatpush2.msra.mxu0 0.0
        %2262 = vmatprep.subr.mxu0 0.0
        %2263 = vmatpush2.msra.mxu0 0.0
        %2264 = vmatprep.subr.mxu0 0.0
        %2265 = vmatpush2.msra.mxu0 0.0
        %2266 = vmatprep.subr.mxu0 0.0
        %2267 = vmatpush2.msra.mxu0 0.0
        %2268 = vmatprep.subr.mxu0 0.0
        %2269 = vmatpush2.msra.mxu0 0.0
        %2270 = vmatprep.mubr.f32.mxu0 0.0
        %2271 = vmatmul.mubr.f32.gmra.mxu0 %v2124
        %v2272 = vpop.f32.mrf.mxu0
        %v2273 = vadd.f32 0.0, %v2272
        %v2274 = vpop.f32.mrf.mxu0
        %2275 = vmatprep.mubr.f32.mxu0 0.0
        %2276 = vmatmul.mubr.f32.gmra.mxu0 %v2127
        %v2277 = vpop.f32.mrf.mxu0
        %v2278 = vadd.f32 0.0, %v2277
        %v2279 = vpop.f32.mrf.mxu0
        %2280 = vdwg.mxu0
        %v2281 = vadd.f32 %v2119, %v2273
        %v2282 = vadd.f32 %v2120, %v2278
        %v2283 = vmax.f32 %v1263, %v1349
        %v2284 = vmax.f32 %v1264, %v1350
        %v2285 = vmax.f32 %v2204, %v2281
        %v2286 = vmax.f32 %v2205, %v2282
        %v2287 = vmax.f32 %v2283, %v2285
        %v2288 = vmax.f32 %v2284, %v2286
        %v2289 = vld [vmem:[%s2] sm:$0x1]
        %v2291 = vlaneseq
        %v2292 = vshrl.u32 %v2291, 7
        %v2293 = vsub.s32 0, %v2292
        %v2294 = vrot.slane %v2289, %v2293
        %v2296 = vadd.f32 %v2287, %v2294
        %v2297 = vadd.f32 %v2288, %v2294
        %v2298 = vmax.f32 %v2296, 0.0
        %v2299 = vmax.f32 %v2297, 0.0
        %v2300 = vld [vmem:[%s3] sm:$0xff]
        %v2301 = vld [vmem:[%s3 + $0x8] sm:$0xff]
        %v2302 = vld [vmem:[%s3 + $0x10] sm:$0xff]
        %v2303 = vld [vmem:[%s3 + $0x18] sm:$0xff]
        %v2304 = vld [vmem:[%s3 + $0x20] sm:$0xff]
        %v2305 = vld [vmem:[%s3 + $0x28] sm:$0xff]
        %v2306 = vld [vmem:[%s3 + $0x30] sm:$0xff]
        %v2307 = vld [vmem:[%s3 + $0x38] sm:$0xff]
        %v2308 = vld [vmem:[%s3 + $0x40] sm:$0xff]
        %v2309 = vld [vmem:[%s3 + $0x48] sm:$0x7]
        %s2310 = scalar_lea.vmem %s3, 80
        %v2311 = vld [vmem:[%s2310] sm:$0xff]
        %v2312 = vld [vmem:[%s2310 + $0x8] sm:$0xff]
        %v2313 = vld [vmem:[%s2310 + $0x10] sm:$0xff]
        %v2314 = vld [vmem:[%s2310 + $0x18] sm:$0xff]
        %v2315 = vld [vmem:[%s2310 + $0x20] sm:$0xff]
        %v2316 = vld [vmem:[%s2310 + $0x28] sm:$0xff]
        %v2317 = vld [vmem:[%s2310 + $0x30] sm:$0xff]
        %v2318 = vld [vmem:[%s2310 + $0x38] sm:$0xff]
        %v2319 = vld [vmem:[%s2310 + $0x40] sm:$0xff]
        %v2320 = vld [vmem:[%s2310 + $0x48] sm:$0x7]
        %vm2323 = vcmask 1046528
        %v2324 = vrot.slane %v2298, 1
        %v2325 = vrot.slane %v2299, 1
        %v2326 = vsel %vm2323, %v2324, %v2325
        %vm2327 = vcmask 613376
        %v2328 = vsel %vm2327, %v2326, 0
        %v2330 = vsel %vm2327, %v2325, 0
        %vm2332 = vcmask 1042432
        %v2334 = vsel %vm2332, %v2320, 0
        %2336 = vmatprep.subr.mxu0 0.0
        %2337 = vmatpush1.msra.mxu0 0.0
        %2338 = vmatprep.subr.mxu0 0.0
        %2339 = vmatpush1.msra.mxu0 0.0
        %2340 = vmatprep.subr.mxu0 0.0
        %2341 = vmatpush1.msra.mxu0 0.0
        %2342 = vmatprep.subr.mxu0 0.0
        %2343 = vmatpush1.msra.mxu0 0.0
        %2344 = vmatprep.subr.mxu0 0.0
        %2345 = vmatpush1.msra.mxu0 0.0
        %2346 = vmatprep.subr.mxu0 0.0
        %2347 = vmatpush1.msra.mxu0 0.0
        %2348 = vmatprep.subr.mxu0 0.0
        %2349 = vmatpush1.msra.mxu0 %v2334
        %2350 = vmatprep.subr.mxu0 0.0
        %2351 = vmatpush1.msra.mxu0 %v2319
        %2352 = vmatprep.subr.mxu0 0.0
        %2353 = vmatpush1.msra.mxu0 %v2318
        %2354 = vmatprep.subr.mxu0 0.0
        %2355 = vmatpush1.msra.mxu0 %v2317
        %2356 = vmatprep.subr.mxu0 0.0
        %2357 = vmatpush1.msra.mxu0 %v2316
        %2358 = vmatprep.subr.mxu0 0.0
        %2359 = vmatpush1.msra.mxu0 %v2315
        %2360 = vmatprep.subr.mxu0 0.0
        %2361 = vmatpush1.msra.mxu0 %v2314
        %2362 = vmatprep.subr.mxu0 0.0
        %2363 = vmatpush1.msra.mxu0 %v2313
        %2364 = vmatprep.subr.mxu0 0.0
        %2365 = vmatpush1.msra.mxu0 %v2312
        %2366 = vmatprep.subr.mxu0 0.0
        %2367 = vmatpush1.msra.mxu0 %v2311
        %2368 = vmatprep.subr.mxu0 0.0
        %2369 = vmatpush2.msra.mxu0 0.0
        %2370 = vmatprep.subr.mxu0 0.0
        %2371 = vmatpush2.msra.mxu0 0.0
        %2372 = vmatprep.subr.mxu0 0.0
        %2373 = vmatpush2.msra.mxu0 0.0
        %2374 = vmatprep.subr.mxu0 0.0
        %2375 = vmatpush2.msra.mxu0 0.0
        %2376 = vmatprep.subr.mxu0 0.0
        %2377 = vmatpush2.msra.mxu0 0.0
        %2378 = vmatprep.subr.mxu0 0.0
        %2379 = vmatpush2.msra.mxu0 0.0
        %2380 = vmatprep.subr.mxu0 0.0
        %2381 = vmatpush2.msra.mxu0 0.0
        %2382 = vmatprep.subr.mxu0 0.0
        %2383 = vmatpush2.msra.mxu0 0.0
        %2384 = vmatprep.subr.mxu0 0.0
        %2385 = vmatpush2.msra.mxu0 0.0
        %2386 = vmatprep.subr.mxu0 0.0
        %2387 = vmatpush2.msra.mxu0 0.0
        %2388 = vmatprep.subr.mxu0 0.0
        %2389 = vmatpush2.msra.mxu0 0.0
        %2390 = vmatprep.subr.mxu0 0.0
        %2391 = vmatpush2.msra.mxu0 0.0
        %2392 = vmatprep.subr.mxu0 0.0
        %2393 = vmatpush2.msra.mxu0 0.0
        %2394 = vmatprep.subr.mxu0 0.0
        %2395 = vmatpush2.msra.mxu0 0.0
        %2396 = vmatprep.subr.mxu0 0.0
        %2397 = vmatpush2.msra.mxu0 0.0
        %2398 = vmatprep.subr.mxu0 0.0
        %2399 = vmatpush2.msra.mxu0 0.0
        %2400 = vmatprep.mubr.f32.mxu0 0.0
        %2401 = vmatmul.mubr.f32.gmra.mxu0 %v2328
        %v2402 = vpop.f32.mrf.mxu0
        %v2403 = vadd.f32 0.0, %v2402
        %v2404 = vpop.f32.mrf.mxu0
        %2405 = vmatprep.mubr.f32.mxu0 0.0
        %2406 = vmatmul.mubr.f32.gmra.mxu0 %v2330
        %v2407 = vpop.f32.mrf.mxu0
        %v2408 = vadd.f32 0.0, %v2407
        %v2409 = vpop.f32.mrf.mxu0
        %2410 = vdwg.mxu0
        %v2411 = vsel %vm2327, %v2298, 0
        %v2413 = vsel %vm2327, %v2299, 0
        %v2416 = vsel %vm2332, %v2309, 0
        %2418 = vmatprep.subr.mxu0 0.0
        %2419 = vmatpush1.msra.mxu0 0.0
        %2420 = vmatprep.subr.mxu0 0.0
        %2421 = vmatpush1.msra.mxu0 0.0
        %2422 = vmatprep.subr.mxu0 0.0
        %2423 = vmatpush1.msra.mxu0 0.0
        %2424 = vmatprep.subr.mxu0 0.0
        %2425 = vmatpush1.msra.mxu0 0.0
        %2426 = vmatprep.subr.mxu0 0.0
        %2427 = vmatpush1.msra.mxu0 0.0
        %2428 = vmatprep.subr.mxu0 0.0
        %2429 = vmatpush1.msra.mxu0 0.0
        %2430 = vmatprep.subr.mxu0 0.0
        %2431 = vmatpush1.msra.mxu0 %v2416
        %2432 = vmatprep.subr.mxu0 0.0
        %2433 = vmatpush1.msra.mxu0 %v2308
        %2434 = vmatprep.subr.mxu0 0.0
        %2435 = vmatpush1.msra.mxu0 %v2307
        %2436 = vmatprep.subr.mxu0 0.0
        %2437 = vmatpush1.msra.mxu0 %v2306
        %2438 = vmatprep.subr.mxu0 0.0
        %2439 = vmatpush1.msra.mxu0 %v2305
        %2440 = vmatprep.subr.mxu0 0.0
        %2441 = vmatpush1.msra.mxu0 %v2304
        %2442 = vmatprep.subr.mxu0 0.0
        %2443 = vmatpush1.msra.mxu0 %v2303
        %2444 = vmatprep.subr.mxu0 0.0
        %2445 = vmatpush1.msra.mxu0 %v2302
        %2446 = vmatprep.subr.mxu0 0.0
        %2447 = vmatpush1.msra.mxu0 %v2301
        %2448 = vmatprep.subr.mxu0 0.0
        %2449 = vmatpush1.msra.mxu0 %v2300
        %2450 = vmatprep.subr.mxu0 0.0
        %2451 = vmatpush2.msra.mxu0 0.0
        %2452 = vmatprep.subr.mxu0 0.0
        %2453 = vmatpush2.msra.mxu0 0.0
        %2454 = vmatprep.subr.mxu0 0.0
        %2455 = vmatpush2.msra.mxu0 0.0
        %2456 = vmatprep.subr.mxu0 0.0
        %2457 = vmatpush2.msra.mxu0 0.0
        %2458 = vmatprep.subr.mxu0 0.0
        %2459 = vmatpush2.msra.mxu0 0.0
        %2460 = vmatprep.subr.mxu0 0.0
        %2461 = vmatpush2.msra.mxu0 0.0
        %2462 = vmatprep.subr.mxu0 0.0
        %2463 = vmatpush2.msra.mxu0 0.0
        %2464 = vmatprep.subr.mxu0 0.0
        %2465 = vmatpush2.msra.mxu0 0.0
        %2466 = vmatprep.subr.mxu0 0.0
        %2467 = vmatpush2.msra.mxu0 0.0
        %2468 = vmatprep.subr.mxu0 0.0
        %2469 = vmatpush2.msra.mxu0 0.0
        %2470 = vmatprep.subr.mxu0 0.0
        %2471 = vmatpush2.msra.mxu0 0.0
        %2472 = vmatprep.subr.mxu0 0.0
        %2473 = vmatpush2.msra.mxu0 0.0
        %2474 = vmatprep.subr.mxu0 0.0
        %2475 = vmatpush2.msra.mxu0 0.0
        %2476 = vmatprep.subr.mxu0 0.0
        %2477 = vmatpush2.msra.mxu0 0.0
        %2478 = vmatprep.subr.mxu0 0.0
        %2479 = vmatpush2.msra.mxu0 0.0
        %2480 = vmatprep.subr.mxu0 0.0
        %2481 = vmatpush2.msra.mxu0 0.0
        %2482 = vmatprep.mubr.f32.mxu0 0.0
        %2483 = vmatmul.mubr.f32.gmra.mxu0 %v2411
        %v2484 = vpop.f32.mrf.mxu0
        %v2485 = vadd.f32 %v2403, %v2484
        %v2486 = vpop.f32.mrf.mxu0
        %2487 = vmatprep.mubr.f32.mxu0 0.0
        %2488 = vmatmul.mubr.f32.gmra.mxu0 %v2413
        %v2489 = vpop.f32.mrf.mxu0
        %v2490 = vadd.f32 %v2408, %v2489
        %v2491 = vpop.f32.mrf.mxu0
        %2492 = vdwg.mxu0
        %s2493 = scalar_lea.vmem %s3, 160
        %v2494 = vld [vmem:[%s2493] sm:$0xff]
        %v2495 = vld [vmem:[%s2493 + $0x8] sm:$0xff]
        %v2496 = vld [vmem:[%s2493 + $0x10] sm:$0xff]
        %v2497 = vld [vmem:[%s2493 + $0x18] sm:$0xff]
        %v2498 = vld [vmem:[%s2493 + $0x20] sm:$0xff]
        %v2499 = vld [vmem:[%s2493 + $0x28] sm:$0xff]
        %v2500 = vld [vmem:[%s2493 + $0x30] sm:$0xff]
        %v2501 = vld [vmem:[%s2493 + $0x38] sm:$0xff]
        %v2502 = vld [vmem:[%s2493 + $0x40] sm:$0xff]
        %v2503 = vld [vmem:[%s2493 + $0x48] sm:$0x7]
        %vm2504 = vcmask 1045504
        %v2505 = vrot.slane %v2298, 2
        %v2506 = vrot.slane %v2299, 2
        %v2507 = vsel %vm2504, %v2505, %v2506
        %v2508 = vsel %vm2327, %v2507, 0
        %v2510 = vsel %vm2327, %v2506, 0
        %v2513 = vsel %vm2332, %v2503, 0
        %2515 = vmatprep.subr.mxu0 0.0
        %2516 = vmatpush1.msra.mxu0 0.0
        %2517 = vmatprep.subr.mxu0 0.0
        %2518 = vmatpush1.msra.mxu0 0.0
        %2519 = vmatprep.subr.mxu0 0.0
        %2520 = vmatpush1.msra.mxu0 0.0
        %2521 = vmatprep.subr.mxu0 0.0
        %2522 = vmatpush1.msra.mxu0 0.0
        %2523 = vmatprep.subr.mxu0 0.0
        %2524 = vmatpush1.msra.mxu0 0.0
        %2525 = vmatprep.subr.mxu0 0.0
        %2526 = vmatpush1.msra.mxu0 0.0
        %2527 = vmatprep.subr.mxu0 0.0
        %2528 = vmatpush1.msra.mxu0 %v2513
        %2529 = vmatprep.subr.mxu0 0.0
        %2530 = vmatpush1.msra.mxu0 %v2502
        %2531 = vmatprep.subr.mxu0 0.0
        %2532 = vmatpush1.msra.mxu0 %v2501
        %2533 = vmatprep.subr.mxu0 0.0
        %2534 = vmatpush1.msra.mxu0 %v2500
        %2535 = vmatprep.subr.mxu0 0.0
        %2536 = vmatpush1.msra.mxu0 %v2499
        %2537 = vmatprep.subr.mxu0 0.0
        %2538 = vmatpush1.msra.mxu0 %v2498
        %2539 = vmatprep.subr.mxu0 0.0
        %2540 = vmatpush1.msra.mxu0 %v2497
        %2541 = vmatprep.subr.mxu0 0.0
        %2542 = vmatpush1.msra.mxu0 %v2496
        %2543 = vmatprep.subr.mxu0 0.0
        %2544 = vmatpush1.msra.mxu0 %v2495
        %2545 = vmatprep.subr.mxu0 0.0
        %2546 = vmatpush1.msra.mxu0 %v2494
        %2547 = vmatprep.subr.mxu0 0.0
        %2548 = vmatpush2.msra.mxu0 0.0
        %2549 = vmatprep.subr.mxu0 0.0
        %2550 = vmatpush2.msra.mxu0 0.0
        %2551 = vmatprep.subr.mxu0 0.0
        %2552 = vmatpush2.msra.mxu0 0.0
        %2553 = vmatprep.subr.mxu0 0.0
        %2554 = vmatpush2.msra.mxu0 0.0
        %2555 = vmatprep.subr.mxu0 0.0
        %2556 = vmatpush2.msra.mxu0 0.0
        %2557 = vmatprep.subr.mxu0 0.0
        %2558 = vmatpush2.msra.mxu0 0.0
        %2559 = vmatprep.subr.mxu0 0.0
        %2560 = vmatpush2.msra.mxu0 0.0
        %2561 = vmatprep.subr.mxu0 0.0
        %2562 = vmatpush2.msra.mxu0 0.0
        %2563 = vmatprep.subr.mxu0 0.0
        %2564 = vmatpush2.msra.mxu0 0.0
        %2565 = vmatprep.subr.mxu0 0.0
        %2566 = vmatpush2.msra.mxu0 0.0
        %2567 = vmatprep.subr.mxu0 0.0
        %2568 = vmatpush2.msra.mxu0 0.0
        %2569 = vmatprep.subr.mxu0 0.0
        %2570 = vmatpush2.msra.mxu0 0.0
        %2571 = vmatprep.subr.mxu0 0.0
        %2572 = vmatpush2.msra.mxu0 0.0
        %2573 = vmatprep.subr.mxu0 0.0
        %2574 = vmatpush2.msra.mxu0 0.0
        %2575 = vmatprep.subr.mxu0 0.0
        %2576 = vmatpush2.msra.mxu0 0.0
        %2577 = vmatprep.subr.mxu0 0.0
        %2578 = vmatpush2.msra.mxu0 0.0
        %2579 = vmatprep.mubr.f32.mxu0 0.0
        %2580 = vmatmul.mubr.f32.gmra.mxu0 %v2508
        %v2581 = vpop.f32.mrf.mxu0
        %v2582 = vadd.f32 0.0, %v2581
        %v2583 = vpop.f32.mrf.mxu0
        %2584 = vmatprep.mubr.f32.mxu0 0.0
        %2585 = vmatmul.mubr.f32.gmra.mxu0 %v2510
        %v2586 = vpop.f32.mrf.mxu0
        %v2587 = vadd.f32 0.0, %v2586
        %v2588 = vpop.f32.mrf.mxu0
        %2589 = vdwg.mxu0
        %v2590 = vadd.f32 %v2485, %v2582
        %v2591 = vadd.f32 %v2490, %v2587
        %s2592 = scalar_lea.vmem %s3, 240
        %v2593 = vld [vmem:[%s2592] sm:$0xff]
        %v2594 = vld [vmem:[%s2592 + $0x8] sm:$0xff]
        %v2595 = vld [vmem:[%s2592 + $0x10] sm:$0xff]
        %v2596 = vld [vmem:[%s2592 + $0x18] sm:$0xff]
        %v2597 = vld [vmem:[%s2592 + $0x20] sm:$0xff]
        %v2598 = vld [vmem:[%s2592 + $0x28] sm:$0xff]
        %v2599 = vld [vmem:[%s2592 + $0x30] sm:$0xff]
        %v2600 = vld [vmem:[%s2592 + $0x38] sm:$0xff]
        %v2601 = vld [vmem:[%s2592 + $0x40] sm:$0xff]
        %v2602 = vld [vmem:[%s2592 + $0x48] sm:$0x7]
        %s2603 = scalar_lea.vmem %s3, 320
        %v2604 = vld [vmem:[%s2603] sm:$0xff]
        %v2605 = vld [vmem:[%s2603 + $0x8] sm:$0xff]
        %v2606 = vld [vmem:[%s2603 + $0x10] sm:$0xff]
        %v2607 = vld [vmem:[%s2603 + $0x18] sm:$0xff]
        %v2608 = vld [vmem:[%s2603 + $0x20] sm:$0xff]
        %v2609 = vld [vmem:[%s2603 + $0x28] sm:$0xff]
        %v2610 = vld [vmem:[%s2603 + $0x30] sm:$0xff]
        %v2611 = vld [vmem:[%s2603 + $0x38] sm:$0xff]
        %v2612 = vld [vmem:[%s2603 + $0x40] sm:$0xff]
        %v2613 = vld [vmem:[%s2603 + $0x48] sm:$0x7]
        %v2615 = vsel %vm2332, %v2613, 0
        %2617 = vmatprep.subr.mxu0 0.0
        %2618 = vmatpush1.msra.mxu0 0.0
        %2619 = vmatprep.subr.mxu0 0.0
        %2620 = vmatpush1.msra.mxu0 0.0
        %2621 = vmatprep.subr.mxu0 0.0
        %2622 = vmatpush1.msra.mxu0 0.0
        %2623 = vmatprep.subr.mxu0 0.0
        %2624 = vmatpush1.msra.mxu0 0.0
        %2625 = vmatprep.subr.mxu0 0.0
        %2626 = vmatpush1.msra.mxu0 0.0
        %2627 = vmatprep.subr.mxu0 0.0
        %2628 = vmatpush1.msra.mxu0 0.0
        %2629 = vmatprep.subr.mxu0 0.0
        %2630 = vmatpush1.msra.mxu0 %v2615
        %2631 = vmatprep.subr.mxu0 0.0
        %2632 = vmatpush1.msra.mxu0 %v2612
        %2633 = vmatprep.subr.mxu0 0.0
        %2634 = vmatpush1.msra.mxu0 %v2611
        %2635 = vmatprep.subr.mxu0 0.0
        %2636 = vmatpush1.msra.mxu0 %v2610
        %2637 = vmatprep.subr.mxu0 0.0
        %2638 = vmatpush1.msra.mxu0 %v2609
        %2639 = vmatprep.subr.mxu0 0.0
        %2640 = vmatpush1.msra.mxu0 %v2608
        %2641 = vmatprep.subr.mxu0 0.0
        %2642 = vmatpush1.msra.mxu0 %v2607
        %2643 = vmatprep.subr.mxu0 0.0
        %2644 = vmatpush1.msra.mxu0 %v2606
        %2645 = vmatprep.subr.mxu0 0.0
        %2646 = vmatpush1.msra.mxu0 %v2605
        %2647 = vmatprep.subr.mxu0 0.0
        %2648 = vmatpush1.msra.mxu0 %v2604
        %2649 = vmatprep.subr.mxu0 0.0
        %2650 = vmatpush2.msra.mxu0 0.0
        %2651 = vmatprep.subr.mxu0 0.0
        %2652 = vmatpush2.msra.mxu0 0.0
        %2653 = vmatprep.subr.mxu0 0.0
        %2654 = vmatpush2.msra.mxu0 0.0
        %2655 = vmatprep.subr.mxu0 0.0
        %2656 = vmatpush2.msra.mxu0 0.0
        %2657 = vmatprep.subr.mxu0 0.0
        %2658 = vmatpush2.msra.mxu0 0.0
        %2659 = vmatprep.subr.mxu0 0.0
        %2660 = vmatpush2.msra.mxu0 0.0
        %2661 = vmatprep.subr.mxu0 0.0
        %2662 = vmatpush2.msra.mxu0 0.0
        %2663 = vmatprep.subr.mxu0 0.0
        %2664 = vmatpush2.msra.mxu0 0.0
        %2665 = vmatprep.subr.mxu0 0.0
        %2666 = vmatpush2.msra.mxu0 0.0
        %2667 = vmatprep.subr.mxu0 0.0
        %2668 = vmatpush2.msra.mxu0 0.0
        %2669 = vmatprep.subr.mxu0 0.0
        %2670 = vmatpush2.msra.mxu0 0.0
        %2671 = vmatprep.subr.mxu0 0.0
        %2672 = vmatpush2.msra.mxu0 0.0
        %2673 = vmatprep.subr.mxu0 0.0
        %2674 = vmatpush2.msra.mxu0 0.0
        %2675 = vmatprep.subr.mxu0 0.0
        %2676 = vmatpush2.msra.mxu0 0.0
        %2677 = vmatprep.subr.mxu0 0.0
        %2678 = vmatpush2.msra.mxu0 0.0
        %2679 = vmatprep.subr.mxu0 0.0
        %2680 = vmatpush2.msra.mxu0 0.0
        %2681 = vmatprep.mubr.f32.mxu0 0.0
        %2682 = vmatmul.mubr.f32.gmra.mxu0 %v2328
        %v2683 = vpop.f32.mrf.mxu0
        %v2684 = vadd.f32 0.0, %v2683
        %v2685 = vpop.f32.mrf.mxu0
        %2686 = vmatprep.mubr.f32.mxu0 0.0
        %2687 = vmatmul.mubr.f32.gmra.mxu0 %v2330
        %v2688 = vpop.f32.mrf.mxu0
        %v2689 = vadd.f32 0.0, %v2688
        %v2690 = vpop.f32.mrf.mxu0
        %2691 = vdwg.mxu0
        %v2693 = vsel %vm2332, %v2602, 0
        %2695 = vmatprep.subr.mxu0 0.0
        %2696 = vmatpush1.msra.mxu0 0.0
        %2697 = vmatprep.subr.mxu0 0.0
        %2698 = vmatpush1.msra.mxu0 0.0
        %2699 = vmatprep.subr.mxu0 0.0
        %2700 = vmatpush1.msra.mxu0 0.0
        %2701 = vmatprep.subr.mxu0 0.0
        %2702 = vmatpush1.msra.mxu0 0.0
        %2703 = vmatprep.subr.mxu0 0.0
        %2704 = vmatpush1.msra.mxu0 0.0
        %2705 = vmatprep.subr.mxu0 0.0
        %2706 = vmatpush1.msra.mxu0 0.0
        %2707 = vmatprep.subr.mxu0 0.0
        %2708 = vmatpush1.msra.mxu0 %v2693
        %2709 = vmatprep.subr.mxu0 0.0
        %2710 = vmatpush1.msra.mxu0 %v2601
        %2711 = vmatprep.subr.mxu0 0.0
        %2712 = vmatpush1.msra.mxu0 %v2600
        %2713 = vmatprep.subr.mxu0 0.0
        %2714 = vmatpush1.msra.mxu0 %v2599
        %2715 = vmatprep.subr.mxu0 0.0
        %2716 = vmatpush1.msra.mxu0 %v2598
        %2717 = vmatprep.subr.mxu0 0.0
        %2718 = vmatpush1.msra.mxu0 %v2597
        %2719 = vmatprep.subr.mxu0 0.0
        %2720 = vmatpush1.msra.mxu0 %v2596
        %2721 = vmatprep.subr.mxu0 0.0
        %2722 = vmatpush1.msra.mxu0 %v2595
        %2723 = vmatprep.subr.mxu0 0.0
        %2724 = vmatpush1.msra.mxu0 %v2594
        %2725 = vmatprep.subr.mxu0 0.0
        %2726 = vmatpush1.msra.mxu0 %v2593
        %2727 = vmatprep.subr.mxu0 0.0
        %2728 = vmatpush2.msra.mxu0 0.0
        %2729 = vmatprep.subr.mxu0 0.0
        %2730 = vmatpush2.msra.mxu0 0.0
        %2731 = vmatprep.subr.mxu0 0.0
        %2732 = vmatpush2.msra.mxu0 0.0
        %2733 = vmatprep.subr.mxu0 0.0
        %2734 = vmatpush2.msra.mxu0 0.0
        %2735 = vmatprep.subr.mxu0 0.0
        %2736 = vmatpush2.msra.mxu0 0.0
        %2737 = vmatprep.subr.mxu0 0.0
        %2738 = vmatpush2.msra.mxu0 0.0
        %2739 = vmatprep.subr.mxu0 0.0
        %2740 = vmatpush2.msra.mxu0 0.0
        %2741 = vmatprep.subr.mxu0 0.0
        %2742 = vmatpush2.msra.mxu0 0.0
        %2743 = vmatprep.subr.mxu0 0.0
        %2744 = vmatpush2.msra.mxu0 0.0
        %2745 = vmatprep.subr.mxu0 0.0
        %2746 = vmatpush2.msra.mxu0 0.0
        %2747 = vmatprep.subr.mxu0 0.0
        %2748 = vmatpush2.msra.mxu0 0.0
        %2749 = vmatprep.subr.mxu0 0.0
        %2750 = vmatpush2.msra.mxu0 0.0
        %2751 = vmatprep.subr.mxu0 0.0
        %2752 = vmatpush2.msra.mxu0 0.0
        %2753 = vmatprep.subr.mxu0 0.0
        %2754 = vmatpush2.msra.mxu0 0.0
        %2755 = vmatprep.subr.mxu0 0.0
        %2756 = vmatpush2.msra.mxu0 0.0
        %2757 = vmatprep.subr.mxu0 0.0
        %2758 = vmatpush2.msra.mxu0 0.0
        %2759 = vmatprep.mubr.f32.mxu0 0.0
        %2760 = vmatmul.mubr.f32.gmra.mxu0 %v2411
        %v2761 = vpop.f32.mrf.mxu0
        %v2762 = vadd.f32 %v2684, %v2761
        %v2763 = vpop.f32.mrf.mxu0
        %2764 = vmatprep.mubr.f32.mxu0 0.0
        %2765 = vmatmul.mubr.f32.gmra.mxu0 %v2413
        %v2766 = vpop.f32.mrf.mxu0
        %v2767 = vadd.f32 %v2689, %v2766
        %v2768 = vpop.f32.mrf.mxu0
        %2769 = vdwg.mxu0
        %s2770 = scalar_lea.vmem %s3, 400
        %v2771 = vld [vmem:[%s2770] sm:$0xff]
        %v2772 = vld [vmem:[%s2770 + $0x8] sm:$0xff]
        %v2773 = vld [vmem:[%s2770 + $0x10] sm:$0xff]
        %v2774 = vld [vmem:[%s2770 + $0x18] sm:$0xff]
        %v2775 = vld [vmem:[%s2770 + $0x20] sm:$0xff]
        %v2776 = vld [vmem:[%s2770 + $0x28] sm:$0xff]
        %v2777 = vld [vmem:[%s2770 + $0x30] sm:$0xff]
        %v2778 = vld [vmem:[%s2770 + $0x38] sm:$0xff]
        %v2779 = vld [vmem:[%s2770 + $0x40] sm:$0xff]
        %v2780 = vld [vmem:[%s2770 + $0x48] sm:$0x7]
        %v2782 = vsel %vm2332, %v2780, 0
        %2784 = vmatprep.subr.mxu0 0.0
        %2785 = vmatpush1.msra.mxu0 0.0
        %2786 = vmatprep.subr.mxu0 0.0
        %2787 = vmatpush1.msra.mxu0 0.0
        %2788 = vmatprep.subr.mxu0 0.0
        %2789 = vmatpush1.msra.mxu0 0.0
        %2790 = vmatprep.subr.mxu0 0.0
        %2791 = vmatpush1.msra.mxu0 0.0
        %2792 = vmatprep.subr.mxu0 0.0
        %2793 = vmatpush1.msra.mxu0 0.0
        %2794 = vmatprep.subr.mxu0 0.0
        %2795 = vmatpush1.msra.mxu0 0.0
        %2796 = vmatprep.subr.mxu0 0.0
        %2797 = vmatpush1.msra.mxu0 %v2782
        %2798 = vmatprep.subr.mxu0 0.0
        %2799 = vmatpush1.msra.mxu0 %v2779
        %2800 = vmatprep.subr.mxu0 0.0
        %2801 = vmatpush1.msra.mxu0 %v2778
        %2802 = vmatprep.subr.mxu0 0.0
        %2803 = vmatpush1.msra.mxu0 %v2777
        %2804 = vmatprep.subr.mxu0 0.0
        %2805 = vmatpush1.msra.mxu0 %v2776
        %2806 = vmatprep.subr.mxu0 0.0
        %2807 = vmatpush1.msra.mxu0 %v2775
        %2808 = vmatprep.subr.mxu0 0.0
        %2809 = vmatpush1.msra.mxu0 %v2774
        %2810 = vmatprep.subr.mxu0 0.0
        %2811 = vmatpush1.msra.mxu0 %v2773
        %2812 = vmatprep.subr.mxu0 0.0
        %2813 = vmatpush1.msra.mxu0 %v2772
        %2814 = vmatprep.subr.mxu0 0.0
        %2815 = vmatpush1.msra.mxu0 %v2771
        %2816 = vmatprep.subr.mxu0 0.0
        %2817 = vmatpush2.msra.mxu0 0.0
        %2818 = vmatprep.subr.mxu0 0.0
        %2819 = vmatpush2.msra.mxu0 0.0
        %2820 = vmatprep.subr.mxu0 0.0
        %2821 = vmatpush2.msra.mxu0 0.0
        %2822 = vmatprep.subr.mxu0 0.0
        %2823 = vmatpush2.msra.mxu0 0.0
        %2824 = vmatprep.subr.mxu0 0.0
        %2825 = vmatpush2.msra.mxu0 0.0
        %2826 = vmatprep.subr.mxu0 0.0
        %2827 = vmatpush2.msra.mxu0 0.0
        %2828 = vmatprep.subr.mxu0 0.0
        %2829 = vmatpush2.msra.mxu0 0.0
        %2830 = vmatprep.subr.mxu0 0.0
        %2831 = vmatpush2.msra.mxu0 0.0
        %2832 = vmatprep.subr.mxu0 0.0
        %2833 = vmatpush2.msra.mxu0 0.0
        %2834 = vmatprep.subr.mxu0 0.0
        %2835 = vmatpush2.msra.mxu0 0.0
        %2836 = vmatprep.subr.mxu0 0.0
        %2837 = vmatpush2.msra.mxu0 0.0
        %2838 = vmatprep.subr.mxu0 0.0
        %2839 = vmatpush2.msra.mxu0 0.0
        %2840 = vmatprep.subr.mxu0 0.0
        %2841 = vmatpush2.msra.mxu0 0.0
        %2842 = vmatprep.subr.mxu0 0.0
        %2843 = vmatpush2.msra.mxu0 0.0
        %2844 = vmatprep.subr.mxu0 0.0
        %2845 = vmatpush2.msra.mxu0 0.0
        %2846 = vmatprep.subr.mxu0 0.0
        %2847 = vmatpush2.msra.mxu0 0.0
        %2848 = vmatprep.mubr.f32.mxu0 0.0
        %2849 = vmatmul.mubr.f32.gmra.mxu0 %v2508
        %v2850 = vpop.f32.mrf.mxu0
        %v2851 = vadd.f32 0.0, %v2850
        %v2852 = vpop.f32.mrf.mxu0
        %2853 = vmatprep.mubr.f32.mxu0 0.0
        %2854 = vmatmul.mubr.f32.gmra.mxu0 %v2510
        %v2855 = vpop.f32.mrf.mxu0
        %v2856 = vadd.f32 0.0, %v2855
        %v2857 = vpop.f32.mrf.mxu0
        %2858 = vdwg.mxu0
        %v2859 = vadd.f32 %v2762, %v2851
        %v2860 = vadd.f32 %v2767, %v2856
        %v2861 = vmax.f32 %v2590, %v2859
        %v2862 = vmax.f32 %v2591, %v2860
        %v2863 = vld [vmem:[%s4] sm:$0x1]
        %v2865 = vlaneseq
        %v2866 = vshrl.u32 %v2865, 7
        %v2867 = vsub.s32 0, %v2866
        %v2868 = vrot.slane %v2863, %v2867
        %v2870 = vadd.f32 %v2861, %v2868
        %v2871 = vadd.f32 %v2862, %v2868
        %v2872 = vmax.f32 %v2870, 0.0
        %v2873 = vmax.f32 %v2871, 0.0
        %v2874 = vld [vmem:[%s6] sm:$0x1]
        %v2876 = vrot.slane %v2872, 1
        %v2878 = vmax.f32 %v2872, %v2876
        %v2879 = vld [vmem:[%s5] sm:$0xff]
        %v2880 = vld [vmem:[%s5 + $0x8] sm:$0xff]
        %v2881 = vld [vmem:[%s5 + $0x10] sm:$0xff]
        %v2882 = vld [vmem:[%s5 + $0x18] sm:$0xff]
        %v2883 = vld [vmem:[%s5 + $0x20] sm:$0xff]
        %v2884 = vld [vmem:[%s5 + $0x28] sm:$0xff]
        %vm2885 = vcmask 392192
        %v2887 = vsel %vm2885, %v2878, 0
        %2889 = vmatprep.subr.mxu0 0.0
        %2890 = vmatpush1.msra.mxu0 0.0
        %2891 = vmatprep.subr.mxu0 0.0
        %2892 = vmatpush1.msra.mxu0 0.0
        %2893 = vmatprep.subr.mxu0 0.0
        %2894 = vmatpush1.msra.mxu0 0.0
        %2895 = vmatprep.subr.mxu0 0.0
        %2896 = vmatpush1.msra.mxu0 0.0
        %2897 = vmatprep.subr.mxu0 0.0
        %2898 = vmatpush1.msra.mxu0 0.0
        %2899 = vmatprep.subr.mxu0 0.0
        %2900 = vmatpush1.msra.mxu0 0.0
        %2901 = vmatprep.subr.mxu0 0.0
        %2902 = vmatpush1.msra.mxu0 0.0
        %2903 = vmatprep.subr.mxu0 0.0
        %2904 = vmatpush1.msra.mxu0 0.0
        %2905 = vmatprep.subr.mxu0 0.0
        %2906 = vmatpush1.msra.mxu0 0.0
        %2907 = vmatprep.subr.mxu0 0.0
        %2908 = vmatpush1.msra.mxu0 0.0
        %2909 = vmatprep.subr.mxu0 0.0
        %2910 = vmatpush1.msra.mxu0 %v2884
        %2911 = vmatprep.subr.mxu0 0.0
        %2912 = vmatpush1.msra.mxu0 %v2883
        %2913 = vmatprep.subr.mxu0 0.0
        %2914 = vmatpush1.msra.mxu0 %v2882
        %2915 = vmatprep.subr.mxu0 0.0
        %2916 = vmatpush1.msra.mxu0 %v2881
        %2917 = vmatprep.subr.mxu0 0.0
        %2918 = vmatpush1.msra.mxu0 %v2880
        %2919 = vmatprep.subr.mxu0 0.0
        %2920 = vmatpush1.msra.mxu0 %v2879
        %2921 = vmatprep.subr.mxu0 0.0
        %2922 = vmatpush2.msra.mxu0 0.0
        %2923 = vmatprep.subr.mxu0 0.0
        %2924 = vmatpush2.msra.mxu0 0.0
        %2925 = vmatprep.subr.mxu0 0.0
        %2926 = vmatpush2.msra.mxu0 0.0
        %2927 = vmatprep.subr.mxu0 0.0
        %2928 = vmatpush2.msra.mxu0 0.0
        %2929 = vmatprep.subr.mxu0 0.0
        %2930 = vmatpush2.msra.mxu0 0.0
        %2931 = vmatprep.subr.mxu0 0.0
        %2932 = vmatpush2.msra.mxu0 0.0
        %2933 = vmatprep.subr.mxu0 0.0
        %2934 = vmatpush2.msra.mxu0 0.0
        %2935 = vmatprep.subr.mxu0 0.0
        %2936 = vmatpush2.msra.mxu0 0.0
        %2937 = vmatprep.subr.mxu0 0.0
        %2938 = vmatpush2.msra.mxu0 0.0
        %2939 = vmatprep.subr.mxu0 0.0
        %2940 = vmatpush2.msra.mxu0 0.0
        %2941 = vmatprep.subr.mxu0 0.0
        %2942 = vmatpush2.msra.mxu0 0.0
        %2943 = vmatprep.subr.mxu0 0.0
        %2944 = vmatpush2.msra.mxu0 0.0
        %2945 = vmatprep.subr.mxu0 0.0
        %2946 = vmatpush2.msra.mxu0 0.0
        %2947 = vmatprep.subr.mxu0 0.0
        %2948 = vmatpush2.msra.mxu0 0.0
        %2949 = vmatprep.subr.mxu0 0.0
        %2950 = vmatpush2.msra.mxu0 0.0
        %2951 = vmatprep.subr.mxu0 0.0
        %2952 = vmatpush2.msra.mxu0 0.0
        %2953 = vmatprep.mubr.f32.mxu0 0.0
        %2954 = vmatmul.mubr.f32.gmra.mxu0 %v2887
        %v2955 = vpop.f32.mrf.mxu0
        %v2956 = vadd.f32 0.0, %v2955
        %v2957 = vpop.f32.mrf.mxu0
        %2958 = vdwg.mxu0
        %v2959 = vadd.f32 %v2874, %v2956
        %s2960 = scalar_lea.vmem %s5, 48
        %v2961 = vld [vmem:[%s2960] sm:$0xff]
        %v2962 = vld [vmem:[%s2960 + $0x8] sm:$0xff]
        %v2963 = vld [vmem:[%s2960 + $0x10] sm:$0xff]
        %v2964 = vld [vmem:[%s2960 + $0x18] sm:$0xff]
        %v2965 = vld [vmem:[%s2960 + $0x20] sm:$0xff]
        %v2966 = vld [vmem:[%s2960 + $0x28] sm:$0xff]
        %v2967 = vrot.slane %v2878, 2
        %v2968 = vsel %vm2885, %v2967, 0
        %2970 = vmatprep.subr.mxu0 0.0
        %2971 = vmatpush1.msra.mxu0 0.0
        %2972 = vmatprep.subr.mxu0 0.0
        %2973 = vmatpush1.msra.mxu0 0.0
        %2974 = vmatprep.subr.mxu0 0.0
        %2975 = vmatpush1.msra.mxu0 0.0
        %2976 = vmatprep.subr.mxu0 0.0
        %2977 = vmatpush1.msra.mxu0 0.0
        %2978 = vmatprep.subr.mxu0 0.0
        %2979 = vmatpush1.msra.mxu0 0.0
        %2980 = vmatprep.subr.mxu0 0.0
        %2981 = vmatpush1.msra.mxu0 0.0
        %2982 = vmatprep.subr.mxu0 0.0
        %2983 = vmatpush1.msra.mxu0 0.0
        %2984 = vmatprep.subr.mxu0 0.0
        %2985 = vmatpush1.msra.mxu0 0.0
        %2986 = vmatprep.subr.mxu0 0.0
        %2987 = vmatpush1.msra.mxu0 0.0
        %2988 = vmatprep.subr.mxu0 0.0
        %2989 = vmatpush1.msra.mxu0 0.0
        %2990 = vmatprep.subr.mxu0 0.0
        %2991 = vmatpush1.msra.mxu0 %v2966
        %2992 = vmatprep.subr.mxu0 0.0
        %2993 = vmatpush1.msra.mxu0 %v2965
        %2994 = vmatprep.subr.mxu0 0.0
        %2995 = vmatpush1.msra.mxu0 %v2964
        %2996 = vmatprep.subr.mxu0 0.0
        %2997 = vmatpush1.msra.mxu0 %v2963
        %2998 = vmatprep.subr.mxu0 0.0
        %2999 = vmatpush1.msra.mxu0 %v2962
        %3000 = vmatprep.subr.mxu0 0.0
        %3001 = vmatpush1.msra.mxu0 %v2961
        %3002 = vmatprep.subr.mxu0 0.0
        %3003 = vmatpush2.msra.mxu0 0.0
        %3004 = vmatprep.subr.mxu0 0.0
        %3005 = vmatpush2.msra.mxu0 0.0
        %3006 = vmatprep.subr.mxu0 0.0
        %3007 = vmatpush2.msra.mxu0 0.0
        %3008 = vmatprep.subr.mxu0 0.0
        %3009 = vmatpush2.msra.mxu0 0.0
        %3010 = vmatprep.subr.mxu0 0.0
        %3011 = vmatpush2.msra.mxu0 0.0
        %3012 = vmatprep.subr.mxu0 0.0
        %3013 = vmatpush2.msra.mxu0 0.0
        %3014 = vmatprep.subr.mxu0 0.0
        %3015 = vmatpush2.msra.mxu0 0.0
        %3016 = vmatprep.subr.mxu0 0.0
        %3017 = vmatpush2.msra.mxu0 0.0
        %3018 = vmatprep.subr.mxu0 0.0
        %3019 = vmatpush2.msra.mxu0 0.0
        %3020 = vmatprep.subr.mxu0 0.0
        %3021 = vmatpush2.msra.mxu0 0.0
        %3022 = vmatprep.subr.mxu0 0.0
        %3023 = vmatpush2.msra.mxu0 0.0
        %3024 = vmatprep.subr.mxu0 0.0
        %3025 = vmatpush2.msra.mxu0 0.0
        %3026 = vmatprep.subr.mxu0 0.0
        %3027 = vmatpush2.msra.mxu0 0.0
        %3028 = vmatprep.subr.mxu0 0.0
        %3029 = vmatpush2.msra.mxu0 0.0
        %3030 = vmatprep.subr.mxu0 0.0
        %3031 = vmatpush2.msra.mxu0 0.0
        %3032 = vmatprep.subr.mxu0 0.0
        %3033 = vmatpush2.msra.mxu0 0.0
        %3034 = vmatprep.mubr.f32.mxu0 0.0
        %3035 = vmatmul.mubr.f32.gmra.mxu0 %v2968
        %v3036 = vpop.f32.mrf.mxu0
        %v3037 = vadd.f32 0.0, %v3036
        %v3038 = vpop.f32.mrf.mxu0
        %3039 = vdwg.mxu0
        %v3040 = vadd.f32 %v2959, %v3037
        %s3041 = scalar_lea.vmem %s5, 96
        %v3042 = vld [vmem:[%s3041] sm:$0xff]
        %v3043 = vld [vmem:[%s3041 + $0x8] sm:$0xff]
        %v3044 = vld [vmem:[%s3041 + $0x10] sm:$0xff]
        %v3045 = vld [vmem:[%s3041 + $0x18] sm:$0xff]
        %v3046 = vld [vmem:[%s3041 + $0x20] sm:$0xff]
        %v3047 = vld [vmem:[%s3041 + $0x28] sm:$0xff]
        %v3048 = vrot.slane %v2878, 4
        %v3049 = vsel %vm2885, %v3048, 0
        %3051 = vmatprep.subr.mxu0 0.0
        %3052 = vmatpush1.msra.mxu0 0.0
        %3053 = vmatprep.subr.mxu0 0.0
        %3054 = vmatpush1.msra.mxu0 0.0
        %3055 = vmatprep.subr.mxu0 0.0
        %3056 = vmatpush1.msra.mxu0 0.0
        %3057 = vmatprep.subr.mxu0 0.0
        %3058 = vmatpush1.msra.mxu0 0.0
        %3059 = vmatprep.subr.mxu0 0.0
        %3060 = vmatpush1.msra.mxu0 0.0
        %3061 = vmatprep.subr.mxu0 0.0
        %3062 = vmatpush1.msra.mxu0 0.0
        %3063 = vmatprep.subr.mxu0 0.0
        %3064 = vmatpush1.msra.mxu0 0.0
        %3065 = vmatprep.subr.mxu0 0.0
        %3066 = vmatpush1.msra.mxu0 0.0
        %3067 = vmatprep.subr.mxu0 0.0
        %3068 = vmatpush1.msra.mxu0 0.0
        %3069 = vmatprep.subr.mxu0 0.0
        %3070 = vmatpush1.msra.mxu0 0.0
        %3071 = vmatprep.subr.mxu0 0.0
        %3072 = vmatpush1.msra.mxu0 %v3047
        %3073 = vmatprep.subr.mxu0 0.0
        %3074 = vmatpush1.msra.mxu0 %v3046
        %3075 = vmatprep.subr.mxu0 0.0
        %3076 = vmatpush1.msra.mxu0 %v3045
        %3077 = vmatprep.subr.mxu0 0.0
        %3078 = vmatpush1.msra.mxu0 %v3044
        %3079 = vmatprep.subr.mxu0 0.0
        %3080 = vmatpush1.msra.mxu0 %v3043
        %3081 = vmatprep.subr.mxu0 0.0
        %3082 = vmatpush1.msra.mxu0 %v3042
        %3083 = vmatprep.subr.mxu0 0.0
        %3084 = vmatpush2.msra.mxu0 0.0
        %3085 = vmatprep.subr.mxu0 0.0
        %3086 = vmatpush2.msra.mxu0 0.0
        %3087 = vmatprep.subr.mxu0 0.0
        %3088 = vmatpush2.msra.mxu0 0.0
        %3089 = vmatprep.subr.mxu0 0.0
        %3090 = vmatpush2.msra.mxu0 0.0
        %3091 = vmatprep.subr.mxu0 0.0
        %3092 = vmatpush2.msra.mxu0 0.0
        %3093 = vmatprep.subr.mxu0 0.0
        %3094 = vmatpush2.msra.mxu0 0.0
        %3095 = vmatprep.subr.mxu0 0.0
        %3096 = vmatpush2.msra.mxu0 0.0
        %3097 = vmatprep.subr.mxu0 0.0
        %3098 = vmatpush2.msra.mxu0 0.0
        %3099 = vmatprep.subr.mxu0 0.0
        %3100 = vmatpush2.msra.mxu0 0.0
        %3101 = vmatprep.subr.mxu0 0.0
        %3102 = vmatpush2.msra.mxu0 0.0
        %3103 = vmatprep.subr.mxu0 0.0
        %3104 = vmatpush2.msra.mxu0 0.0
        %3105 = vmatprep.subr.mxu0 0.0
        %3106 = vmatpush2.msra.mxu0 0.0
        %3107 = vmatprep.subr.mxu0 0.0
        %3108 = vmatpush2.msra.mxu0 0.0
        %3109 = vmatprep.subr.mxu0 0.0
        %3110 = vmatpush2.msra.mxu0 0.0
        %3111 = vmatprep.subr.mxu0 0.0
        %3112 = vmatpush2.msra.mxu0 0.0
        %3113 = vmatprep.subr.mxu0 0.0
        %3114 = vmatpush2.msra.mxu0 0.0
        %3115 = vmatprep.mubr.f32.mxu0 0.0
        %3116 = vmatmul.mubr.f32.gmra.mxu0 %v3049
        %v3117 = vpop.f32.mrf.mxu0
        %v3118 = vadd.f32 0.0, %v3117
        %v3119 = vpop.f32.mrf.mxu0
        %3120 = vdwg.mxu0
        %v3121 = vadd.f32 %v3040, %v3118
        %s3122 = scalar_lea.vmem %s5, 144
        %v3123 = vld [vmem:[%s3122] sm:$0xff]
        %v3124 = vld [vmem:[%s3122 + $0x8] sm:$0xff]
        %v3125 = vld [vmem:[%s3122 + $0x10] sm:$0xff]
        %v3126 = vld [vmem:[%s3122 + $0x18] sm:$0xff]
        %v3127 = vld [vmem:[%s3122 + $0x20] sm:$0xff]
        %v3128 = vld [vmem:[%s3122 + $0x28] sm:$0xff]
        %v3129 = vrot.slane %v2878, 6
        %v3130 = vsel %vm2885, %v3129, 0
        %3132 = vmatprep.subr.mxu0 0.0
        %3133 = vmatpush1.msra.mxu0 0.0
        %3134 = vmatprep.subr.mxu0 0.0
        %3135 = vmatpush1.msra.mxu0 0.0
        %3136 = vmatprep.subr.mxu0 0.0
        %3137 = vmatpush1.msra.mxu0 0.0
        %3138 = vmatprep.subr.mxu0 0.0
        %3139 = vmatpush1.msra.mxu0 0.0
        %3140 = vmatprep.subr.mxu0 0.0
        %3141 = vmatpush1.msra.mxu0 0.0
        %3142 = vmatprep.subr.mxu0 0.0
        %3143 = vmatpush1.msra.mxu0 0.0
        %3144 = vmatprep.subr.mxu0 0.0
        %3145 = vmatpush1.msra.mxu0 0.0
        %3146 = vmatprep.subr.mxu0 0.0
        %3147 = vmatpush1.msra.mxu0 0.0
        %3148 = vmatprep.subr.mxu0 0.0
        %3149 = vmatpush1.msra.mxu0 0.0
        %3150 = vmatprep.subr.mxu0 0.0
        %3151 = vmatpush1.msra.mxu0 0.0
        %3152 = vmatprep.subr.mxu0 0.0
        %3153 = vmatpush1.msra.mxu0 %v3128
        %3154 = vmatprep.subr.mxu0 0.0
        %3155 = vmatpush1.msra.mxu0 %v3127
        %3156 = vmatprep.subr.mxu0 0.0
        %3157 = vmatpush1.msra.mxu0 %v3126
        %3158 = vmatprep.subr.mxu0 0.0
        %3159 = vmatpush1.msra.mxu0 %v3125
        %3160 = vmatprep.subr.mxu0 0.0
        %3161 = vmatpush1.msra.mxu0 %v3124
        %3162 = vmatprep.subr.mxu0 0.0
        %3163 = vmatpush1.msra.mxu0 %v3123
        %3164 = vmatprep.subr.mxu0 0.0
        %3165 = vmatpush2.msra.mxu0 0.0
        %3166 = vmatprep.subr.mxu0 0.0
        %3167 = vmatpush2.msra.mxu0 0.0
        %3168 = vmatprep.subr.mxu0 0.0
        %3169 = vmatpush2.msra.mxu0 0.0
        %3170 = vmatprep.subr.mxu0 0.0
        %3171 = vmatpush2.msra.mxu0 0.0
        %3172 = vmatprep.subr.mxu0 0.0
        %3173 = vmatpush2.msra.mxu0 0.0
        %3174 = vmatprep.subr.mxu0 0.0
        %3175 = vmatpush2.msra.mxu0 0.0
        %3176 = vmatprep.subr.mxu0 0.0
        %3177 = vmatpush2.msra.mxu0 0.0
        %3178 = vmatprep.subr.mxu0 0.0
        %3179 = vmatpush2.msra.mxu0 0.0
        %3180 = vmatprep.subr.mxu0 0.0
        %3181 = vmatpush2.msra.mxu0 0.0
        %3182 = vmatprep.subr.mxu0 0.0
        %3183 = vmatpush2.msra.mxu0 0.0
        %3184 = vmatprep.subr.mxu0 0.0
        %3185 = vmatpush2.msra.mxu0 0.0
        %3186 = vmatprep.subr.mxu0 0.0
        %3187 = vmatpush2.msra.mxu0 0.0
        %3188 = vmatprep.subr.mxu0 0.0
        %3189 = vmatpush2.msra.mxu0 0.0
        %3190 = vmatprep.subr.mxu0 0.0
        %3191 = vmatpush2.msra.mxu0 0.0
        %3192 = vmatprep.subr.mxu0 0.0
        %3193 = vmatpush2.msra.mxu0 0.0
        %3194 = vmatprep.subr.mxu0 0.0
        %3195 = vmatpush2.msra.mxu0 0.0
        %3196 = vmatprep.mubr.f32.mxu0 0.0
        %3197 = vmatmul.mubr.f32.gmra.mxu0 %v3130
        %v3198 = vpop.f32.mrf.mxu0
        %v3199 = vadd.f32 0.0, %v3198
        %v3200 = vpop.f32.mrf.mxu0
        %3201 = vdwg.mxu0
        %v3202 = vadd.f32 %v3121, %v3199
        %v3204 = vrot.slane %v2873, 1
        %v3206 = vmax.f32 %v2873, %v3204
        %s3207 = scalar_lea.vmem %s5, 192
        %v3208 = vld [vmem:[%s3207] sm:$0xff]
        %v3209 = vld [vmem:[%s3207 + $0x8] sm:$0xff]
        %v3210 = vld [vmem:[%s3207 + $0x10] sm:$0xff]
        %v3211 = vld [vmem:[%s3207 + $0x18] sm:$0xff]
        %v3212 = vld [vmem:[%s3207 + $0x20] sm:$0xff]
        %v3213 = vld [vmem:[%s3207 + $0x28] sm:$0xff]
        %v3215 = vsel %vm2885, %v3206, 0
        %3217 = vmatprep.subr.mxu0 0.0
        %3218 = vmatpush1.msra.mxu0 0.0
        %3219 = vmatprep.subr.mxu0 0.0
        %3220 = vmatpush1.msra.mxu0 0.0
        %3221 = vmatprep.subr.mxu0 0.0
        %3222 = vmatpush1.msra.mxu0 0.0
        %3223 = vmatprep.subr.mxu0 0.0
        %3224 = vmatpush1.msra.mxu0 0.0
        %3225 = vmatprep.subr.mxu0 0.0
        %3226 = vmatpush1.msra.mxu0 0.0
        %3227 = vmatprep.subr.mxu0 0.0
        %3228 = vmatpush1.msra.mxu0 0.0
        %3229 = vmatprep.subr.mxu0 0.0
        %3230 = vmatpush1.msra.mxu0 0.0
        %3231 = vmatprep.subr.mxu0 0.0
        %3232 = vmatpush1.msra.mxu0 0.0
        %3233 = vmatprep.subr.mxu0 0.0
        %3234 = vmatpush1.msra.mxu0 0.0
        %3235 = vmatprep.subr.mxu0 0.0
        %3236 = vmatpush1.msra.mxu0 0.0
        %3237 = vmatprep.subr.mxu0 0.0
        %3238 = vmatpush1.msra.mxu0 %v3213
        %3239 = vmatprep.subr.mxu0 0.0
        %3240 = vmatpush1.msra.mxu0 %v3212
        %3241 = vmatprep.subr.mxu0 0.0
        %3242 = vmatpush1.msra.mxu0 %v3211
        %3243 = vmatprep.subr.mxu0 0.0
        %3244 = vmatpush1.msra.mxu0 %v3210
        %3245 = vmatprep.subr.mxu0 0.0
        %3246 = vmatpush1.msra.mxu0 %v3209
        %3247 = vmatprep.subr.mxu0 0.0
        %3248 = vmatpush1.msra.mxu0 %v3208
        %3249 = vmatprep.subr.mxu0 0.0
        %3250 = vmatpush2.msra.mxu0 0.0
        %3251 = vmatprep.subr.mxu0 0.0
        %3252 = vmatpush2.msra.mxu0 0.0
        %3253 = vmatprep.subr.mxu0 0.0
        %3254 = vmatpush2.msra.mxu0 0.0
        %3255 = vmatprep.subr.mxu0 0.0
        %3256 = vmatpush2.msra.mxu0 0.0
        %3257 = vmatprep.subr.mxu0 0.0
        %3258 = vmatpush2.msra.mxu0 0.0
        %3259 = vmatprep.subr.mxu0 0.0
        %3260 = vmatpush2.msra.mxu0 0.0
        %3261 = vmatprep.subr.mxu0 0.0
        %3262 = vmatpush2.msra.mxu0 0.0
        %3263 = vmatprep.subr.mxu0 0.0
        %3264 = vmatpush2.msra.mxu0 0.0
        %3265 = vmatprep.subr.mxu0 0.0
        %3266 = vmatpush2.msra.mxu0 0.0
        %3267 = vmatprep.subr.mxu0 0.0
        %3268 = vmatpush2.msra.mxu0 0.0
        %3269 = vmatprep.subr.mxu0 0.0
        %3270 = vmatpush2.msra.mxu0 0.0
        %3271 = vmatprep.subr.mxu0 0.0
        %3272 = vmatpush2.msra.mxu0 0.0
        %3273 = vmatprep.subr.mxu0 0.0
        %3274 = vmatpush2.msra.mxu0 0.0
        %3275 = vmatprep.subr.mxu0 0.0
        %3276 = vmatpush2.msra.mxu0 0.0
        %3277 = vmatprep.subr.mxu0 0.0
        %3278 = vmatpush2.msra.mxu0 0.0
        %3279 = vmatprep.subr.mxu0 0.0
        %3280 = vmatpush2.msra.mxu0 0.0
        %3281 = vmatprep.mubr.f32.mxu0 0.0
        %3282 = vmatmul.mubr.f32.gmra.mxu0 %v3215
        %v3283 = vpop.f32.mrf.mxu0
        %v3284 = vadd.f32 0.0, %v3283
        %v3285 = vpop.f32.mrf.mxu0
        %3286 = vdwg.mxu0
        %v3287 = vadd.f32 %v3202, %v3284
        %s3288 = scalar_lea.vmem %s5, 240
        %v3289 = vld [vmem:[%s3288] sm:$0xff]
        %v3290 = vld [vmem:[%s3288 + $0x8] sm:$0xff]
        %v3291 = vld [vmem:[%s3288 + $0x10] sm:$0xff]
        %v3292 = vld [vmem:[%s3288 + $0x18] sm:$0xff]
        %v3293 = vld [vmem:[%s3288 + $0x20] sm:$0xff]
        %v3294 = vld [vmem:[%s3288 + $0x28] sm:$0xff]
        %v3295 = vrot.slane %v3206, 2
        %v3296 = vsel %vm2885, %v3295, 0
        %3298 = vmatprep.subr.mxu0 0.0
        %3299 = vmatpush1.msra.mxu0 0.0
        %3300 = vmatprep.subr.mxu0 0.0
        %3301 = vmatpush1.msra.mxu0 0.0
        %3302 = vmatprep.subr.mxu0 0.0
        %3303 = vmatpush1.msra.mxu0 0.0
        %3304 = vmatprep.subr.mxu0 0.0
        %3305 = vmatpush1.msra.mxu0 0.0
        %3306 = vmatprep.subr.mxu0 0.0
        %3307 = vmatpush1.msra.mxu0 0.0
        %3308 = vmatprep.subr.mxu0 0.0
        %3309 = vmatpush1.msra.mxu0 0.0
        %3310 = vmatprep.subr.mxu0 0.0
        %3311 = vmatpush1.msra.mxu0 0.0
        %3312 = vmatprep.subr.mxu0 0.0
        %3313 = vmatpush1.msra.mxu0 0.0
        %3314 = vmatprep.subr.mxu0 0.0
        %3315 = vmatpush1.msra.mxu0 0.0
        %3316 = vmatprep.subr.mxu0 0.0
        %3317 = vmatpush1.msra.mxu0 0.0
        %3318 = vmatprep.subr.mxu0 0.0
        %3319 = vmatpush1.msra.mxu0 %v3294
        %3320 = vmatprep.subr.mxu0 0.0
        %3321 = vmatpush1.msra.mxu0 %v3293
        %3322 = vmatprep.subr.mxu0 0.0
        %3323 = vmatpush1.msra.mxu0 %v3292
        %3324 = vmatprep.subr.mxu0 0.0
        %3325 = vmatpush1.msra.mxu0 %v3291
        %3326 = vmatprep.subr.mxu0 0.0
        %3327 = vmatpush1.msra.mxu0 %v3290
        %3328 = vmatprep.subr.mxu0 0.0
        %3329 = vmatpush1.msra.mxu0 %v3289
        %3330 = vmatprep.subr.mxu0 0.0
        %3331 = vmatpush2.msra.mxu0 0.0
        %3332 = vmatprep.subr.mxu0 0.0
        %3333 = vmatpush2.msra.mxu0 0.0
        %3334 = vmatprep.subr.mxu0 0.0
        %3335 = vmatpush2.msra.mxu0 0.0
        %3336 = vmatprep.subr.mxu0 0.0
        %3337 = vmatpush2.msra.mxu0 0.0
        %3338 = vmatprep.subr.mxu0 0.0
        %3339 = vmatpush2.msra.mxu0 0.0
        %3340 = vmatprep.subr.mxu0 0.0
        %3341 = vmatpush2.msra.mxu0 0.0
        %3342 = vmatprep.subr.mxu0 0.0
        %3343 = vmatpush2.msra.mxu0 0.0
        %3344 = vmatprep.subr.mxu0 0.0
        %3345 = vmatpush2.msra.mxu0 0.0
        %3346 = vmatprep.subr.mxu0 0.0
        %3347 = vmatpush2.msra.mxu0 0.0
        %3348 = vmatprep.subr.mxu0 0.0
        %3349 = vmatpush2.msra.mxu0 0.0
        %3350 = vmatprep.subr.mxu0 0.0
        %3351 = vmatpush2.msra.mxu0 0.0
        %3352 = vmatprep.subr.mxu0 0.0
        %3353 = vmatpush2.msra.mxu0 0.0
        %3354 = vmatprep.subr.mxu0 0.0
        %3355 = vmatpush2.msra.mxu0 0.0
        %3356 = vmatprep.subr.mxu0 0.0
        %3357 = vmatpush2.msra.mxu0 0.0
        %3358 = vmatprep.subr.mxu0 0.0
        %3359 = vmatpush2.msra.mxu0 0.0
        %3360 = vmatprep.subr.mxu0 0.0
        %3361 = vmatpush2.msra.mxu0 0.0
        %3362 = vmatprep.mubr.f32.mxu0 0.0
        %3363 = vmatmul.mubr.f32.gmra.mxu0 %v3296
        %v3364 = vpop.f32.mrf.mxu0
        %v3365 = vadd.f32 0.0, %v3364
        %v3366 = vpop.f32.mrf.mxu0
        %3367 = vdwg.mxu0
        %v3368 = vadd.f32 %v3287, %v3365
        %vm3369 = vcmask 73728
        %3370 = vst.msk [vmem:[%s270] sm:$0x1] %vm3369, %v3368
        %s3371 = sand.u32 %s181, 1
        %s3372 = scalar_lea.sflag [#allocation3], %s3371
        %s3373 = sand.u32 %s181, 1
        %s3374 = scalar_lea.vmem [#allocation2], %s3373
        // Predicated region
        $region49: #{convnet_forward.1} parent=47 // pred_check
          %p3375 = pneg %p191
        $region50: #{convnet_forward.1} parent=47 // pred_check_branch
          %3377 = sbr.rel (%p3375) target = $region52
        $region51: #{convnet_forward.1} parent=47 // pred_region
          %s3379 = ssub.s32 16, 16
          %3380 = vsyncadd %s3372, %s3379
          %s3381 = smul.addr %s21, 16
          %s3382 = scalar_lea.hbm %s7, %s3381
          %s3384 = sshll.u32 %s3374, 4
          %s3385 = int_to_ptr.vmem [resolvable:$true] %s3384
          %3387 = dma.vmem_to_hbm [thread:$0]  %s3385, 16, %s3382, %s3372
        $region52: #{convnet_forward.1} parent=47 // pred_fallthru
          _
      $region48: #{convnet_forward.1} parent=5 // pred_fallthru
        _
      %p3388 = scmp.le.s32.totalorder 2, %s16
      // Predicated region
      $region53: #{convnet_forward.1} parent=5 // pred_check
        %p3389 = pneg %p3388
      $region54: #{convnet_forward.1} parent=5 // pred_check_branch
        %3391 = sbr.rel (%p3389) target = $region56
      $region55: #{convnet_forward.1} parent=5 // pred_region
        %s3392 = ssub.s32 %s16, 2
        // Predicated region
        $region57: #{convnet_forward.1} parent=55 // pred_check
          %p3393 = pneg %p197
        $region58: #{convnet_forward.1} parent=55 // pred_check_branch
          %3395 = sbr.rel (%p3393) target = $region60
        $region59: #{convnet_forward.1} parent=55 // pred_region
          %s3396 = sand.u32 %s182, 1
          %s3397 = scalar_lea.sflag [#allocation3], %s3396
          %s3398 = sand.u32 %s182, 1
          %s3399 = scalar_lea.vmem [#allocation2], %s3398
          %3400 = dma.done %s3397, 16
        $region60: #{convnet_forward.1} parent=55 // pred_fallthru
          _
      $region56: #{convnet_forward.1} parent=5 // pred_fallthru
        _
    $region6: #{convnet_forward.1} parent=1 // loop_footer
      %s20 = sadd.s32 1, %s16
    $region7: #{convnet_forward.1} parent=1 // loop_footer_branch
      %15 = sbr.rel target = $region3
    $region8: #{convnet_forward.1} parent=1 // loop_exit
      _
    %3401 = vsyncpa [#allocation3], 1
    %s3402 = scalar_lea.sflag [#allocation3], 1
    %3403 = vsyncpa %s3402, 1

</llo_original>
